<compile_context>
chip_gen: v7x
topology: tpu7x:2x2x1
jax: 0.10.0
libtpu: 0.0.40
codegen_flags: <defaults>
</compile_context>

<pallas_src>
import jax
import jax.numpy as jnp
from jax.experimental import pallas as pl
from jax.experimental.pallas import tpu as pltpu

NEG_INF = -1.0e30


def _round_up(x, m):
    return (x + m - 1) // m * m


def _pad_to(a, shape):
    pads = [(0, s - d) for d, s in zip(a.shape, shape)]
    return jnp.pad(a, pads)


def _full_spec(shape):
    nd = len(shape)
    return pl.BlockSpec(shape, lambda nd=nd: (0,) * nd)


# ----------------------------------------------------------------------------
# Fused kernel: GRU stack (PyTorch gate order r|z|n) + Linear + softmax.
#   r = sigmoid(W_ir x + b_ir + W_hr h + b_hr)
#   z = sigmoid(W_iz x + b_iz + W_hz h + b_hz)
#   n = tanh  (W_in x + b_in + r * (W_hn h + b_hn))
#   h = (1 - z) * n + z * h
# ----------------------------------------------------------------------------
def _make_fused_kernel(num_layers, T, Bp):
    def kernel(*refs):
        x_ref = refs[0]
        layer_refs = []
        idx = 1
        for _ in range(num_layers):
            layer_refs.append(tuple(refs[idx:idx + 4]))
            idx += 4
        fc_w_ref = refs[idx]
        fc_b_ref = refs[idx + 1]
        out_ref = refs[idx + 2]
        gi_r_ref, gi_z_ref, gi_n_ref, seq_ref, h_ref = refs[idx + 3:idx + 8]

        for layer, (w_ih_ref, w_hh_ref, b_gi_ref, b_hn_ref) in enumerate(layer_refs):
            last_layer = layer == num_layers - 1

            # ---- hoisted input projection: one big matmul per gate ----------
            if layer == 0:
                x_in = x_ref[...]                           # (T*Bp, Dp) bf16
            else:
                x_in = seq_ref[...].astype(jnp.bfloat16)    # (T*Bp, Hp)
            gi_r_ref[...] = jnp.dot(x_in, w_ih_ref[0],
                                    preferred_element_type=jnp.float32) + b_gi_ref[0]
            gi_z_ref[...] = jnp.dot(x_in, w_ih_ref[1],
                                    preferred_element_type=jnp.float32) + b_gi_ref[1]
            gi_n_ref[...] = jnp.dot(x_in, w_ih_ref[2],
                                    preferred_element_type=jnp.float32) + b_gi_ref[2]

            # Recurrent weights loaded once per layer (bf16).
            w_hr = w_hh_ref[0]
            w_hz = w_hh_ref[1]
            w_hn = w_hh_ref[2]
            b_hn = b_hn_ref[...]                             # (1, Hp) f32

            h_ref[...] = jnp.zeros_like(h_ref)               # h0 = 0 (PyTorch default)

            def step(t, carry, last_layer=last_layer,
                     w_hr=w_hr, w_hz=w_hz, w_hn=w_hn, b_hn=b_hn):
                row = pl.multiple_of(t * Bp, Bp)
                h_prev = h_ref[...]                          # (Bp, Hp) f32
                h_b = h_prev.astype(jnp.bfloat16)
                gh_r = jnp.dot(h_b, w_hr, preferred_element_type=jnp.float32)
                gh_z = jnp.dot(h_b, w_hz, preferred_element_type=jnp.float32)
                gh_n = jnp.dot(h_b, w_hn, preferred_element_type=jnp.float32) + b_hn
                r = jax.nn.sigmoid(gi_r_ref[pl.ds(row, Bp), :] + gh_r)
                z = jax.nn.sigmoid(gi_z_ref[pl.ds(row, Bp), :] + gh_z)
                n = jnp.tanh(gi_n_ref[pl.ds(row, Bp), :] + r * gh_n)
                h_new = (1.0 - z) * n + z * h_prev
                h_ref[...] = h_new
                if not last_layer:
                    # Next layer consumes the whole sequence; the final layer only
                    # needs h at t == T-1, which stays in h_ref (no HBM writeback).
                    seq_ref[pl.ds(row, Bp), :] = h_new
                return carry

            jax.lax.fori_loop(0, T, step, 0, unroll=True)

        # ---- FC + softmax on the last time step's hidden state --------------
        logits = jnp.dot(h_ref[...].astype(jnp.bfloat16), fc_w_ref[...],
                         preferred_element_type=jnp.float32) + fc_b_ref[...]
        m = jnp.max(logits, axis=-1, keepdims=True)
        e = jnp.exp(logits - m)
        denom = jnp.sum(e, axis=-1, keepdims=True)
        out_ref[...] = e * pl.reciprocal(denom)              # exact; EUP slot

    return kernel


# ----------------------------------------------------------------------------
# Wrapper: pads / re-lays-out PyTorch-format parameters and calls the kernel.
# ----------------------------------------------------------------------------
@jax.jit
def gru_net_forward(x_btd, params):
    """x_btd: (B, T, D) batch-first, like PyTorch. Returns (B, L) softmax probs."""
    B, T, D = x_btd.shape
    gru_layers = params["gru_layers"]
    num_layers = len(gru_layers)
    H = gru_layers[0]["w_hh"].shape[1]
    L = params["fc_w"].shape[0]

    Bp = _round_up(B, 8)
    Hp = _round_up(H, 128)
    Lp = _round_up(L, 128)
    Dp = _round_up(D, 128)

    # Input: time-major, padded, flattened to (T*Bp, Dp), bf16.
    x_tbd = jnp.transpose(x_btd, (1, 0, 2))
    x_p = jnp.zeros((T, Bp, Dp), jnp.float32).at[:, :B, :D].set(x_tbd)
    x_p = x_p.reshape(T * Bp, Dp).astype(jnp.bfloat16)

    flat_inputs = [x_p]
    in_specs = [_full_spec(x_p.shape)]

    # Per-layer weights: gate-major (3, Din, H), padded, bf16.
    for layer in gru_layers:
        w_ih, w_hh = layer["w_ih"], layer["w_hh"]   # (3H, Din), (3H, H)
        b_ih, b_hh = layer["b_ih"], layer["b_hh"]   # (3H,), (3H,)
        d_in = w_ih.shape[1]
        d_in_p = _round_up(d_in, 128)

        w_ih_g = jnp.transpose(w_ih.reshape(3, H, d_in), (0, 2, 1))   # (3, Din, H)
        w_hh_g = jnp.transpose(w_hh.reshape(3, H, H), (0, 2, 1))      # (3, H, H)
        b_ih_g = b_ih.reshape(3, H)
        b_hh_g = b_hh.reshape(3, H)
        # Pre-fold biases: r/z gates get b_ih + b_hh; n keeps b_in with the input
        # projection and b_hn with the recurrent projection.
        b_gi = b_ih_g.at[0:2].add(b_hh_g[0:2])

        w_ih_p = _pad_to(w_ih_g, (3, d_in_p, Hp)).astype(jnp.bfloat16)
        w_hh_p = _pad_to(w_hh_g, (3, Hp, Hp)).astype(jnp.bfloat16)
        b_gi_p = _pad_to(b_gi.reshape(3, 1, H), (3, 1, Hp)).astype(jnp.float32)
        b_hn_p = _pad_to(b_hh_g[2].reshape(1, H), (1, Hp)).astype(jnp.float32)

        flat_inputs += [w_ih_p, w_hh_p, b_gi_p, b_hn_p]
        in_specs += [_full_spec(w_ih_p.shape), _full_spec(w_hh_p.shape),
                     _full_spec(b_gi_p.shape), _full_spec(b_hn_p.shape)]

    # Classifier head; padded label lanes get -1e30 bias so softmax ignores them.
    fc_w_p = _pad_to(jnp.transpose(params["fc_w"]), (Hp, Lp)).astype(jnp.bfloat16)
    fc_b_p = jnp.full((1, Lp), NEG_INF, jnp.float32).at[0, :L].set(params["fc_b"])
    flat_inputs += [fc_w_p, fc_b_p]
    in_specs += [_full_spec(fc_w_p.shape), _full_spec(fc_b_p.shape)]

    out_p = pl.pallas_call(
        _make_fused_kernel(num_layers, T, Bp),
        out_shape=jax.ShapeDtypeStruct((Bp, Lp), jnp.float32),
        in_specs=in_specs,
        out_specs=_full_spec((Bp, Lp)),
        scratch_shapes=[
            pltpu.VMEM((T * Bp, Hp), jnp.float32),   # GI_r (hoisted input proj)
            pltpu.VMEM((T * Bp, Hp), jnp.float32),   # GI_z
            pltpu.VMEM((T * Bp, Hp), jnp.float32),   # GI_n
            pltpu.VMEM((T * Bp, Hp), jnp.float32),   # inter-layer sequence
            pltpu.VMEM((Bp, Hp), jnp.float32),       # hidden-state carry
        ],
    )(*flat_inputs)

    return out_p[:B, :L]


# ----------------------------------------------------------------------------
# Parameter init (PyTorch nn.GRU / nn.Linear layouts) and a pure-JAX reference.
# ----------------------------------------------------------------------------
def init_params(key, input_size, hidden_size, num_layers, num_labels):
    params = {"gru_layers": []}
    H = hidden_size
    scale = 1.0 / jnp.sqrt(H)
    for layer in range(num_layers):
        d_in = input_size if layer == 0 else H
        key, k1, k2, k3, k4 = jax.random.split(key, 5)
        params["gru_layers"].append({
            # PyTorch layout: (3H, Din) / (3H, H), gate order (r|z|n).
            "w_ih": jax.random.uniform(k1, (3 * H, d_in), jnp.float32, -scale, scale),
            "w_hh": jax.random.uniform(k2, (3 * H, H), jnp.float32, -scale, scale),
            "b_ih": jax.random.uniform(k3, (3 * H,), jnp.float32, -scale, scale),
            "b_hh": jax.random.uniform(k4, (3 * H,), jnp.float32, -scale, scale),
        })
    key, k5, k6 = jax.random.split(key, 3)
    params["fc_w"] = jax.random.uniform(k5, (num_labels, H), jnp.float32, -scale, scale)
    params["fc_b"] = jax.random.uniform(k6, (num_labels,), jnp.float32, -scale, scale)
    return params


def reference_forward(x_btd, params):
    """Pure-jnp f32 reference matching the PyTorch module."""
    B, T, _ = x_btd.shape
    seq = x_btd
    for layer in params["gru_layers"]:
        w_ih, w_hh = layer["w_ih"], layer["w_hh"]
        b_ih, b_hh = layer["b_ih"], layer["b_hh"]
        H = w_hh.shape[1]
        h = jnp.zeros((B, H), jnp.float32)
        hs = []
        for t in range(T):
            gi = seq[:, t] @ w_ih.T + b_ih
            gh = h @ w_hh.T + b_hh
            r = jax.nn.sigmoid(gi[:, :H] + gh[:, :H])
            z = jax.nn.sigmoid(gi[:, H:2 * H] + gh[:, H:2 * H])
            n = jnp.tanh(gi[:, 2 * H:] + r * gh[:, 2 * H:])
            h = (1.0 - z) * n + z * h
            hs.append(h)
        seq = jnp.stack(hs, axis=1)
    logits = seq[:, -1] @ params["fc_w"].T + params["fc_b"]
    return jax.nn.softmax(logits, axis=1)


if __name__ == "__main__":
    B, T = 2, 8                 # batch, n_frames
    input_size = 16
    hidden_size = 32
    num_layers = 2
    num_labels = 5

    key = jax.random.PRNGKey(0)
    key, kx = jax.random.split(key)
    x = jax.random.normal(kx, (B, T, input_size), jnp.float32)
    params = init_params(key, input_size, hidden_size, num_layers, num_labels)

    out = jax.block_until_ready(gru_net_forward(x, params))

    assert out.shape == (B, num_labels)
    # Softmax rows must sum to 1.
    assert bool(jnp.all(jnp.abs(jnp.sum(out, axis=1) - 1.0) < 1e-5))
    # Matches the f32 reference within bf16-weight tolerance.
    ref = reference_forward(x, params)
    assert bool(jnp.max(jnp.abs(out - ref)) < 5e-2)

    print("KERNEL_OK")
</pallas_src>

<mosaic_0001>
module attributes {stable_mosaic.version = 11 : i64} {
  func.func @kernel(%arg0: memref<64x128xbf16, #tpu.memory_space<vmem>>, %arg1: memref<3x128x128xbf16, #tpu.memory_space<vmem>>, %arg2: memref<3x128x128xbf16, #tpu.memory_space<vmem>>, %arg3: memref<3x1x128xf32, #tpu.memory_space<vmem>>, %arg4: memref<1x128xf32, #tpu.memory_space<vmem>>, %arg5: memref<3x128x128xbf16, #tpu.memory_space<vmem>>, %arg6: memref<3x128x128xbf16, #tpu.memory_space<vmem>>, %arg7: memref<3x1x128xf32, #tpu.memory_space<vmem>>, %arg8: memref<1x128xf32, #tpu.memory_space<vmem>>, %arg9: memref<128x128xbf16, #tpu.memory_space<vmem>>, %arg10: memref<1x128xf32, #tpu.memory_space<vmem>>, %arg11: memref<8x128xf32, #tpu.memory_space<vmem>>, %arg12: memref<64x128xf32, #tpu.memory_space<vmem>>, %arg13: memref<64x128xf32, #tpu.memory_space<vmem>>, %arg14: memref<64x128xf32, #tpu.memory_space<vmem>>, %arg15: memref<64x128xf32, #tpu.memory_space<vmem>>, %arg16: memref<8x128xf32, #tpu.memory_space<vmem>>) attributes {dimension_semantics = [], scalar_prefetch = 0 : i64, scratch_operands = 5 : i64, tpu.core_type = #tpu.core_type<tc>} {
    %c0 = arith.constant 0 : index
    %c0_0 = arith.constant 0 : index
    %0 = vector.load %arg0[%c0, %c0_0] : memref<64x128xbf16, #tpu.memory_space<vmem>>, vector<64x128xbf16>
    %c0_1 = arith.constant 0 : index
    %c0_2 = arith.constant 0 : index
    %c0_3 = arith.constant 0 : index
    %1 = vector.load %arg1[%c0_1, %c0_2, %c0_3] : memref<3x128x128xbf16, #tpu.memory_space<vmem>>, vector<1x128x128xbf16>
    %2 = vector.shape_cast %1 : vector<1x128x128xbf16> to vector<128x128xbf16>
    %cst = arith.constant dense<0.000000e+00> : vector<64x128xf32>
    %3 = tpu.matmul %0, %2, %cst {dimension_numbers = #tpu.dot_dimension_numbers<[1], [0], [0], [1], [0, 0, 1, 1], [], []>} : vector<64x128xbf16>, vector<128x128xbf16>, vector<64x128xf32> -> vector<64x128xf32>
    %c0_4 = arith.constant 0 : index
    %c0_5 = arith.constant 0 : index
    %c0_6 = arith.constant 0 : index
    %4 = vector.load %arg3[%c0_4, %c0_5, %c0_6] : memref<3x1x128xf32, #tpu.memory_space<vmem>>, vector<1x1x128xf32>
    %5 = vector.shape_cast %4 : vector<1x1x128xf32> to vector<1x128xf32>
    %6 = vector.broadcast %5 : vector<1x128xf32> to vector<64x128xf32>
    %7 = arith.addf %3, %6 : vector<64x128xf32>
    %c0_7 = arith.constant 0 : index
    %c0_8 = arith.constant 0 : index
    %8 = vector.load %arg12[%c0_7, %c0_8] : memref<64x128xf32, #tpu.memory_space<vmem>>, vector<64x128xf32>
    tpu.vector_store %arg12[%c0_7, %c0_8], %7 {strides = array<i32>} : memref<64x128xf32, #tpu.memory_space<vmem>>, vector<64x128xf32>,
    %c1 = arith.constant 1 : index
    %c0_9 = arith.constant 0 : index
    %c0_10 = arith.constant 0 : index
    %9 = vector.load %arg1[%c1, %c0_9, %c0_10] : memref<3x128x128xbf16, #tpu.memory_space<vmem>>, vector<1x128x128xbf16>
    %10 = vector.shape_cast %9 : vector<1x128x128xbf16> to vector<128x128xbf16>
    %cst_11 = arith.constant dense<0.000000e+00> : vector<64x128xf32>
    %11 = tpu.matmul %0, %10, %cst_11 {dimension_numbers = #tpu.dot_dimension_numbers<[1], [0], [0], [1], [0, 0, 1, 1], [], []>} : vector<64x128xbf16>, vector<128x128xbf16>, vector<64x128xf32> -> vector<64x128xf32>
    %c1_12 = arith.constant 1 : index
    %c0_13 = arith.constant 0 : index
    %c0_14 = arith.constant 0 : index
    %12 = vector.load %arg3[%c1_12, %c0_13, %c0_14] : memref<3x1x128xf32, #tpu.memory_space<vmem>>, vector<1x1x128xf32>
    %13 = vector.shape_cast %12 : vector<1x1x128xf32> to vector<1x128xf32>
    %14 = vector.broadcast %13 : vector<1x128xf32> to vector<64x128xf32>
    %15 = arith.addf %11, %14 : vector<64x128xf32>
    %c0_15 = arith.constant 0 : index
    %c0_16 = arith.constant 0 : index
    %16 = vector.load %arg13[%c0_15, %c0_16] : memref<64x128xf32, #tpu.memory_space<vmem>>, vector<64x128xf32>
    tpu.vector_store %arg13[%c0_15, %c0_16], %15 {strides = array<i32>} : memref<64x128xf32, #tpu.memory_space<vmem>>, vector<64x128xf32>,
    %c2 = arith.constant 2 : index
    %c0_17 = arith.constant 0 : index
    %c0_18 = arith.constant 0 : index
    %17 = vector.load %arg1[%c2, %c0_17, %c0_18] : memref<3x128x128xbf16, #tpu.memory_space<vmem>>, vector<1x128x128xbf16>
    %18 = vector.shape_cast %17 : vector<1x128x128xbf16> to vector<128x128xbf16>
    %cst_19 = arith.constant dense<0.000000e+00> : vector<64x128xf32>
    %19 = tpu.matmul %0, %18, %cst_19 {dimension_numbers = #tpu.dot_dimension_numbers<[1], [0], [0], [1], [0, 0, 1, 1], [], []>} : vector<64x128xbf16>, vector<128x128xbf16>, vector<64x128xf32> -> vector<64x128xf32>
    %c2_20 = arith.constant 2 : index
    %c0_21 = arith.constant 0 : index
    %c0_22 = arith.constant 0 : index
    %20 = vector.load %arg3[%c2_20, %c0_21, %c0_22] : memref<3x1x128xf32, #tpu.memory_space<vmem>>, vector<1x1x128xf32>
    %21 = vector.shape_cast %20 : vector<1x1x128xf32> to vector<1x128xf32>
    %22 = vector.broadcast %21 : vector<1x128xf32> to vector<64x128xf32>
    %23 = arith.addf %19, %22 : vector<64x128xf32>
    %c0_23 = arith.constant 0 : index
    %c0_24 = arith.constant 0 : index
    %24 = vector.load %arg14[%c0_23, %c0_24] : memref<64x128xf32, #tpu.memory_space<vmem>>, vector<64x128xf32>
    tpu.vector_store %arg14[%c0_23, %c0_24], %23 {strides = array<i32>} : memref<64x128xf32, #tpu.memory_space<vmem>>, vector<64x128xf32>,
    %c0_25 = arith.constant 0 : index
    %c0_26 = arith.constant 0 : index
    %c0_27 = arith.constant 0 : index
    %25 = vector.load %arg2[%c0_25, %c0_26, %c0_27] : memref<3x128x128xbf16, #tpu.memory_space<vmem>>, vector<1x128x128xbf16>
    %26 = vector.shape_cast %25 : vector<1x128x128xbf16> to vector<128x128xbf16>
    %c1_28 = arith.constant 1 : index
    %c0_29 = arith.constant 0 : index
    %c0_30 = arith.constant 0 : index
    %27 = vector.load %arg2[%c1_28, %c0_29, %c0_30] : memref<3x128x128xbf16, #tpu.memory_space<vmem>>, vector<1x128x128xbf16>
    %28 = vector.shape_cast %27 : vector<1x128x128xbf16> to vector<128x128xbf16>
    %c2_31 = arith.constant 2 : index
    %c0_32 = arith.constant 0 : index
    %c0_33 = arith.constant 0 : index
    %29 = vector.load %arg2[%c2_31, %c0_32, %c0_33] : memref<3x128x128xbf16, #tpu.memory_space<vmem>>, vector<1x128x128xbf16>
    %30 = vector.shape_cast %29 : vector<1x128x128xbf16> to vector<128x128xbf16>
    %c0_34 = arith.constant 0 : index
    %c0_35 = arith.constant 0 : index
    %31 = vector.load %arg4[%c0_34, %c0_35] : memref<1x128xf32, #tpu.memory_space<vmem>>, vector<1x128xf32>
    %cst_36 = arith.constant 0.000000e+00 : f32
    %32 = vector.broadcast %cst_36 : f32 to vector<8x128xf32>
    %c0_37 = arith.constant 0 : index
    %c0_38 = arith.constant 0 : index
    %33 = vector.load %arg16[%c0_37, %c0_38] : memref<8x128xf32, #tpu.memory_space<vmem>>, vector<8x128xf32>
    tpu.vector_store %arg16[%c0_37, %c0_38], %32 {strides = array<i32>} : memref<8x128xf32, #tpu.memory_space<vmem>>, vector<8x128xf32>,
    %c0_i32 = arith.constant 0 : i32
    %c8_i32 = arith.constant 8 : i32
    %34 = arith.muli %c0_i32, %c8_i32 : i32
    %35 = tpu.assume_multiple %34, 8 : i32
    %c0_39 = arith.constant 0 : index
    %c0_40 = arith.constant 0 : index
    %36 = vector.load %arg16[%c0_39, %c0_40] : memref<8x128xf32, #tpu.memory_space<vmem>>, vector<8x128xf32>
    %37 = arith.truncf %36 : vector<8x128xf32> to vector<8x128xbf16>
    %cst_41 = arith.constant dense<0.000000e+00> : vector<8x128xf32>
    %38 = tpu.matmul %37, %26, %cst_41 {dimension_numbers = #tpu.dot_dimension_numbers<[1], [0], [0], [1], [0, 0, 1, 1], [], []>} : vector<8x128xbf16>, vector<128x128xbf16>, vector<8x128xf32> -> vector<8x128xf32>
    %cst_42 = arith.constant dense<0.000000e+00> : vector<8x128xf32>
    %39 = tpu.matmul %37, %28, %cst_42 {dimension_numbers = #tpu.dot_dimension_numbers<[1], [0], [0], [1], [0, 0, 1, 1], [], []>} : vector<8x128xbf16>, vector<128x128xbf16>, vector<8x128xf32> -> vector<8x128xf32>
    %cst_43 = arith.constant dense<0.000000e+00> : vector<8x128xf32>
    %40 = tpu.matmul %37, %30, %cst_43 {dimension_numbers = #tpu.dot_dimension_numbers<[1], [0], [0], [1], [0, 0, 1, 1], [], []>} : vector<8x128xbf16>, vector<128x128xbf16>, vector<8x128xf32> -> vector<8x128xf32>
    %41 = vector.broadcast %31 : vector<1x128xf32> to vector<8x128xf32>
    %42 = arith.addf %40, %41 : vector<8x128xf32>
    %43 = arith.index_cast %35 : i32 to index
    %c0_44 = arith.constant 0 : index
    %44 = vector.load %arg12[%43, %c0_44] : memref<64x128xf32, #tpu.memory_space<vmem>>, vector<8x128xf32>
    %45 = arith.addf %44, %38 : vector<8x128xf32>
    %46 = arith.negf %45 : vector<8x128xf32>
    %47 = math.exp %46 : vector<8x128xf32>
    %cst_45 = arith.constant 1.000000e+00 : f32
    %48 = vector.broadcast %cst_45 : f32 to vector<8x128xf32>
    %49 = arith.addf %48, %47 : vector<8x128xf32>
    %50 = arith.divf %48, %49 : vector<8x128xf32>
    %51 = arith.index_cast %35 : i32 to index
    %c0_46 = arith.constant 0 : index
    %52 = vector.load %arg13[%51, %c0_46] : memref<64x128xf32, #tpu.memory_space<vmem>>, vector<8x128xf32>
    %53 = arith.addf %52, %39 : vector<8x128xf32>
    %54 = arith.negf %53 : vector<8x128xf32>
    %55 = math.exp %54 : vector<8x128xf32>
    %cst_47 = arith.constant 1.000000e+00 : f32
    %56 = vector.broadcast %cst_47 : f32 to vector<8x128xf32>
    %57 = arith.addf %56, %55 : vector<8x128xf32>
    %58 = arith.divf %56, %57 : vector<8x128xf32>
    %59 = arith.index_cast %35 : i32 to index
    %c0_48 = arith.constant 0 : index
    %60 = vector.load %arg14[%59, %c0_48] : memref<64x128xf32, #tpu.memory_space<vmem>>, vector<8x128xf32>
    %61 = arith.mulf %50, %42 : vector<8x128xf32>
    %62 = arith.addf %60, %61 : vector<8x128xf32>
    %63 = math.tanh %62 : vector<8x128xf32>
    %cst_49 = arith.constant 1.000000e+00 : f32
    %64 = vector.broadcast %cst_49 : f32 to vector<8x128xf32>
    %65 = arith.subf %64, %58 : vector<8x128xf32>
    %66 = arith.mulf %65, %63 : vector<8x128xf32>
    %67 = arith.mulf %58, %36 : vector<8x128xf32>
    %68 = arith.addf %66, %67 : vector<8x128xf32>
    %c0_50 = arith.constant 0 : index
    %c0_51 = arith.constant 0 : index
    %69 = vector.load %arg16[%c0_50, %c0_51] : memref<8x128xf32, #tpu.memory_space<vmem>>, vector<8x128xf32>
    tpu.vector_store %arg16[%c0_50, %c0_51], %68 {strides = array<i32>} : memref<8x128xf32, #tpu.memory_space<vmem>>, vector<8x128xf32>,
    %70 = arith.index_cast %35 : i32 to index
    %c0_52 = arith.constant 0 : index
    %71 = vector.load %arg15[%70, %c0_52] : memref<64x128xf32, #tpu.memory_space<vmem>>, vector<8x128xf32>
    tpu.vector_store %arg15[%70, %c0_52], %68 {strides = array<i32>} : memref<64x128xf32, #tpu.memory_space<vmem>>, vector<8x128xf32>,
    %c1_i32 = arith.constant 1 : i32
    %c8_i32_53 = arith.constant 8 : i32
    %72 = arith.muli %c1_i32, %c8_i32_53 : i32
    %73 = tpu.assume_multiple %72, 8 : i32
    %c0_54 = arith.constant 0 : index
    %c0_55 = arith.constant 0 : index
    %74 = vector.load %arg16[%c0_54, %c0_55] : memref<8x128xf32, #tpu.memory_space<vmem>>, vector<8x128xf32>
    %75 = arith.truncf %74 : vector<8x128xf32> to vector<8x128xbf16>
    %cst_56 = arith.constant dense<0.000000e+00> : vector<8x128xf32>
    %76 = tpu.matmul %75, %26, %cst_56 {dimension_numbers = #tpu.dot_dimension_numbers<[1], [0], [0], [1], [0, 0, 1, 1], [], []>} : vector<8x128xbf16>, vector<128x128xbf16>, vector<8x128xf32> -> vector<8x128xf32>
    %cst_57 = arith.constant dense<0.000000e+00> : vector<8x128xf32>
    %77 = tpu.matmul %75, %28, %cst_57 {dimension_numbers = #tpu.dot_dimension_numbers<[1], [0], [0], [1], [0, 0, 1, 1], [], []>} : vector<8x128xbf16>, vector<128x128xbf16>, vector<8x128xf32> -> vector<8x128xf32>
    %cst_58 = arith.constant dense<0.000000e+00> : vector<8x128xf32>
    %78 = tpu.matmul %75, %30, %cst_58 {dimension_numbers = #tpu.dot_dimension_numbers<[1], [0], [0], [1], [0, 0, 1, 1], [], []>} : vector<8x128xbf16>, vector<128x128xbf16>, vector<8x128xf32> -> vector<8x128xf32>
    %79 = vector.broadcast %31 : vector<1x128xf32> to vector<8x128xf32>
    %80 = arith.addf %78, %79 : vector<8x128xf32>
    %81 = arith.index_cast %73 : i32 to index
    %c0_59 = arith.constant 0 : index
    %82 = vector.load %arg12[%81, %c0_59] : memref<64x128xf32, #tpu.memory_space<vmem>>, vector<8x128xf32>
    %83 = arith.addf %82, %76 : vector<8x128xf32>
    %84 = arith.negf %83 : vector<8x128xf32>
    %85 = math.exp %84 : vector<8x128xf32>
    %cst_60 = arith.constant 1.000000e+00 : f32
    %86 = vector.broadcast %cst_60 : f32 to vector<8x128xf32>
    %87 = arith.addf %86, %85 : vector<8x128xf32>
    %88 = arith.divf %86, %87 : vector<8x128xf32>
    %89 = arith.index_cast %73 : i32 to index
    %c0_61 = arith.constant 0 : index
    %90 = vector.load %arg13[%89, %c0_61] : memref<64x128xf32, #tpu.memory_space<vmem>>, vector<8x128xf32>
    %91 = arith.addf %90, %77 : vector<8x128xf32>
    %92 = arith.negf %91 : vector<8x128xf32>
    %93 = math.exp %92 : vector<8x128xf32>
    %cst_62 = arith.constant 1.000000e+00 : f32
    %94 = vector.broadcast %cst_62 : f32 to vector<8x128xf32>
    %95 = arith.addf %94, %93 : vector<8x128xf32>
    %96 = arith.divf %94, %95 : vector<8x128xf32>
    %97 = arith.index_cast %73 : i32 to index
    %c0_63 = arith.constant 0 : index
    %98 = vector.load %arg14[%97, %c0_63] : memref<64x128xf32, #tpu.memory_space<vmem>>, vector<8x128xf32>
    %99 = arith.mulf %88, %80 : vector<8x128xf32>
    %100 = arith.addf %98, %99 : vector<8x128xf32>
    %101 = math.tanh %100 : vector<8x128xf32>
    %cst_64 = arith.constant 1.000000e+00 : f32
    %102 = vector.broadcast %cst_64 : f32 to vector<8x128xf32>
    %103 = arith.subf %102, %96 : vector<8x128xf32>
    %104 = arith.mulf %103, %101 : vector<8x128xf32>
    %105 = arith.mulf %96, %74 : vector<8x128xf32>
    %106 = arith.addf %104, %105 : vector<8x128xf32>
    %c0_65 = arith.constant 0 : index
    %c0_66 = arith.constant 0 : index
    %107 = vector.load %arg16[%c0_65, %c0_66] : memref<8x128xf32, #tpu.memory_space<vmem>>, vector<8x128xf32>
    tpu.vector_store %arg16[%c0_65, %c0_66], %106 {strides = array<i32>} : memref<8x128xf32, #tpu.memory_space<vmem>>, vector<8x128xf32>,
    %108 = arith.index_cast %73 : i32 to index
    %c0_67 = arith.constant 0 : index
    %109 = vector.load %arg15[%108, %c0_67] : memref<64x128xf32, #tpu.memory_space<vmem>>, vector<8x128xf32>
    tpu.vector_store %arg15[%108, %c0_67], %106 {strides = array<i32>} : memref<64x128xf32, #tpu.memory_space<vmem>>, vector<8x128xf32>,
    %c2_i32 = arith.constant 2 : i32
    %c8_i32_68 = arith.constant 8 : i32
    %110 = arith.muli %c2_i32, %c8_i32_68 : i32
    %111 = tpu.assume_multiple %110, 8 : i32
    %c0_69 = arith.constant 0 : index
    %c0_70 = arith.constant 0 : index
    %112 = vector.load %arg16[%c0_69, %c0_70] : memref<8x128xf32, #tpu.memory_space<vmem>>, vector<8x128xf32>
    %113 = arith.truncf %112 : vector<8x128xf32> to vector<8x128xbf16>
    %cst_71 = arith.constant dense<0.000000e+00> : vector<8x128xf32>
    %114 = tpu.matmul %113, %26, %cst_71 {dimension_numbers = #tpu.dot_dimension_numbers<[1], [0], [0], [1], [0, 0, 1, 1], [], []>} : vector<8x128xbf16>, vector<128x128xbf16>, vector<8x128xf32> -> vector<8x128xf32>
    %cst_72 = arith.constant dense<0.000000e+00> : vector<8x128xf32>
    %115 = tpu.matmul %113, %28, %cst_72 {dimension_numbers = #tpu.dot_dimension_numbers<[1], [0], [0], [1], [0, 0, 1, 1], [], []>} : vector<8x128xbf16>, vector<128x128xbf16>, vector<8x128xf32> -> vector<8x128xf32>
    %cst_73 = arith.constant dense<0.000000e+00> : vector<8x128xf32>
    %116 = tpu.matmul %113, %30, %cst_73 {dimension_numbers = #tpu.dot_dimension_numbers<[1], [0], [0], [1], [0, 0, 1, 1], [], []>} : vector<8x128xbf16>, vector<128x128xbf16>, vector<8x128xf32> -> vector<8x128xf32>
    %117 = vector.broadcast %31 : vector<1x128xf32> to vector<8x128xf32>
    %118 = arith.addf %116, %117 : vector<8x128xf32>
    %119 = arith.index_cast %111 : i32 to index
    %c0_74 = arith.constant 0 : index
    %120 = vector.load %arg12[%119, %c0_74] : memref<64x128xf32, #tpu.memory_space<vmem>>, vector<8x128xf32>
    %121 = arith.addf %120, %114 : vector<8x128xf32>
    %122 = arith.negf %121 : vector<8x128xf32>
    %123 = math.exp %122 : vector<8x128xf32>
    %cst_75 = arith.constant 1.000000e+00 : f32
    %124 = vector.broadcast %cst_75 : f32 to vector<8x128xf32>
    %125 = arith.addf %124, %123 : vector<8x128xf32>
    %126 = arith.divf %124, %125 : vector<8x128xf32>
    %127 = arith.index_cast %111 : i32 to index
    %c0_76 = arith.constant 0 : index
    %128 = vector.load %arg13[%127, %c0_76] : memref<64x128xf32, #tpu.memory_space<vmem>>, vector<8x128xf32>
    %129 = arith.addf %128, %115 : vector<8x128xf32>
    %130 = arith.negf %129 : vector<8x128xf32>
    %131 = math.exp %130 : vector<8x128xf32>
    %cst_77 = arith.constant 1.000000e+00 : f32
    %132 = vector.broadcast %cst_77 : f32 to vector<8x128xf32>
    %133 = arith.addf %132, %131 : vector<8x128xf32>
    %134 = arith.divf %132, %133 : vector<8x128xf32>
    %135 = arith.index_cast %111 : i32 to index
    %c0_78 = arith.constant 0 : index
    %136 = vector.load %arg14[%135, %c0_78] : memref<64x128xf32, #tpu.memory_space<vmem>>, vector<8x128xf32>
    %137 = arith.mulf %126, %118 : vector<8x128xf32>
    %138 = arith.addf %136, %137 : vector<8x128xf32>
    %139 = math.tanh %138 : vector<8x128xf32>
    %cst_79 = arith.constant 1.000000e+00 : f32
    %140 = vector.broadcast %cst_79 : f32 to vector<8x128xf32>
    %141 = arith.subf %140, %134 : vector<8x128xf32>
    %142 = arith.mulf %141, %139 : vector<8x128xf32>
    %143 = arith.mulf %134, %112 : vector<8x128xf32>
    %144 = arith.addf %142, %143 : vector<8x128xf32>
    %c0_80 = arith.constant 0 : index
    %c0_81 = arith.constant 0 : index
    %145 = vector.load %arg16[%c0_80, %c0_81] : memref<8x128xf32, #tpu.memory_space<vmem>>, vector<8x128xf32>
    tpu.vector_store %arg16[%c0_80, %c0_81], %144 {strides = array<i32>} : memref<8x128xf32, #tpu.memory_space<vmem>>, vector<8x128xf32>,
    %146 = arith.index_cast %111 : i32 to index
    %c0_82 = arith.constant 0 : index
    %147 = vector.load %arg15[%146, %c0_82] : memref<64x128xf32, #tpu.memory_space<vmem>>, vector<8x128xf32>
    tpu.vector_store %arg15[%146, %c0_82], %144 {strides = array<i32>} : memref<64x128xf32, #tpu.memory_space<vmem>>, vector<8x128xf32>,
    %c3_i32 = arith.constant 3 : i32
    %c8_i32_83 = arith.constant 8 : i32
    %148 = arith.muli %c3_i32, %c8_i32_83 : i32
    %149 = tpu.assume_multiple %148, 8 : i32
    %c0_84 = arith.constant 0 : index
    %c0_85 = arith.constant 0 : index
    %150 = vector.load %arg16[%c0_84, %c0_85] : memref<8x128xf32, #tpu.memory_space<vmem>>, vector<8x128xf32>
    %151 = arith.truncf %150 : vector<8x128xf32> to vector<8x128xbf16>
    %cst_86 = arith.constant dense<0.000000e+00> : vector<8x128xf32>
    %152 = tpu.matmul %151, %26, %cst_86 {dimension_numbers = #tpu.dot_dimension_numbers<[1], [0], [0], [1], [0, 0, 1, 1], [], []>} : vector<8x128xbf16>, vector<128x128xbf16>, vector<8x128xf32> -> vector<8x128xf32>
    %cst_87 = arith.constant dense<0.000000e+00> : vector<8x128xf32>
    %153 = tpu.matmul %151, %28, %cst_87 {dimension_numbers = #tpu.dot_dimension_numbers<[1], [0], [0], [1], [0, 0, 1, 1], [], []>} : vector<8x128xbf16>, vector<128x128xbf16>, vector<8x128xf32> -> vector<8x128xf32>
    %cst_88 = arith.constant dense<0.000000e+00> : vector<8x128xf32>
    %154 = tpu.matmul %151, %30, %cst_88 {dimension_numbers = #tpu.dot_dimension_numbers<[1], [0], [0], [1], [0, 0, 1, 1], [], []>} : vector<8x128xbf16>, vector<128x128xbf16>, vector<8x128xf32> -> vector<8x128xf32>
    %155 = vector.broadcast %31 : vector<1x128xf32> to vector<8x128xf32>
    %156 = arith.addf %154, %155 : vector<8x128xf32>
    %157 = arith.index_cast %149 : i32 to index
    %c0_89 = arith.constant 0 : index
    %158 = vector.load %arg12[%157, %c0_89] : memref<64x128xf32, #tpu.memory_space<vmem>>, vector<8x128xf32>
    %159 = arith.addf %158, %152 : vector<8x128xf32>
    %160 = arith.negf %159 : vector<8x128xf32>
    %161 = math.exp %160 : vector<8x128xf32>
    %cst_90 = arith.constant 1.000000e+00 : f32
    %162 = vector.broadcast %cst_90 : f32 to vector<8x128xf32>
    %163 = arith.addf %162, %161 : vector<8x128xf32>
    %164 = arith.divf %162, %163 : vector<8x128xf32>
    %165 = arith.index_cast %149 : i32 to index
    %c0_91 = arith.constant 0 : index
    %166 = vector.load %arg13[%165, %c0_91] : memref<64x128xf32, #tpu.memory_space<vmem>>, vector<8x128xf32>
    %167 = arith.addf %166, %153 : vector<8x128xf32>
    %168 = arith.negf %167 : vector<8x128xf32>
    %169 = math.exp %168 : vector<8x128xf32>
    %cst_92 = arith.constant 1.000000e+00 : f32
    %170 = vector.broadcast %cst_92 : f32 to vector<8x128xf32>
    %171 = arith.addf %170, %169 : vector<8x128xf32>
    %172 = arith.divf %170, %171 : vector<8x128xf32>
    %173 = arith.index_cast %149 : i32 to index
    %c0_93 = arith.constant 0 : index
    %174 = vector.load %arg14[%173, %c0_93] : memref<64x128xf32, #tpu.memory_space<vmem>>, vector<8x128xf32>
    %175 = arith.mulf %164, %156 : vector<8x128xf32>
    %176 = arith.addf %174, %175 : vector<8x128xf32>
    %177 = math.tanh %176 : vector<8x128xf32>
    %cst_94 = arith.constant 1.000000e+00 : f32
    %178 = vector.broadcast %cst_94 : f32 to vector<8x128xf32>
    %179 = arith.subf %178, %172 : vector<8x128xf32>
    %180 = arith.mulf %179, %177 : vector<8x128xf32>
    %181 = arith.mulf %172, %150 : vector<8x128xf32>
    %182 = arith.addf %180, %181 : vector<8x128xf32>
    %c0_95 = arith.constant 0 : index
    %c0_96 = arith.constant 0 : index
    %183 = vector.load %arg16[%c0_95, %c0_96] : memref<8x128xf32, #tpu.memory_space<vmem>>, vector<8x128xf32>
    tpu.vector_store %arg16[%c0_95, %c0_96], %182 {strides = array<i32>} : memref<8x128xf32, #tpu.memory_space<vmem>>, vector<8x128xf32>,
    %184 = arith.index_cast %149 : i32 to index
    %c0_97 = arith.constant 0 : index
    %185 = vector.load %arg15[%184, %c0_97] : memref<64x128xf32, #tpu.memory_space<vmem>>, vector<8x128xf32>
    tpu.vector_store %arg15[%184, %c0_97], %182 {strides = array<i32>} : memref<64x128xf32, #tpu.memory_space<vmem>>, vector<8x128xf32>,
    %c4_i32 = arith.constant 4 : i32
    %c8_i32_98 = arith.constant 8 : i32
    %186 = arith.muli %c4_i32, %c8_i32_98 : i32
    %187 = tpu.assume_multiple %186, 8 : i32
    %c0_99 = arith.constant 0 : index
    %c0_100 = arith.constant 0 : index
    %188 = vector.load %arg16[%c0_99, %c0_100] : memref<8x128xf32, #tpu.memory_space<vmem>>, vector<8x128xf32>
    %189 = arith.truncf %188 : vector<8x128xf32> to vector<8x128xbf16>
    %cst_101 = arith.constant dense<0.000000e+00> : vector<8x128xf32>
    %190 = tpu.matmul %189, %26, %cst_101 {dimension_numbers = #tpu.dot_dimension_numbers<[1], [0], [0], [1], [0, 0, 1, 1], [], []>} : vector<8x128xbf16>, vector<128x128xbf16>, vector<8x128xf32> -> vector<8x128xf32>
    %cst_102 = arith.constant dense<0.000000e+00> : vector<8x128xf32>
    %191 = tpu.matmul %189, %28, %cst_102 {dimension_numbers = #tpu.dot_dimension_numbers<[1], [0], [0], [1], [0, 0, 1, 1], [], []>} : vector<8x128xbf16>, vector<128x128xbf16>, vector<8x128xf32> -> vector<8x128xf32>
    %cst_103 = arith.constant dense<0.000000e+00> : vector<8x128xf32>
    %192 = tpu.matmul %189, %30, %cst_103 {dimension_numbers = #tpu.dot_dimension_numbers<[1], [0], [0], [1], [0, 0, 1, 1], [], []>} : vector<8x128xbf16>, vector<128x128xbf16>, vector<8x128xf32> -> vector<8x128xf32>
    %193 = vector.broadcast %31 : vector<1x128xf32> to vector<8x128xf32>
    %194 = arith.addf %192, %193 : vector<8x128xf32>
    %195 = arith.index_cast %187 : i32 to index
    %c0_104 = arith.constant 0 : index
    %196 = vector.load %arg12[%195, %c0_104] : memref<64x128xf32, #tpu.memory_space<vmem>>, vector<8x128xf32>
    %197 = arith.addf %196, %190 : vector<8x128xf32>
    %198 = arith.negf %197 : vector<8x128xf32>
    %199 = math.exp %198 : vector<8x128xf32>
    %cst_105 = arith.constant 1.000000e+00 : f32
    %200 = vector.broadcast %cst_105 : f32 to vector<8x128xf32>
    %201 = arith.addf %200, %199 : vector<8x128xf32>
    %202 = arith.divf %200, %201 : vector<8x128xf32>
    %203 = arith.index_cast %187 : i32 to index
    %c0_106 = arith.constant 0 : index
    %204 = vector.load %arg13[%203, %c0_106] : memref<64x128xf32, #tpu.memory_space<vmem>>, vector<8x128xf32>
    %205 = arith.addf %204, %191 : vector<8x128xf32>
    %206 = arith.negf %205 : vector<8x128xf32>
    %207 = math.exp %206 : vector<8x128xf32>
    %cst_107 = arith.constant 1.000000e+00 : f32
    %208 = vector.broadcast %cst_107 : f32 to vector<8x128xf32>
    %209 = arith.addf %208, %207 : vector<8x128xf32>
    %210 = arith.divf %208, %209 : vector<8x128xf32>
    %211 = arith.index_cast %187 : i32 to index
    %c0_108 = arith.constant 0 : index
    %212 = vector.load %arg14[%211, %c0_108] : memref<64x128xf32, #tpu.memory_space<vmem>>, vector<8x128xf32>
    %213 = arith.mulf %202, %194 : vector<8x128xf32>
    %214 = arith.addf %212, %213 : vector<8x128xf32>
    %215 = math.tanh %214 : vector<8x128xf32>
    %cst_109 = arith.constant 1.000000e+00 : f32
    %216 = vector.broadcast %cst_109 : f32 to vector<8x128xf32>
    %217 = arith.subf %216, %210 : vector<8x128xf32>
    %218 = arith.mulf %217, %215 : vector<8x128xf32>
    %219 = arith.mulf %210, %188 : vector<8x128xf32>
    %220 = arith.addf %218, %219 : vector<8x128xf32>
    %c0_110 = arith.constant 0 : index
    %c0_111 = arith.constant 0 : index
    %221 = vector.load %arg16[%c0_110, %c0_111] : memref<8x128xf32, #tpu.memory_space<vmem>>, vector<8x128xf32>
    tpu.vector_store %arg16[%c0_110, %c0_111], %220 {strides = array<i32>} : memref<8x128xf32, #tpu.memory_space<vmem>>, vector<8x128xf32>,
    %222 = arith.index_cast %187 : i32 to index
    %c0_112 = arith.constant 0 : index
    %223 = vector.load %arg15[%222, %c0_112] : memref<64x128xf32, #tpu.memory_space<vmem>>, vector<8x128xf32>
    tpu.vector_store %arg15[%222, %c0_112], %220 {strides = array<i32>} : memref<64x128xf32, #tpu.memory_space<vmem>>, vector<8x128xf32>,
    %c5_i32 = arith.constant 5 : i32
    %c8_i32_113 = arith.constant 8 : i32
    %224 = arith.muli %c5_i32, %c8_i32_113 : i32
    %225 = tpu.assume_multiple %224, 8 : i32
    %c0_114 = arith.constant 0 : index
    %c0_115 = arith.constant 0 : index
    %226 = vector.load %arg16[%c0_114, %c0_115] : memref<8x128xf32, #tpu.memory_space<vmem>>, vector<8x128xf32>
    %227 = arith.truncf %226 : vector<8x128xf32> to vector<8x128xbf16>
    %cst_116 = arith.constant dense<0.000000e+00> : vector<8x128xf32>
    %228 = tpu.matmul %227, %26, %cst_116 {dimension_numbers = #tpu.dot_dimension_numbers<[1], [0], [0], [1], [0, 0, 1, 1], [], []>} : vector<8x128xbf16>, vector<128x128xbf16>, vector<8x128xf32> -> vector<8x128xf32>
    %cst_117 = arith.constant dense<0.000000e+00> : vector<8x128xf32>
    %229 = tpu.matmul %227, %28, %cst_117 {dimension_numbers = #tpu.dot_dimension_numbers<[1], [0], [0], [1], [0, 0, 1, 1], [], []>} : vector<8x128xbf16>, vector<128x128xbf16>, vector<8x128xf32> -> vector<8x128xf32>
    %cst_118 = arith.constant dense<0.000000e+00> : vector<8x128xf32>
    %230 = tpu.matmul %227, %30, %cst_118 {dimension_numbers = #tpu.dot_dimension_numbers<[1], [0], [0], [1], [0, 0, 1, 1], [], []>} : vector<8x128xbf16>, vector<128x128xbf16>, vector<8x128xf32> -> vector<8x128xf32>
    %231 = vector.broadcast %31 : vector<1x128xf32> to vector<8x128xf32>
    %232 = arith.addf %230, %231 : vector<8x128xf32>
    %233 = arith.index_cast %225 : i32 to index
    %c0_119 = arith.constant 0 : index
    %234 = vector.load %arg12[%233, %c0_119] : memref<64x128xf32, #tpu.memory_space<vmem>>, vector<8x128xf32>
    %235 = arith.addf %234, %228 : vector<8x128xf32>
    %236 = arith.negf %235 : vector<8x128xf32>
    %237 = math.exp %236 : vector<8x128xf32>
    %cst_120 = arith.constant 1.000000e+00 : f32
    %238 = vector.broadcast %cst_120 : f32 to vector<8x128xf32>
    %239 = arith.addf %238, %237 : vector<8x128xf32>
    %240 = arith.divf %238, %239 : vector<8x128xf32>
    %241 = arith.index_cast %225 : i32 to index
    %c0_121 = arith.constant 0 : index
    %242 = vector.load %arg13[%241, %c0_121] : memref<64x128xf32, #tpu.memory_space<vmem>>, vector<8x128xf32>
    %243 = arith.addf %242, %229 : vector<8x128xf32>
    %244 = arith.negf %243 : vector<8x128xf32>
    %245 = math.exp %244 : vector<8x128xf32>
    %cst_122 = arith.constant 1.000000e+00 : f32
    %246 = vector.broadcast %cst_122 : f32 to vector<8x128xf32>
    %247 = arith.addf %246, %245 : vector<8x128xf32>
    %248 = arith.divf %246, %247 : vector<8x128xf32>
    %249 = arith.index_cast %225 : i32 to index
    %c0_123 = arith.constant 0 : index
    %250 = vector.load %arg14[%249, %c0_123] : memref<64x128xf32, #tpu.memory_space<vmem>>, vector<8x128xf32>
    %251 = arith.mulf %240, %232 : vector<8x128xf32>
    %252 = arith.addf %250, %251 : vector<8x128xf32>
    %253 = math.tanh %252 : vector<8x128xf32>
    %cst_124 = arith.constant 1.000000e+00 : f32
    %254 = vector.broadcast %cst_124 : f32 to vector<8x128xf32>
    %255 = arith.subf %254, %248 : vector<8x128xf32>
    %256 = arith.mulf %255, %253 : vector<8x128xf32>
    %257 = arith.mulf %248, %226 : vector<8x128xf32>
    %258 = arith.addf %256, %257 : vector<8x128xf32>
    %c0_125 = arith.constant 0 : index
    %c0_126 = arith.constant 0 : index
    %259 = vector.load %arg16[%c0_125, %c0_126] : memref<8x128xf32, #tpu.memory_space<vmem>>, vector<8x128xf32>
    tpu.vector_store %arg16[%c0_125, %c0_126], %258 {strides = array<i32>} : memref<8x128xf32, #tpu.memory_space<vmem>>, vector<8x128xf32>,
    %260 = arith.index_cast %225 : i32 to index
    %c0_127 = arith.constant 0 : index
    %261 = vector.load %arg15[%260, %c0_127] : memref<64x128xf32, #tpu.memory_space<vmem>>, vector<8x128xf32>
    tpu.vector_store %arg15[%260, %c0_127], %258 {strides = array<i32>} : memref<64x128xf32, #tpu.memory_space<vmem>>, vector<8x128xf32>,
    %c6_i32 = arith.constant 6 : i32
    %c8_i32_128 = arith.constant 8 : i32
    %262 = arith.muli %c6_i32, %c8_i32_128 : i32
    %263 = tpu.assume_multiple %262, 8 : i32
    %c0_129 = arith.constant 0 : index
    %c0_130 = arith.constant 0 : index
    %264 = vector.load %arg16[%c0_129, %c0_130] : memref<8x128xf32, #tpu.memory_space<vmem>>, vector<8x128xf32>
    %265 = arith.truncf %264 : vector<8x128xf32> to vector<8x128xbf16>
    %cst_131 = arith.constant dense<0.000000e+00> : vector<8x128xf32>
    %266 = tpu.matmul %265, %26, %cst_131 {dimension_numbers = #tpu.dot_dimension_numbers<[1], [0], [0], [1], [0, 0, 1, 1], [], []>} : vector<8x128xbf16>, vector<128x128xbf16>, vector<8x128xf32> -> vector<8x128xf32>
    %cst_132 = arith.constant dense<0.000000e+00> : vector<8x128xf32>
    %267 = tpu.matmul %265, %28, %cst_132 {dimension_numbers = #tpu.dot_dimension_numbers<[1], [0], [0], [1], [0, 0, 1, 1], [], []>} : vector<8x128xbf16>, vector<128x128xbf16>, vector<8x128xf32> -> vector<8x128xf32>
    %cst_133 = arith.constant dense<0.000000e+00> : vector<8x128xf32>
    %268 = tpu.matmul %265, %30, %cst_133 {dimension_numbers = #tpu.dot_dimension_numbers<[1], [0], [0], [1], [0, 0, 1, 1], [], []>} : vector<8x128xbf16>, vector<128x128xbf16>, vector<8x128xf32> -> vector<8x128xf32>
    %269 = vector.broadcast %31 : vector<1x128xf32> to vector<8x128xf32>
    %270 = arith.addf %268, %269 : vector<8x128xf32>
    %271 = arith.index_cast %263 : i32 to index
    %c0_134 = arith.constant 0 : index
    %272 = vector.load %arg12[%271, %c0_134] : memref<64x128xf32, #tpu.memory_space<vmem>>, vector<8x128xf32>
    %273 = arith.addf %272, %266 : vector<8x128xf32>
    %274 = arith.negf %273 : vector<8x128xf32>
    %275 = math.exp %274 : vector<8x128xf32>
    %cst_135 = arith.constant 1.000000e+00 : f32
    %276 = vector.broadcast %cst_135 : f32 to vector<8x128xf32>
    %277 = arith.addf %276, %275 : vector<8x128xf32>
    %278 = arith.divf %276, %277 : vector<8x128xf32>
    %279 = arith.index_cast %263 : i32 to index
    %c0_136 = arith.constant 0 : index
    %280 = vector.load %arg13[%279, %c0_136] : memref<64x128xf32, #tpu.memory_space<vmem>>, vector<8x128xf32>
    %281 = arith.addf %280, %267 : vector<8x128xf32>
    %282 = arith.negf %281 : vector<8x128xf32>
    %283 = math.exp %282 : vector<8x128xf32>
    %cst_137 = arith.constant 1.000000e+00 : f32
    %284 = vector.broadcast %cst_137 : f32 to vector<8x128xf32>
    %285 = arith.addf %284, %283 : vector<8x128xf32>
    %286 = arith.divf %284, %285 : vector<8x128xf32>
    %287 = arith.index_cast %263 : i32 to index
    %c0_138 = arith.constant 0 : index
    %288 = vector.load %arg14[%287, %c0_138] : memref<64x128xf32, #tpu.memory_space<vmem>>, vector<8x128xf32>
    %289 = arith.mulf %278, %270 : vector<8x128xf32>
    %290 = arith.addf %288, %289 : vector<8x128xf32>
    %291 = math.tanh %290 : vector<8x128xf32>
    %cst_139 = arith.constant 1.000000e+00 : f32
    %292 = vector.broadcast %cst_139 : f32 to vector<8x128xf32>
    %293 = arith.subf %292, %286 : vector<8x128xf32>
    %294 = arith.mulf %293, %291 : vector<8x128xf32>
    %295 = arith.mulf %286, %264 : vector<8x128xf32>
    %296 = arith.addf %294, %295 : vector<8x128xf32>
    %c0_140 = arith.constant 0 : index
    %c0_141 = arith.constant 0 : index
    %297 = vector.load %arg16[%c0_140, %c0_141] : memref<8x128xf32, #tpu.memory_space<vmem>>, vector<8x128xf32>
    tpu.vector_store %arg16[%c0_140, %c0_141], %296 {strides = array<i32>} : memref<8x128xf32, #tpu.memory_space<vmem>>, vector<8x128xf32>,
    %298 = arith.index_cast %263 : i32 to index
    %c0_142 = arith.constant 0 : index
    %299 = vector.load %arg15[%298, %c0_142] : memref<64x128xf32, #tpu.memory_space<vmem>>, vector<8x128xf32>
    tpu.vector_store %arg15[%298, %c0_142], %296 {strides = array<i32>} : memref<64x128xf32, #tpu.memory_space<vmem>>, vector<8x128xf32>,
    %c7_i32 = arith.constant 7 : i32
    %c8_i32_143 = arith.constant 8 : i32
    %300 = arith.muli %c7_i32, %c8_i32_143 : i32
    %301 = tpu.assume_multiple %300, 8 : i32
    %c0_144 = arith.constant 0 : index
    %c0_145 = arith.constant 0 : index
    %302 = vector.load %arg16[%c0_144, %c0_145] : memref<8x128xf32, #tpu.memory_space<vmem>>, vector<8x128xf32>
    %303 = arith.truncf %302 : vector<8x128xf32> to vector<8x128xbf16>
    %cst_146 = arith.constant dense<0.000000e+00> : vector<8x128xf32>
    %304 = tpu.matmul %303, %26, %cst_146 {dimension_numbers = #tpu.dot_dimension_numbers<[1], [0], [0], [1], [0, 0, 1, 1], [], []>} : vector<8x128xbf16>, vector<128x128xbf16>, vector<8x128xf32> -> vector<8x128xf32>
    %cst_147 = arith.constant dense<0.000000e+00> : vector<8x128xf32>
    %305 = tpu.matmul %303, %28, %cst_147 {dimension_numbers = #tpu.dot_dimension_numbers<[1], [0], [0], [1], [0, 0, 1, 1], [], []>} : vector<8x128xbf16>, vector<128x128xbf16>, vector<8x128xf32> -> vector<8x128xf32>
    %cst_148 = arith.constant dense<0.000000e+00> : vector<8x128xf32>
    %306 = tpu.matmul %303, %30, %cst_148 {dimension_numbers = #tpu.dot_dimension_numbers<[1], [0], [0], [1], [0, 0, 1, 1], [], []>} : vector<8x128xbf16>, vector<128x128xbf16>, vector<8x128xf32> -> vector<8x128xf32>
    %307 = vector.broadcast %31 : vector<1x128xf32> to vector<8x128xf32>
    %308 = arith.addf %306, %307 : vector<8x128xf32>
    %309 = arith.index_cast %301 : i32 to index
    %c0_149 = arith.constant 0 : index
    %310 = vector.load %arg12[%309, %c0_149] : memref<64x128xf32, #tpu.memory_space<vmem>>, vector<8x128xf32>
    %311 = arith.addf %310, %304 : vector<8x128xf32>
    %312 = arith.negf %311 : vector<8x128xf32>
    %313 = math.exp %312 : vector<8x128xf32>
    %cst_150 = arith.constant 1.000000e+00 : f32
    %314 = vector.broadcast %cst_150 : f32 to vector<8x128xf32>
    %315 = arith.addf %314, %313 : vector<8x128xf32>
    %316 = arith.divf %314, %315 : vector<8x128xf32>
    %317 = arith.index_cast %301 : i32 to index
    %c0_151 = arith.constant 0 : index
    %318 = vector.load %arg13[%317, %c0_151] : memref<64x128xf32, #tpu.memory_space<vmem>>, vector<8x128xf32>
    %319 = arith.addf %318, %305 : vector<8x128xf32>
    %320 = arith.negf %319 : vector<8x128xf32>
    %321 = math.exp %320 : vector<8x128xf32>
    %cst_152 = arith.constant 1.000000e+00 : f32
    %322 = vector.broadcast %cst_152 : f32 to vector<8x128xf32>
    %323 = arith.addf %322, %321 : vector<8x128xf32>
    %324 = arith.divf %322, %323 : vector<8x128xf32>
    %325 = arith.index_cast %301 : i32 to index
    %c0_153 = arith.constant 0 : index
    %326 = vector.load %arg14[%325, %c0_153] : memref<64x128xf32, #tpu.memory_space<vmem>>, vector<8x128xf32>
    %327 = arith.mulf %316, %308 : vector<8x128xf32>
    %328 = arith.addf %326, %327 : vector<8x128xf32>
    %329 = math.tanh %328 : vector<8x128xf32>
    %cst_154 = arith.constant 1.000000e+00 : f32
    %330 = vector.broadcast %cst_154 : f32 to vector<8x128xf32>
    %331 = arith.subf %330, %324 : vector<8x128xf32>
    %332 = arith.mulf %331, %329 : vector<8x128xf32>
    %333 = arith.mulf %324, %302 : vector<8x128xf32>
    %334 = arith.addf %332, %333 : vector<8x128xf32>
    %c0_155 = arith.constant 0 : index
    %c0_156 = arith.constant 0 : index
    %335 = vector.load %arg16[%c0_155, %c0_156] : memref<8x128xf32, #tpu.memory_space<vmem>>, vector<8x128xf32>
    tpu.vector_store %arg16[%c0_155, %c0_156], %334 {strides = array<i32>} : memref<8x128xf32, #tpu.memory_space<vmem>>, vector<8x128xf32>,
    %336 = arith.index_cast %301 : i32 to index
    %c0_157 = arith.constant 0 : index
    %337 = vector.load %arg15[%336, %c0_157] : memref<64x128xf32, #tpu.memory_space<vmem>>, vector<8x128xf32>
    tpu.vector_store %arg15[%336, %c0_157], %334 {strides = array<i32>} : memref<64x128xf32, #tpu.memory_space<vmem>>, vector<8x128xf32>,
    %c8_i32_158 = arith.constant 8 : i32
    %c0_159 = arith.constant 0 : index
    %c0_160 = arith.constant 0 : index
    %338 = vector.load %arg15[%c0_159, %c0_160] : memref<64x128xf32, #tpu.memory_space<vmem>>, vector<64x128xf32>
    %339 = arith.truncf %338 : vector<64x128xf32> to vector<64x128xbf16>
    %c0_161 = arith.constant 0 : index
    %c0_162 = arith.constant 0 : index
    %c0_163 = arith.constant 0 : index
    %340 = vector.load %arg5[%c0_161, %c0_162, %c0_163] : memref<3x128x128xbf16, #tpu.memory_space<vmem>>, vector<1x128x128xbf16>
    %341 = vector.shape_cast %340 : vector<1x128x128xbf16> to vector<128x128xbf16>
    %cst_164 = arith.constant dense<0.000000e+00> : vector<64x128xf32>
    %342 = tpu.matmul %339, %341, %cst_164 {dimension_numbers = #tpu.dot_dimension_numbers<[1], [0], [0], [1], [0, 0, 1, 1], [], []>} : vector<64x128xbf16>, vector<128x128xbf16>, vector<64x128xf32> -> vector<64x128xf32>
    %c0_165 = arith.constant 0 : index
    %c0_166 = arith.constant 0 : index
    %c0_167 = arith.constant 0 : index
    %343 = vector.load %arg7[%c0_165, %c0_166, %c0_167] : memref<3x1x128xf32, #tpu.memory_space<vmem>>, vector<1x1x128xf32>
    %344 = vector.shape_cast %343 : vector<1x1x128xf32> to vector<1x128xf32>
    %345 = vector.broadcast %344 : vector<1x128xf32> to vector<64x128xf32>
    %346 = arith.addf %342, %345 : vector<64x128xf32>
    %c0_168 = arith.constant 0 : index
    %c0_169 = arith.constant 0 : index
    %347 = vector.load %arg12[%c0_168, %c0_169] : memref<64x128xf32, #tpu.memory_space<vmem>>, vector<64x128xf32>
    tpu.vector_store %arg12[%c0_168, %c0_169], %346 {strides = array<i32>} : memref<64x128xf32, #tpu.memory_space<vmem>>, vector<64x128xf32>,
    %c1_170 = arith.constant 1 : index
    %c0_171 = arith.constant 0 : index
    %c0_172 = arith.constant 0 : index
    %348 = vector.load %arg5[%c1_170, %c0_171, %c0_172] : memref<3x128x128xbf16, #tpu.memory_space<vmem>>, vector<1x128x128xbf16>
    %349 = vector.shape_cast %348 : vector<1x128x128xbf16> to vector<128x128xbf16>
    %cst_173 = arith.constant dense<0.000000e+00> : vector<64x128xf32>
    %350 = tpu.matmul %339, %349, %cst_173 {dimension_numbers = #tpu.dot_dimension_numbers<[1], [0], [0], [1], [0, 0, 1, 1], [], []>} : vector<64x128xbf16>, vector<128x128xbf16>, vector<64x128xf32> -> vector<64x128xf32>
    %c1_174 = arith.constant 1 : index
    %c0_175 = arith.constant 0 : index
    %c0_176 = arith.constant 0 : index
    %351 = vector.load %arg7[%c1_174, %c0_175, %c0_176] : memref<3x1x128xf32, #tpu.memory_space<vmem>>, vector<1x1x128xf32>
    %352 = vector.shape_cast %351 : vector<1x1x128xf32> to vector<1x128xf32>
    %353 = vector.broadcast %352 : vector<1x128xf32> to vector<64x128xf32>
    %354 = arith.addf %350, %353 : vector<64x128xf32>
    %c0_177 = arith.constant 0 : index
    %c0_178 = arith.constant 0 : index
    %355 = vector.load %arg13[%c0_177, %c0_178] : memref<64x128xf32, #tpu.memory_space<vmem>>, vector<64x128xf32>
    tpu.vector_store %arg13[%c0_177, %c0_178], %354 {strides = array<i32>} : memref<64x128xf32, #tpu.memory_space<vmem>>, vector<64x128xf32>,
    %c2_179 = arith.constant 2 : index
    %c0_180 = arith.constant 0 : index
    %c0_181 = arith.constant 0 : index
    %356 = vector.load %arg5[%c2_179, %c0_180, %c0_181] : memref<3x128x128xbf16, #tpu.memory_space<vmem>>, vector<1x128x128xbf16>
    %357 = vector.shape_cast %356 : vector<1x128x128xbf16> to vector<128x128xbf16>
    %cst_182 = arith.constant dense<0.000000e+00> : vector<64x128xf32>
    %358 = tpu.matmul %339, %357, %cst_182 {dimension_numbers = #tpu.dot_dimension_numbers<[1], [0], [0], [1], [0, 0, 1, 1], [], []>} : vector<64x128xbf16>, vector<128x128xbf16>, vector<64x128xf32> -> vector<64x128xf32>
    %c2_183 = arith.constant 2 : index
    %c0_184 = arith.constant 0 : index
    %c0_185 = arith.constant 0 : index
    %359 = vector.load %arg7[%c2_183, %c0_184, %c0_185] : memref<3x1x128xf32, #tpu.memory_space<vmem>>, vector<1x1x128xf32>
    %360 = vector.shape_cast %359 : vector<1x1x128xf32> to vector<1x128xf32>
    %361 = vector.broadcast %360 : vector<1x128xf32> to vector<64x128xf32>
    %362 = arith.addf %358, %361 : vector<64x128xf32>
    %c0_186 = arith.constant 0 : index
    %c0_187 = arith.constant 0 : index
    %363 = vector.load %arg14[%c0_186, %c0_187] : memref<64x128xf32, #tpu.memory_space<vmem>>, vector<64x128xf32>
    tpu.vector_store %arg14[%c0_186, %c0_187], %362 {strides = array<i32>} : memref<64x128xf32, #tpu.memory_space<vmem>>, vector<64x128xf32>,
    %c0_188 = arith.constant 0 : index
    %c0_189 = arith.constant 0 : index
    %c0_190 = arith.constant 0 : index
    %364 = vector.load %arg6[%c0_188, %c0_189, %c0_190] : memref<3x128x128xbf16, #tpu.memory_space<vmem>>, vector<1x128x128xbf16>
    %365 = vector.shape_cast %364 : vector<1x128x128xbf16> to vector<128x128xbf16>
    %c1_191 = arith.constant 1 : index
    %c0_192 = arith.constant 0 : index
    %c0_193 = arith.constant 0 : index
    %366 = vector.load %arg6[%c1_191, %c0_192, %c0_193] : memref<3x128x128xbf16, #tpu.memory_space<vmem>>, vector<1x128x128xbf16>
    %367 = vector.shape_cast %366 : vector<1x128x128xbf16> to vector<128x128xbf16>
    %c2_194 = arith.constant 2 : index
    %c0_195 = arith.constant 0 : index
    %c0_196 = arith.constant 0 : index
    %368 = vector.load %arg6[%c2_194, %c0_195, %c0_196] : memref<3x128x128xbf16, #tpu.memory_space<vmem>>, vector<1x128x128xbf16>
    %369 = vector.shape_cast %368 : vector<1x128x128xbf16> to vector<128x128xbf16>
    %c0_197 = arith.constant 0 : index
    %c0_198 = arith.constant 0 : index
    %370 = vector.load %arg8[%c0_197, %c0_198] : memref<1x128xf32, #tpu.memory_space<vmem>>, vector<1x128xf32>
    %cst_199 = arith.constant 0.000000e+00 : f32
    %371 = vector.broadcast %cst_199 : f32 to vector<8x128xf32>
    %c0_200 = arith.constant 0 : index
    %c0_201 = arith.constant 0 : index
    %372 = vector.load %arg16[%c0_200, %c0_201] : memref<8x128xf32, #tpu.memory_space<vmem>>, vector<8x128xf32>
    tpu.vector_store %arg16[%c0_200, %c0_201], %371 {strides = array<i32>} : memref<8x128xf32, #tpu.memory_space<vmem>>, vector<8x128xf32>,
    %c0_i32_202 = arith.constant 0 : i32
    %c8_i32_203 = arith.constant 8 : i32
    %373 = arith.muli %c0_i32_202, %c8_i32_203 : i32
    %374 = tpu.assume_multiple %373, 8 : i32
    %c0_204 = arith.constant 0 : index
    %c0_205 = arith.constant 0 : index
    %375 = vector.load %arg16[%c0_204, %c0_205] : memref<8x128xf32, #tpu.memory_space<vmem>>, vector<8x128xf32>
    %376 = arith.truncf %375 : vector<8x128xf32> to vector<8x128xbf16>
    %cst_206 = arith.constant dense<0.000000e+00> : vector<8x128xf32>
    %377 = tpu.matmul %376, %365, %cst_206 {dimension_numbers = #tpu.dot_dimension_numbers<[1], [0], [0], [1], [0, 0, 1, 1], [], []>} : vector<8x128xbf16>, vector<128x128xbf16>, vector<8x128xf32> -> vector<8x128xf32>
    %cst_207 = arith.constant dense<0.000000e+00> : vector<8x128xf32>
    %378 = tpu.matmul %376, %367, %cst_207 {dimension_numbers = #tpu.dot_dimension_numbers<[1], [0], [0], [1], [0, 0, 1, 1], [], []>} : vector<8x128xbf16>, vector<128x128xbf16>, vector<8x128xf32> -> vector<8x128xf32>
    %cst_208 = arith.constant dense<0.000000e+00> : vector<8x128xf32>
    %379 = tpu.matmul %376, %369, %cst_208 {dimension_numbers = #tpu.dot_dimension_numbers<[1], [0], [0], [1], [0, 0, 1, 1], [], []>} : vector<8x128xbf16>, vector<128x128xbf16>, vector<8x128xf32> -> vector<8x128xf32>
    %380 = vector.broadcast %370 : vector<1x128xf32> to vector<8x128xf32>
    %381 = arith.addf %379, %380 : vector<8x128xf32>
    %382 = arith.index_cast %374 : i32 to index
    %c0_209 = arith.constant 0 : index
    %383 = vector.load %arg12[%382, %c0_209] : memref<64x128xf32, #tpu.memory_space<vmem>>, vector<8x128xf32>
    %384 = arith.addf %383, %377 : vector<8x128xf32>
    %385 = arith.negf %384 : vector<8x128xf32>
    %386 = math.exp %385 : vector<8x128xf32>
    %cst_210 = arith.constant 1.000000e+00 : f32
    %387 = vector.broadcast %cst_210 : f32 to vector<8x128xf32>
    %388 = arith.addf %387, %386 : vector<8x128xf32>
    %389 = arith.divf %387, %388 : vector<8x128xf32>
    %390 = arith.index_cast %374 : i32 to index
    %c0_211 = arith.constant 0 : index
    %391 = vector.load %arg13[%390, %c0_211] : memref<64x128xf32, #tpu.memory_space<vmem>>, vector<8x128xf32>
    %392 = arith.addf %391, %378 : vector<8x128xf32>
    %393 = arith.negf %392 : vector<8x128xf32>
    %394 = math.exp %393 : vector<8x128xf32>
    %cst_212 = arith.constant 1.000000e+00 : f32
    %395 = vector.broadcast %cst_212 : f32 to vector<8x128xf32>
    %396 = arith.addf %395, %394 : vector<8x128xf32>
    %397 = arith.divf %395, %396 : vector<8x128xf32>
    %398 = arith.index_cast %374 : i32 to index
    %c0_213 = arith.constant 0 : index
    %399 = vector.load %arg14[%398, %c0_213] : memref<64x128xf32, #tpu.memory_space<vmem>>, vector<8x128xf32>
    %400 = arith.mulf %389, %381 : vector<8x128xf32>
    %401 = arith.addf %399, %400 : vector<8x128xf32>
    %402 = math.tanh %401 : vector<8x128xf32>
    %cst_214 = arith.constant 1.000000e+00 : f32
    %403 = vector.broadcast %cst_214 : f32 to vector<8x128xf32>
    %404 = arith.subf %403, %397 : vector<8x128xf32>
    %405 = arith.mulf %404, %402 : vector<8x128xf32>
    %406 = arith.mulf %397, %375 : vector<8x128xf32>
    %407 = arith.addf %405, %406 : vector<8x128xf32>
    %c0_215 = arith.constant 0 : index
    %c0_216 = arith.constant 0 : index
    %408 = vector.load %arg16[%c0_215, %c0_216] : memref<8x128xf32, #tpu.memory_space<vmem>>, vector<8x128xf32>
    tpu.vector_store %arg16[%c0_215, %c0_216], %407 {strides = array<i32>} : memref<8x128xf32, #tpu.memory_space<vmem>>, vector<8x128xf32>,
    %c1_i32_217 = arith.constant 1 : i32
    %c8_i32_218 = arith.constant 8 : i32
    %409 = arith.muli %c1_i32_217, %c8_i32_218 : i32
    %410 = tpu.assume_multiple %409, 8 : i32
    %c0_219 = arith.constant 0 : index
    %c0_220 = arith.constant 0 : index
    %411 = vector.load %arg16[%c0_219, %c0_220] : memref<8x128xf32, #tpu.memory_space<vmem>>, vector<8x128xf32>
    %412 = arith.truncf %411 : vector<8x128xf32> to vector<8x128xbf16>
    %cst_221 = arith.constant dense<0.000000e+00> : vector<8x128xf32>
    %413 = tpu.matmul %412, %365, %cst_221 {dimension_numbers = #tpu.dot_dimension_numbers<[1], [0], [0], [1], [0, 0, 1, 1], [], []>} : vector<8x128xbf16>, vector<128x128xbf16>, vector<8x128xf32> -> vector<8x128xf32>
    %cst_222 = arith.constant dense<0.000000e+00> : vector<8x128xf32>
    %414 = tpu.matmul %412, %367, %cst_222 {dimension_numbers = #tpu.dot_dimension_numbers<[1], [0], [0], [1], [0, 0, 1, 1], [], []>} : vector<8x128xbf16>, vector<128x128xbf16>, vector<8x128xf32> -> vector<8x128xf32>
    %cst_223 = arith.constant dense<0.000000e+00> : vector<8x128xf32>
    %415 = tpu.matmul %412, %369, %cst_223 {dimension_numbers = #tpu.dot_dimension_numbers<[1], [0], [0], [1], [0, 0, 1, 1], [], []>} : vector<8x128xbf16>, vector<128x128xbf16>, vector<8x128xf32> -> vector<8x128xf32>
    %416 = vector.broadcast %370 : vector<1x128xf32> to vector<8x128xf32>
    %417 = arith.addf %415, %416 : vector<8x128xf32>
    %418 = arith.index_cast %410 : i32 to index
    %c0_224 = arith.constant 0 : index
    %419 = vector.load %arg12[%418, %c0_224] : memref<64x128xf32, #tpu.memory_space<vmem>>, vector<8x128xf32>
    %420 = arith.addf %419, %413 : vector<8x128xf32>
    %421 = arith.negf %420 : vector<8x128xf32>
    %422 = math.exp %421 : vector<8x128xf32>
    %cst_225 = arith.constant 1.000000e+00 : f32
    %423 = vector.broadcast %cst_225 : f32 to vector<8x128xf32>
    %424 = arith.addf %423, %422 : vector<8x128xf32>
    %425 = arith.divf %423, %424 : vector<8x128xf32>
    %426 = arith.index_cast %410 : i32 to index
    %c0_226 = arith.constant 0 : index
    %427 = vector.load %arg13[%426, %c0_226] : memref<64x128xf32, #tpu.memory_space<vmem>>, vector<8x128xf32>
    %428 = arith.addf %427, %414 : vector<8x128xf32>
    %429 = arith.negf %428 : vector<8x128xf32>
    %430 = math.exp %429 : vector<8x128xf32>
    %cst_227 = arith.constant 1.000000e+00 : f32
    %431 = vector.broadcast %cst_227 : f32 to vector<8x128xf32>
    %432 = arith.addf %431, %430 : vector<8x128xf32>
    %433 = arith.divf %431, %432 : vector<8x128xf32>
    %434 = arith.index_cast %410 : i32 to index
    %c0_228 = arith.constant 0 : index
    %435 = vector.load %arg14[%434, %c0_228] : memref<64x128xf32, #tpu.memory_space<vmem>>, vector<8x128xf32>
    %436 = arith.mulf %425, %417 : vector<8x128xf32>
    %437 = arith.addf %435, %436 : vector<8x128xf32>
    %438 = math.tanh %437 : vector<8x128xf32>
    %cst_229 = arith.constant 1.000000e+00 : f32
    %439 = vector.broadcast %cst_229 : f32 to vector<8x128xf32>
    %440 = arith.subf %439, %433 : vector<8x128xf32>
    %441 = arith.mulf %440, %438 : vector<8x128xf32>
    %442 = arith.mulf %433, %411 : vector<8x128xf32>
    %443 = arith.addf %441, %442 : vector<8x128xf32>
    %c0_230 = arith.constant 0 : index
    %c0_231 = arith.constant 0 : index
    %444 = vector.load %arg16[%c0_230, %c0_231] : memref<8x128xf32, #tpu.memory_space<vmem>>, vector<8x128xf32>
    tpu.vector_store %arg16[%c0_230, %c0_231], %443 {strides = array<i32>} : memref<8x128xf32, #tpu.memory_space<vmem>>, vector<8x128xf32>,
    %c2_i32_232 = arith.constant 2 : i32
    %c8_i32_233 = arith.constant 8 : i32
    %445 = arith.muli %c2_i32_232, %c8_i32_233 : i32
    %446 = tpu.assume_multiple %445, 8 : i32
    %c0_234 = arith.constant 0 : index
    %c0_235 = arith.constant 0 : index
    %447 = vector.load %arg16[%c0_234, %c0_235] : memref<8x128xf32, #tpu.memory_space<vmem>>, vector<8x128xf32>
    %448 = arith.truncf %447 : vector<8x128xf32> to vector<8x128xbf16>
    %cst_236 = arith.constant dense<0.000000e+00> : vector<8x128xf32>
    %449 = tpu.matmul %448, %365, %cst_236 {dimension_numbers = #tpu.dot_dimension_numbers<[1], [0], [0], [1], [0, 0, 1, 1], [], []>} : vector<8x128xbf16>, vector<128x128xbf16>, vector<8x128xf32> -> vector<8x128xf32>
    %cst_237 = arith.constant dense<0.000000e+00> : vector<8x128xf32>
    %450 = tpu.matmul %448, %367, %cst_237 {dimension_numbers = #tpu.dot_dimension_numbers<[1], [0], [0], [1], [0, 0, 1, 1], [], []>} : vector<8x128xbf16>, vector<128x128xbf16>, vector<8x128xf32> -> vector<8x128xf32>
    %cst_238 = arith.constant dense<0.000000e+00> : vector<8x128xf32>
    %451 = tpu.matmul %448, %369, %cst_238 {dimension_numbers = #tpu.dot_dimension_numbers<[1], [0], [0], [1], [0, 0, 1, 1], [], []>} : vector<8x128xbf16>, vector<128x128xbf16>, vector<8x128xf32> -> vector<8x128xf32>
    %452 = vector.broadcast %370 : vector<1x128xf32> to vector<8x128xf32>
    %453 = arith.addf %451, %452 : vector<8x128xf32>
    %454 = arith.index_cast %446 : i32 to index
    %c0_239 = arith.constant 0 : index
    %455 = vector.load %arg12[%454, %c0_239] : memref<64x128xf32, #tpu.memory_space<vmem>>, vector<8x128xf32>
    %456 = arith.addf %455, %449 : vector<8x128xf32>
    %457 = arith.negf %456 : vector<8x128xf32>
    %458 = math.exp %457 : vector<8x128xf32>
    %cst_240 = arith.constant 1.000000e+00 : f32
    %459 = vector.broadcast %cst_240 : f32 to vector<8x128xf32>
    %460 = arith.addf %459, %458 : vector<8x128xf32>
    %461 = arith.divf %459, %460 : vector<8x128xf32>
    %462 = arith.index_cast %446 : i32 to index
    %c0_241 = arith.constant 0 : index
    %463 = vector.load %arg13[%462, %c0_241] : memref<64x128xf32, #tpu.memory_space<vmem>>, vector<8x128xf32>
    %464 = arith.addf %463, %450 : vector<8x128xf32>
    %465 = arith.negf %464 : vector<8x128xf32>
    %466 = math.exp %465 : vector<8x128xf32>
    %cst_242 = arith.constant 1.000000e+00 : f32
    %467 = vector.broadcast %cst_242 : f32 to vector<8x128xf32>
    %468 = arith.addf %467, %466 : vector<8x128xf32>
    %469 = arith.divf %467, %468 : vector<8x128xf32>
    %470 = arith.index_cast %446 : i32 to index
    %c0_243 = arith.constant 0 : index
    %471 = vector.load %arg14[%470, %c0_243] : memref<64x128xf32, #tpu.memory_space<vmem>>, vector<8x128xf32>
    %472 = arith.mulf %461, %453 : vector<8x128xf32>
    %473 = arith.addf %471, %472 : vector<8x128xf32>
    %474 = math.tanh %473 : vector<8x128xf32>
    %cst_244 = arith.constant 1.000000e+00 : f32
    %475 = vector.broadcast %cst_244 : f32 to vector<8x128xf32>
    %476 = arith.subf %475, %469 : vector<8x128xf32>
    %477 = arith.mulf %476, %474 : vector<8x128xf32>
    %478 = arith.mulf %469, %447 : vector<8x128xf32>
    %479 = arith.addf %477, %478 : vector<8x128xf32>
    %c0_245 = arith.constant 0 : index
    %c0_246 = arith.constant 0 : index
    %480 = vector.load %arg16[%c0_245, %c0_246] : memref<8x128xf32, #tpu.memory_space<vmem>>, vector<8x128xf32>
    tpu.vector_store %arg16[%c0_245, %c0_246], %479 {strides = array<i32>} : memref<8x128xf32, #tpu.memory_space<vmem>>, vector<8x128xf32>,
    %c3_i32_247 = arith.constant 3 : i32
    %c8_i32_248 = arith.constant 8 : i32
    %481 = arith.muli %c3_i32_247, %c8_i32_248 : i32
    %482 = tpu.assume_multiple %481, 8 : i32
    %c0_249 = arith.constant 0 : index
    %c0_250 = arith.constant 0 : index
    %483 = vector.load %arg16[%c0_249, %c0_250] : memref<8x128xf32, #tpu.memory_space<vmem>>, vector<8x128xf32>
    %484 = arith.truncf %483 : vector<8x128xf32> to vector<8x128xbf16>
    %cst_251 = arith.constant dense<0.000000e+00> : vector<8x128xf32>
    %485 = tpu.matmul %484, %365, %cst_251 {dimension_numbers = #tpu.dot_dimension_numbers<[1], [0], [0], [1], [0, 0, 1, 1], [], []>} : vector<8x128xbf16>, vector<128x128xbf16>, vector<8x128xf32> -> vector<8x128xf32>
    %cst_252 = arith.constant dense<0.000000e+00> : vector<8x128xf32>
    %486 = tpu.matmul %484, %367, %cst_252 {dimension_numbers = #tpu.dot_dimension_numbers<[1], [0], [0], [1], [0, 0, 1, 1], [], []>} : vector<8x128xbf16>, vector<128x128xbf16>, vector<8x128xf32> -> vector<8x128xf32>
    %cst_253 = arith.constant dense<0.000000e+00> : vector<8x128xf32>
    %487 = tpu.matmul %484, %369, %cst_253 {dimension_numbers = #tpu.dot_dimension_numbers<[1], [0], [0], [1], [0, 0, 1, 1], [], []>} : vector<8x128xbf16>, vector<128x128xbf16>, vector<8x128xf32> -> vector<8x128xf32>
    %488 = vector.broadcast %370 : vector<1x128xf32> to vector<8x128xf32>
    %489 = arith.addf %487, %488 : vector<8x128xf32>
    %490 = arith.index_cast %482 : i32 to index
    %c0_254 = arith.constant 0 : index
    %491 = vector.load %arg12[%490, %c0_254] : memref<64x128xf32, #tpu.memory_space<vmem>>, vector<8x128xf32>
    %492 = arith.addf %491, %485 : vector<8x128xf32>
    %493 = arith.negf %492 : vector<8x128xf32>
    %494 = math.exp %493 : vector<8x128xf32>
    %cst_255 = arith.constant 1.000000e+00 : f32
    %495 = vector.broadcast %cst_255 : f32 to vector<8x128xf32>
    %496 = arith.addf %495, %494 : vector<8x128xf32>
    %497 = arith.divf %495, %496 : vector<8x128xf32>
    %498 = arith.index_cast %482 : i32 to index
    %c0_256 = arith.constant 0 : index
    %499 = vector.load %arg13[%498, %c0_256] : memref<64x128xf32, #tpu.memory_space<vmem>>, vector<8x128xf32>
    %500 = arith.addf %499, %486 : vector<8x128xf32>
    %501 = arith.negf %500 : vector<8x128xf32>
    %502 = math.exp %501 : vector<8x128xf32>
    %cst_257 = arith.constant 1.000000e+00 : f32
    %503 = vector.broadcast %cst_257 : f32 to vector<8x128xf32>
    %504 = arith.addf %503, %502 : vector<8x128xf32>
    %505 = arith.divf %503, %504 : vector<8x128xf32>
    %506 = arith.index_cast %482 : i32 to index
    %c0_258 = arith.constant 0 : index
    %507 = vector.load %arg14[%506, %c0_258] : memref<64x128xf32, #tpu.memory_space<vmem>>, vector<8x128xf32>
    %508 = arith.mulf %497, %489 : vector<8x128xf32>
    %509 = arith.addf %507, %508 : vector<8x128xf32>
    %510 = math.tanh %509 : vector<8x128xf32>
    %cst_259 = arith.constant 1.000000e+00 : f32
    %511 = vector.broadcast %cst_259 : f32 to vector<8x128xf32>
    %512 = arith.subf %511, %505 : vector<8x128xf32>
    %513 = arith.mulf %512, %510 : vector<8x128xf32>
    %514 = arith.mulf %505, %483 : vector<8x128xf32>
    %515 = arith.addf %513, %514 : vector<8x128xf32>
    %c0_260 = arith.constant 0 : index
    %c0_261 = arith.constant 0 : index
    %516 = vector.load %arg16[%c0_260, %c0_261] : memref<8x128xf32, #tpu.memory_space<vmem>>, vector<8x128xf32>
    tpu.vector_store %arg16[%c0_260, %c0_261], %515 {strides = array<i32>} : memref<8x128xf32, #tpu.memory_space<vmem>>, vector<8x128xf32>,
    %c4_i32_262 = arith.constant 4 : i32
    %c8_i32_263 = arith.constant 8 : i32
    %517 = arith.muli %c4_i32_262, %c8_i32_263 : i32
    %518 = tpu.assume_multiple %517, 8 : i32
    %c0_264 = arith.constant 0 : index
    %c0_265 = arith.constant 0 : index
    %519 = vector.load %arg16[%c0_264, %c0_265] : memref<8x128xf32, #tpu.memory_space<vmem>>, vector<8x128xf32>
    %520 = arith.truncf %519 : vector<8x128xf32> to vector<8x128xbf16>
    %cst_266 = arith.constant dense<0.000000e+00> : vector<8x128xf32>
    %521 = tpu.matmul %520, %365, %cst_266 {dimension_numbers = #tpu.dot_dimension_numbers<[1], [0], [0], [1], [0, 0, 1, 1], [], []>} : vector<8x128xbf16>, vector<128x128xbf16>, vector<8x128xf32> -> vector<8x128xf32>
    %cst_267 = arith.constant dense<0.000000e+00> : vector<8x128xf32>
    %522 = tpu.matmul %520, %367, %cst_267 {dimension_numbers = #tpu.dot_dimension_numbers<[1], [0], [0], [1], [0, 0, 1, 1], [], []>} : vector<8x128xbf16>, vector<128x128xbf16>, vector<8x128xf32> -> vector<8x128xf32>
    %cst_268 = arith.constant dense<0.000000e+00> : vector<8x128xf32>
    %523 = tpu.matmul %520, %369, %cst_268 {dimension_numbers = #tpu.dot_dimension_numbers<[1], [0], [0], [1], [0, 0, 1, 1], [], []>} : vector<8x128xbf16>, vector<128x128xbf16>, vector<8x128xf32> -> vector<8x128xf32>
    %524 = vector.broadcast %370 : vector<1x128xf32> to vector<8x128xf32>
    %525 = arith.addf %523, %524 : vector<8x128xf32>
    %526 = arith.index_cast %518 : i32 to index
    %c0_269 = arith.constant 0 : index
    %527 = vector.load %arg12[%526, %c0_269] : memref<64x128xf32, #tpu.memory_space<vmem>>, vector<8x128xf32>
    %528 = arith.addf %527, %521 : vector<8x128xf32>
    %529 = arith.negf %528 : vector<8x128xf32>
    %530 = math.exp %529 : vector<8x128xf32>
    %cst_270 = arith.constant 1.000000e+00 : f32
    %531 = vector.broadcast %cst_270 : f32 to vector<8x128xf32>
    %532 = arith.addf %531, %530 : vector<8x128xf32>
    %533 = arith.divf %531, %532 : vector<8x128xf32>
    %534 = arith.index_cast %518 : i32 to index
    %c0_271 = arith.constant 0 : index
    %535 = vector.load %arg13[%534, %c0_271] : memref<64x128xf32, #tpu.memory_space<vmem>>, vector<8x128xf32>
    %536 = arith.addf %535, %522 : vector<8x128xf32>
    %537 = arith.negf %536 : vector<8x128xf32>
    %538 = math.exp %537 : vector<8x128xf32>
    %cst_272 = arith.constant 1.000000e+00 : f32
    %539 = vector.broadcast %cst_272 : f32 to vector<8x128xf32>
    %540 = arith.addf %539, %538 : vector<8x128xf32>
    %541 = arith.divf %539, %540 : vector<8x128xf32>
    %542 = arith.index_cast %518 : i32 to index
    %c0_273 = arith.constant 0 : index
    %543 = vector.load %arg14[%542, %c0_273] : memref<64x128xf32, #tpu.memory_space<vmem>>, vector<8x128xf32>
    %544 = arith.mulf %533, %525 : vector<8x128xf32>
    %545 = arith.addf %543, %544 : vector<8x128xf32>
    %546 = math.tanh %545 : vector<8x128xf32>
    %cst_274 = arith.constant 1.000000e+00 : f32
    %547 = vector.broadcast %cst_274 : f32 to vector<8x128xf32>
    %548 = arith.subf %547, %541 : vector<8x128xf32>
    %549 = arith.mulf %548, %546 : vector<8x128xf32>
    %550 = arith.mulf %541, %519 : vector<8x128xf32>
    %551 = arith.addf %549, %550 : vector<8x128xf32>
    %c0_275 = arith.constant 0 : index
    %c0_276 = arith.constant 0 : index
    %552 = vector.load %arg16[%c0_275, %c0_276] : memref<8x128xf32, #tpu.memory_space<vmem>>, vector<8x128xf32>
    tpu.vector_store %arg16[%c0_275, %c0_276], %551 {strides = array<i32>} : memref<8x128xf32, #tpu.memory_space<vmem>>, vector<8x128xf32>,
    %c5_i32_277 = arith.constant 5 : i32
    %c8_i32_278 = arith.constant 8 : i32
    %553 = arith.muli %c5_i32_277, %c8_i32_278 : i32
    %554 = tpu.assume_multiple %553, 8 : i32
    %c0_279 = arith.constant 0 : index
    %c0_280 = arith.constant 0 : index
    %555 = vector.load %arg16[%c0_279, %c0_280] : memref<8x128xf32, #tpu.memory_space<vmem>>, vector<8x128xf32>
    %556 = arith.truncf %555 : vector<8x128xf32> to vector<8x128xbf16>
    %cst_281 = arith.constant dense<0.000000e+00> : vector<8x128xf32>
    %557 = tpu.matmul %556, %365, %cst_281 {dimension_numbers = #tpu.dot_dimension_numbers<[1], [0], [0], [1], [0, 0, 1, 1], [], []>} : vector<8x128xbf16>, vector<128x128xbf16>, vector<8x128xf32> -> vector<8x128xf32>
    %cst_282 = arith.constant dense<0.000000e+00> : vector<8x128xf32>
    %558 = tpu.matmul %556, %367, %cst_282 {dimension_numbers = #tpu.dot_dimension_numbers<[1], [0], [0], [1], [0, 0, 1, 1], [], []>} : vector<8x128xbf16>, vector<128x128xbf16>, vector<8x128xf32> -> vector<8x128xf32>
    %cst_283 = arith.constant dense<0.000000e+00> : vector<8x128xf32>
    %559 = tpu.matmul %556, %369, %cst_283 {dimension_numbers = #tpu.dot_dimension_numbers<[1], [0], [0], [1], [0, 0, 1, 1], [], []>} : vector<8x128xbf16>, vector<128x128xbf16>, vector<8x128xf32> -> vector<8x128xf32>
    %560 = vector.broadcast %370 : vector<1x128xf32> to vector<8x128xf32>
    %561 = arith.addf %559, %560 : vector<8x128xf32>
    %562 = arith.index_cast %554 : i32 to index
    %c0_284 = arith.constant 0 : index
    %563 = vector.load %arg12[%562, %c0_284] : memref<64x128xf32, #tpu.memory_space<vmem>>, vector<8x128xf32>
    %564 = arith.addf %563, %557 : vector<8x128xf32>
    %565 = arith.negf %564 : vector<8x128xf32>
    %566 = math.exp %565 : vector<8x128xf32>
    %cst_285 = arith.constant 1.000000e+00 : f32
    %567 = vector.broadcast %cst_285 : f32 to vector<8x128xf32>
    %568 = arith.addf %567, %566 : vector<8x128xf32>
    %569 = arith.divf %567, %568 : vector<8x128xf32>
    %570 = arith.index_cast %554 : i32 to index
    %c0_286 = arith.constant 0 : index
    %571 = vector.load %arg13[%570, %c0_286] : memref<64x128xf32, #tpu.memory_space<vmem>>, vector<8x128xf32>
    %572 = arith.addf %571, %558 : vector<8x128xf32>
    %573 = arith.negf %572 : vector<8x128xf32>
    %574 = math.exp %573 : vector<8x128xf32>
    %cst_287 = arith.constant 1.000000e+00 : f32
    %575 = vector.broadcast %cst_287 : f32 to vector<8x128xf32>
    %576 = arith.addf %575, %574 : vector<8x128xf32>
    %577 = arith.divf %575, %576 : vector<8x128xf32>
    %578 = arith.index_cast %554 : i32 to index
    %c0_288 = arith.constant 0 : index
    %579 = vector.load %arg14[%578, %c0_288] : memref<64x128xf32, #tpu.memory_space<vmem>>, vector<8x128xf32>
    %580 = arith.mulf %569, %561 : vector<8x128xf32>
    %581 = arith.addf %579, %580 : vector<8x128xf32>
    %582 = math.tanh %581 : vector<8x128xf32>
    %cst_289 = arith.constant 1.000000e+00 : f32
    %583 = vector.broadcast %cst_289 : f32 to vector<8x128xf32>
    %584 = arith.subf %583, %577 : vector<8x128xf32>
    %585 = arith.mulf %584, %582 : vector<8x128xf32>
    %586 = arith.mulf %577, %555 : vector<8x128xf32>
    %587 = arith.addf %585, %586 : vector<8x128xf32>
    %c0_290 = arith.constant 0 : index
    %c0_291 = arith.constant 0 : index
    %588 = vector.load %arg16[%c0_290, %c0_291] : memref<8x128xf32, #tpu.memory_space<vmem>>, vector<8x128xf32>
    tpu.vector_store %arg16[%c0_290, %c0_291], %587 {strides = array<i32>} : memref<8x128xf32, #tpu.memory_space<vmem>>, vector<8x128xf32>,
    %c6_i32_292 = arith.constant 6 : i32
    %c8_i32_293 = arith.constant 8 : i32
    %589 = arith.muli %c6_i32_292, %c8_i32_293 : i32
    %590 = tpu.assume_multiple %589, 8 : i32
    %c0_294 = arith.constant 0 : index
    %c0_295 = arith.constant 0 : index
    %591 = vector.load %arg16[%c0_294, %c0_295] : memref<8x128xf32, #tpu.memory_space<vmem>>, vector<8x128xf32>
    %592 = arith.truncf %591 : vector<8x128xf32> to vector<8x128xbf16>
    %cst_296 = arith.constant dense<0.000000e+00> : vector<8x128xf32>
    %593 = tpu.matmul %592, %365, %cst_296 {dimension_numbers = #tpu.dot_dimension_numbers<[1], [0], [0], [1], [0, 0, 1, 1], [], []>} : vector<8x128xbf16>, vector<128x128xbf16>, vector<8x128xf32> -> vector<8x128xf32>
    %cst_297 = arith.constant dense<0.000000e+00> : vector<8x128xf32>
    %594 = tpu.matmul %592, %367, %cst_297 {dimension_numbers = #tpu.dot_dimension_numbers<[1], [0], [0], [1], [0, 0, 1, 1], [], []>} : vector<8x128xbf16>, vector<128x128xbf16>, vector<8x128xf32> -> vector<8x128xf32>
    %cst_298 = arith.constant dense<0.000000e+00> : vector<8x128xf32>
    %595 = tpu.matmul %592, %369, %cst_298 {dimension_numbers = #tpu.dot_dimension_numbers<[1], [0], [0], [1], [0, 0, 1, 1], [], []>} : vector<8x128xbf16>, vector<128x128xbf16>, vector<8x128xf32> -> vector<8x128xf32>
    %596 = vector.broadcast %370 : vector<1x128xf32> to vector<8x128xf32>
    %597 = arith.addf %595, %596 : vector<8x128xf32>
    %598 = arith.index_cast %590 : i32 to index
    %c0_299 = arith.constant 0 : index
    %599 = vector.load %arg12[%598, %c0_299] : memref<64x128xf32, #tpu.memory_space<vmem>>, vector<8x128xf32>
    %600 = arith.addf %599, %593 : vector<8x128xf32>
    %601 = arith.negf %600 : vector<8x128xf32>
    %602 = math.exp %601 : vector<8x128xf32>
    %cst_300 = arith.constant 1.000000e+00 : f32
    %603 = vector.broadcast %cst_300 : f32 to vector<8x128xf32>
    %604 = arith.addf %603, %602 : vector<8x128xf32>
    %605 = arith.divf %603, %604 : vector<8x128xf32>
    %606 = arith.index_cast %590 : i32 to index
    %c0_301 = arith.constant 0 : index
    %607 = vector.load %arg13[%606, %c0_301] : memref<64x128xf32, #tpu.memory_space<vmem>>, vector<8x128xf32>
    %608 = arith.addf %607, %594 : vector<8x128xf32>
    %609 = arith.negf %608 : vector<8x128xf32>
    %610 = math.exp %609 : vector<8x128xf32>
    %cst_302 = arith.constant 1.000000e+00 : f32
    %611 = vector.broadcast %cst_302 : f32 to vector<8x128xf32>
    %612 = arith.addf %611, %610 : vector<8x128xf32>
    %613 = arith.divf %611, %612 : vector<8x128xf32>
    %614 = arith.index_cast %590 : i32 to index
    %c0_303 = arith.constant 0 : index
    %615 = vector.load %arg14[%614, %c0_303] : memref<64x128xf32, #tpu.memory_space<vmem>>, vector<8x128xf32>
    %616 = arith.mulf %605, %597 : vector<8x128xf32>
    %617 = arith.addf %615, %616 : vector<8x128xf32>
    %618 = math.tanh %617 : vector<8x128xf32>
    %cst_304 = arith.constant 1.000000e+00 : f32
    %619 = vector.broadcast %cst_304 : f32 to vector<8x128xf32>
    %620 = arith.subf %619, %613 : vector<8x128xf32>
    %621 = arith.mulf %620, %618 : vector<8x128xf32>
    %622 = arith.mulf %613, %591 : vector<8x128xf32>
    %623 = arith.addf %621, %622 : vector<8x128xf32>
    %c0_305 = arith.constant 0 : index
    %c0_306 = arith.constant 0 : index
    %624 = vector.load %arg16[%c0_305, %c0_306] : memref<8x128xf32, #tpu.memory_space<vmem>>, vector<8x128xf32>
    tpu.vector_store %arg16[%c0_305, %c0_306], %623 {strides = array<i32>} : memref<8x128xf32, #tpu.memory_space<vmem>>, vector<8x128xf32>,
    %c7_i32_307 = arith.constant 7 : i32
    %c8_i32_308 = arith.constant 8 : i32
    %625 = arith.muli %c7_i32_307, %c8_i32_308 : i32
    %626 = tpu.assume_multiple %625, 8 : i32
    %c0_309 = arith.constant 0 : index
    %c0_310 = arith.constant 0 : index
    %627 = vector.load %arg16[%c0_309, %c0_310] : memref<8x128xf32, #tpu.memory_space<vmem>>, vector<8x128xf32>
    %628 = arith.truncf %627 : vector<8x128xf32> to vector<8x128xbf16>
    %cst_311 = arith.constant dense<0.000000e+00> : vector<8x128xf32>
    %629 = tpu.matmul %628, %365, %cst_311 {dimension_numbers = #tpu.dot_dimension_numbers<[1], [0], [0], [1], [0, 0, 1, 1], [], []>} : vector<8x128xbf16>, vector<128x128xbf16>, vector<8x128xf32> -> vector<8x128xf32>
    %cst_312 = arith.constant dense<0.000000e+00> : vector<8x128xf32>
    %630 = tpu.matmul %628, %367, %cst_312 {dimension_numbers = #tpu.dot_dimension_numbers<[1], [0], [0], [1], [0, 0, 1, 1], [], []>} : vector<8x128xbf16>, vector<128x128xbf16>, vector<8x128xf32> -> vector<8x128xf32>
    %cst_313 = arith.constant dense<0.000000e+00> : vector<8x128xf32>
    %631 = tpu.matmul %628, %369, %cst_313 {dimension_numbers = #tpu.dot_dimension_numbers<[1], [0], [0], [1], [0, 0, 1, 1], [], []>} : vector<8x128xbf16>, vector<128x128xbf16>, vector<8x128xf32> -> vector<8x128xf32>
    %632 = vector.broadcast %370 : vector<1x128xf32> to vector<8x128xf32>
    %633 = arith.addf %631, %632 : vector<8x128xf32>
    %634 = arith.index_cast %626 : i32 to index
    %c0_314 = arith.constant 0 : index
    %635 = vector.load %arg12[%634, %c0_314] : memref<64x128xf32, #tpu.memory_space<vmem>>, vector<8x128xf32>
    %636 = arith.addf %635, %629 : vector<8x128xf32>
    %637 = arith.negf %636 : vector<8x128xf32>
    %638 = math.exp %637 : vector<8x128xf32>
    %cst_315 = arith.constant 1.000000e+00 : f32
    %639 = vector.broadcast %cst_315 : f32 to vector<8x128xf32>
    %640 = arith.addf %639, %638 : vector<8x128xf32>
    %641 = arith.divf %639, %640 : vector<8x128xf32>
    %642 = arith.index_cast %626 : i32 to index
    %c0_316 = arith.constant 0 : index
    %643 = vector.load %arg13[%642, %c0_316] : memref<64x128xf32, #tpu.memory_space<vmem>>, vector<8x128xf32>
    %644 = arith.addf %643, %630 : vector<8x128xf32>
    %645 = arith.negf %644 : vector<8x128xf32>
    %646 = math.exp %645 : vector<8x128xf32>
    %cst_317 = arith.constant 1.000000e+00 : f32
    %647 = vector.broadcast %cst_317 : f32 to vector<8x128xf32>
    %648 = arith.addf %647, %646 : vector<8x128xf32>
    %649 = arith.divf %647, %648 : vector<8x128xf32>
    %650 = arith.index_cast %626 : i32 to index
    %c0_318 = arith.constant 0 : index
    %651 = vector.load %arg14[%650, %c0_318] : memref<64x128xf32, #tpu.memory_space<vmem>>, vector<8x128xf32>
    %652 = arith.mulf %641, %633 : vector<8x128xf32>
    %653 = arith.addf %651, %652 : vector<8x128xf32>
    %654 = math.tanh %653 : vector<8x128xf32>
    %cst_319 = arith.constant 1.000000e+00 : f32
    %655 = vector.broadcast %cst_319 : f32 to vector<8x128xf32>
    %656 = arith.subf %655, %649 : vector<8x128xf32>
    %657 = arith.mulf %656, %654 : vector<8x128xf32>
    %658 = arith.mulf %649, %627 : vector<8x128xf32>
    %659 = arith.addf %657, %658 : vector<8x128xf32>
    %c0_320 = arith.constant 0 : index
    %c0_321 = arith.constant 0 : index
    %660 = vector.load %arg16[%c0_320, %c0_321] : memref<8x128xf32, #tpu.memory_space<vmem>>, vector<8x128xf32>
    tpu.vector_store %arg16[%c0_320, %c0_321], %659 {strides = array<i32>} : memref<8x128xf32, #tpu.memory_space<vmem>>, vector<8x128xf32>,
    %c8_i32_322 = arith.constant 8 : i32
    %c0_323 = arith.constant 0 : index
    %c0_324 = arith.constant 0 : index
    %661 = vector.load %arg16[%c0_323, %c0_324] : memref<8x128xf32, #tpu.memory_space<vmem>>, vector<8x128xf32>
    %662 = arith.truncf %661 : vector<8x128xf32> to vector<8x128xbf16>
    %c0_325 = arith.constant 0 : index
    %c0_326 = arith.constant 0 : index
    %663 = vector.load %arg9[%c0_325, %c0_326] : memref<128x128xbf16, #tpu.memory_space<vmem>>, vector<128x128xbf16>
    %cst_327 = arith.constant dense<0.000000e+00> : vector<8x128xf32>
    %664 = tpu.matmul %662, %663, %cst_327 {dimension_numbers = #tpu.dot_dimension_numbers<[1], [0], [0], [1], [0, 0, 1, 1], [], []>} : vector<8x128xbf16>, vector<128x128xbf16>, vector<8x128xf32> -> vector<8x128xf32>
    %c0_328 = arith.constant 0 : index
    %c0_329 = arith.constant 0 : index
    %665 = vector.load %arg10[%c0_328, %c0_329] : memref<1x128xf32, #tpu.memory_space<vmem>>, vector<1x128xf32>
    %666 = vector.broadcast %665 : vector<1x128xf32> to vector<8x128xf32>
    %667 = arith.addf %664, %666 : vector<8x128xf32>
    %cst_330 = arith.constant dense<0xFF800000> : vector<8xf32>
    %668 = vector.multi_reduction <maximumf>, %667, %cst_330 [1] : vector<8x128xf32> to vector<8xf32>
    %669 = vector.shape_cast %668 : vector<8xf32> to vector<8x1xf32>
    %670 = vector.broadcast %669 : vector<8x1xf32> to vector<8x128xf32>
    %671 = arith.subf %667, %670 : vector<8x128xf32>
    %672 = math.exp %671 : vector<8x128xf32>
    %cst_331 = arith.constant dense<0.000000e+00> : vector<8xf32>
    %673 = vector.multi_reduction <add>, %672, %cst_331 [1] : vector<8x128xf32> to vector<8xf32>
    %674 = vector.shape_cast %673 : vector<8xf32> to vector<8x1xf32>
    %675 = tpu.reciprocal %674 : vector<8x1xf32> -> vector<8x1xf32>
    %676 = vector.broadcast %675 : vector<8x1xf32> to vector<8x128xf32>
    %677 = arith.mulf %672, %676 : vector<8x128xf32>
    %c0_332 = arith.constant 0 : index
    %c0_333 = arith.constant 0 : index
    %678 = vector.load %arg11[%c0_332, %c0_333] : memref<8x128xf32, #tpu.memory_space<vmem>>, vector<8x128xf32>
    tpu.vector_store %arg11[%c0_332, %c0_333], %677 {strides = array<i32>} : memref<8x128xf32, #tpu.memory_space<vmem>>, vector<8x128xf32>,
    return
  }
}

</mosaic_0001>

<llo_original>
// kernel: gru_net_forward.1
$region0: #{gru_net_forward.1}
  #allocation0 [shape = 'u32[]', space=smem, size = 0x4, offset = 0x4, fixed_abs, tag = 'smem constant byte address 0x4 - core index']
  #allocation1 [shape = 'u32[144,128]{1,0:T(1,128)}', space=vmem, size = 0x12000, scoped, tag = 'internal scratch']
  #allocation2 [shape = 'f32[64,128]{1,0:T(8,128)}', space=vmem, size = 0x8000, scoped, tag = 'scratch operand']
  #allocation3 [shape = 'f32[64,128]{1,0:T(8,128)}', space=vmem, size = 0x8000, scoped, tag = 'scratch operand']
  #allocation4 [shape = 'f32[64,128]{1,0:T(8,128)}', space=vmem, size = 0x8000, scoped, tag = 'scratch operand']
  #allocation5 [shape = 'f32[64,128]{1,0:T(8,128)}', space=vmem, size = 0x8000, scoped, tag = 'scratch operand']
  #allocation6 [shape = 'f32[8,128]{1,0:T(8,128)}', space=vmem, size = 0x1000, scoped, tag = 'scratch operand']
  %s0 = inlined_call_operand.vmem [shape: bf16[64,128], index: 0, kind: input, shape index: {}]
  %s1 = inlined_call_operand.vmem [shape: bf16[3,128,128], index: 1, kind: input, shape index: {}]
  %s2 = inlined_call_operand.vmem [shape: bf16[3,128,128], index: 2, kind: input, shape index: {}]
  %s3 = inlined_call_operand.vmem [shape: f32[3,1,128], index: 3, kind: input, shape index: {}]
  %s4 = inlined_call_operand.vmem [shape: f32[1,128], index: 4, kind: input, shape index: {}]
  %s5 = inlined_call_operand.vmem [shape: bf16[3,128,128], index: 5, kind: input, shape index: {}]
  %s6 = inlined_call_operand.vmem [shape: bf16[3,128,128], index: 6, kind: input, shape index: {}]
  %s7 = inlined_call_operand.vmem [shape: f32[3,1,128], index: 7, kind: input, shape index: {}]
  %s8 = inlined_call_operand.vmem [shape: f32[1,128], index: 8, kind: input, shape index: {}]
  %s9 = inlined_call_operand.vmem [shape: bf16[128,128], index: 9, kind: input, shape index: {}]
  %s10 = inlined_call_operand.vmem [shape: f32[1,128], index: 10, kind: input, shape index: {}]
  %s11 = inlined_call_operand.vmem [shape: f32[8,128], index: 11, kind: output, shape index: {}]
  %s12 = sld [smem:[#allocation0]]
  $region54: #{gru_net_forward.1} parent=0
    _
  %s14 = ssub.s32 1, %s12
  %s15 = scalar_select 0, %s14, %s12
  // Predicated region
  $region2: #{gru_net_forward.1} parent=0 // pred_check
    _
  $region3: #{gru_net_forward.1} parent=0 // pred_check_branch
    %17 = sbr.rel (0) target = $region5
  $region4: #{gru_net_forward.1} parent=0 // pred_region
    _
  $region5: #{gru_net_forward.1} parent=0 // pred_fallthru
    _
  // Predicated region
  $region6: #{gru_net_forward.1} parent=0 // pred_check
    _
  $region7: #{gru_net_forward.1} parent=0 // pred_check_branch
    %19 = sbr.rel (0) target = $region9
  $region8: #{gru_net_forward.1} parent=0 // pred_region
    _
  $region9: #{gru_net_forward.1} parent=0 // pred_fallthru
    _
  // Predicated region
  $region10: #{gru_net_forward.1} parent=0 // pred_check
    _
  $region11: #{gru_net_forward.1} parent=0 // pred_check_branch
    %21 = sbr.rel (0) target = $region13
  $region12: #{gru_net_forward.1} parent=0 // pred_region
    _
  $region13: #{gru_net_forward.1} parent=0 // pred_fallthru
    _
  // Predicated region
  $region14: #{gru_net_forward.1} parent=0 // pred_check
    _
  $region15: #{gru_net_forward.1} parent=0 // pred_check_branch
    %23 = sbr.rel (0) target = $region17
  $region16: #{gru_net_forward.1} parent=0 // pred_region
    _
  $region17: #{gru_net_forward.1} parent=0 // pred_fallthru
    _
  // Predicated region
  $region18: #{gru_net_forward.1} parent=0 // pred_check
    _
  $region19: #{gru_net_forward.1} parent=0 // pred_check_branch
    %25 = sbr.rel (0) target = $region21
  $region20: #{gru_net_forward.1} parent=0 // pred_region
    _
  $region21: #{gru_net_forward.1} parent=0 // pred_fallthru
    _
  // Predicated region
  $region22: #{gru_net_forward.1} parent=0 // pred_check
    _
  $region23: #{gru_net_forward.1} parent=0 // pred_check_branch
    %27 = sbr.rel (0) target = $region25
  $region24: #{gru_net_forward.1} parent=0 // pred_region
    _
  $region25: #{gru_net_forward.1} parent=0 // pred_fallthru
    _
  // Predicated region
  $region26: #{gru_net_forward.1} parent=0 // pred_check
    _
  $region27: #{gru_net_forward.1} parent=0 // pred_check_branch
    %29 = sbr.rel (0) target = $region29
  $region28: #{gru_net_forward.1} parent=0 // pred_region
    _
  $region29: #{gru_net_forward.1} parent=0 // pred_fallthru
    _
  // Predicated region
  $region30: #{gru_net_forward.1} parent=0 // pred_check
    _
  $region31: #{gru_net_forward.1} parent=0 // pred_check_branch
    %31 = sbr.rel (0) target = $region33
  $region32: #{gru_net_forward.1} parent=0 // pred_region
    _
  $region33: #{gru_net_forward.1} parent=0 // pred_fallthru
    _
  // Predicated region
  $region34: #{gru_net_forward.1} parent=0 // pred_check
    _
  $region35: #{gru_net_forward.1} parent=0 // pred_check_branch
    %33 = sbr.rel (0) target = $region37
  $region36: #{gru_net_forward.1} parent=0 // pred_region
    _
  $region37: #{gru_net_forward.1} parent=0 // pred_fallthru
    _
  // Predicated region
  $region38: #{gru_net_forward.1} parent=0 // pred_check
    _
  $region39: #{gru_net_forward.1} parent=0 // pred_check_branch
    %35 = sbr.rel (0) target = $region41
  $region40: #{gru_net_forward.1} parent=0 // pred_region
    _
  $region41: #{gru_net_forward.1} parent=0 // pred_fallthru
    _
  // Predicated region
  $region42: #{gru_net_forward.1} parent=0 // pred_check
    _
  $region43: #{gru_net_forward.1} parent=0 // pred_check_branch
    %37 = sbr.rel (0) target = $region45
  $region44: #{gru_net_forward.1} parent=0 // pred_region
    _
  $region45: #{gru_net_forward.1} parent=0 // pred_fallthru
    _
  %v39 = vld [vmem:[%s0] sm:$0xf]
  %v40 = vld [vmem:[%s0 + $0x4] sm:$0xf]
  %v41 = vld [vmem:[%s0 + $0x8] sm:$0xf]
  %v42 = vld [vmem:[%s0 + $0xc] sm:$0xf]
  %v43 = vld [vmem:[%s0 + $0x10] sm:$0xf]
  %v44 = vld [vmem:[%s0 + $0x14] sm:$0xf]
  %v45 = vld [vmem:[%s0 + $0x18] sm:$0xf]
  %v46 = vld [vmem:[%s0 + $0x1c] sm:$0xf]
  %v47 = vld [vmem:[%s1] sm:$0xf]
  %v48 = vld [vmem:[%s1 + $0x4] sm:$0xf]
  %v49 = vld [vmem:[%s1 + $0x8] sm:$0xf]
  %v50 = vld [vmem:[%s1 + $0xc] sm:$0xf]
  %v51 = vld [vmem:[%s1 + $0x10] sm:$0xf]
  %v52 = vld [vmem:[%s1 + $0x14] sm:$0xf]
  %v53 = vld [vmem:[%s1 + $0x18] sm:$0xf]
  %v54 = vld [vmem:[%s1 + $0x1c] sm:$0xf]
  %v55 = vld [vmem:[%s1 + $0x20] sm:$0xf]
  %v56 = vld [vmem:[%s1 + $0x24] sm:$0xf]
  %v57 = vld [vmem:[%s1 + $0x28] sm:$0xf]
  %v58 = vld [vmem:[%s1 + $0x2c] sm:$0xf]
  %v59 = vld [vmem:[%s1 + $0x30] sm:$0xf]
  %v60 = vld [vmem:[%s1 + $0x34] sm:$0xf]
  %v61 = vld [vmem:[%s1 + $0x38] sm:$0xf]
  %v62 = vld [vmem:[%s1 + $0x3c] sm:$0xf]
  %v63 = vld [vmem:[%s3] sm:$0x1]
  %v65 = vlaneseq
  %v66 = vshrl.u32 %v65, 7
  %v67 = vsub.s32 0, %v66
  %v68 = vrot.slane %v63, %v67
  %v78 = vunpack.c.l.b16 %v39
  %v79 = vunpack.c.l.b16 %v40
  %v80 = vunpack.c.l.b16 %v41
  %v81 = vunpack.c.l.b16 %v42
  %v82 = vunpack.c.l.b16 %v43
  %v83 = vunpack.c.l.b16 %v44
  %v84 = vunpack.c.l.b16 %v45
  %v85 = vunpack.c.l.b16 %v46
  %v86 = vpack.c.b16 %v79, %v78
  %v87 = vpack.c.b16 %v81, %v80
  %v88 = vpack.c.b16 %v83, %v82
  %v89 = vpack.c.b16 %v85, %v84
  %v110 = vunpack.c.l.b16 %v47
  %v111 = vunpack.c.l.b16 %v48
  %v112 = vunpack.c.l.b16 %v49
  %v113 = vunpack.c.l.b16 %v50
  %v114 = vunpack.c.l.b16 %v51
  %v115 = vunpack.c.l.b16 %v52
  %v116 = vunpack.c.l.b16 %v53
  %v117 = vunpack.c.l.b16 %v54
  %v118 = vunpack.c.l.b16 %v55
  %v119 = vunpack.c.l.b16 %v56
  %v120 = vunpack.c.l.b16 %v57
  %v121 = vunpack.c.l.b16 %v58
  %v122 = vunpack.c.l.b16 %v59
  %v123 = vunpack.c.l.b16 %v60
  %v124 = vunpack.c.l.b16 %v61
  %v125 = vunpack.c.l.b16 %v62
  %v126 = vpack.c.b16 %v111, %v110
  %v127 = vpack.c.b16 %v113, %v112
  %v128 = vpack.c.b16 %v115, %v114
  %v129 = vpack.c.b16 %v117, %v116
  %v130 = vpack.c.b16 %v119, %v118
  %v131 = vpack.c.b16 %v121, %v120
  %v132 = vpack.c.b16 %v123, %v122
  %v133 = vpack.c.b16 %v125, %v124
  %142 = vmatprep.subr.bf16.mxu0 0
  %143 = vmatpush1.bf16.msra.mxu0 %v126
  %144 = vmatprep.subr.bf16.mxu0 0
  %145 = vmatpush1.bf16.msra.mxu0 %v127
  %146 = vmatprep.subr.bf16.mxu0 0
  %147 = vmatpush1.bf16.msra.mxu0 %v128
  %148 = vmatprep.subr.bf16.mxu0 0
  %149 = vmatpush1.bf16.msra.mxu0 %v129
  %150 = vmatprep.subr.bf16.mxu0 0
  %151 = vmatpush1.bf16.msra.mxu0 %v130
  %152 = vmatprep.subr.bf16.mxu0 0
  %153 = vmatpush1.bf16.msra.mxu0 %v131
  %154 = vmatprep.subr.bf16.mxu0 0
  %155 = vmatpush1.bf16.msra.mxu0 %v132
  %156 = vmatprep.subr.bf16.mxu0 0
  %157 = vmatpush1.bf16.msra.mxu0 %v133
  %158 = vmatprep.subr.bf16.mxu0 0
  %159 = vmatpush1.bf16.msra.mxu0 0
  %160 = vmatprep.subr.bf16.mxu0 0
  %161 = vmatpush1.bf16.msra.mxu0 0
  %162 = vmatprep.subr.bf16.mxu0 0
  %163 = vmatpush1.bf16.msra.mxu0 0
  %164 = vmatprep.subr.bf16.mxu0 0
  %165 = vmatpush1.bf16.msra.mxu0 0
  %166 = vmatprep.subr.bf16.mxu0 0
  %167 = vmatpush1.bf16.msra.mxu0 0
  %168 = vmatprep.subr.bf16.mxu0 0
  %169 = vmatpush1.bf16.msra.mxu0 0
  %170 = vmatprep.subr.bf16.mxu0 0
  %171 = vmatpush1.bf16.msra.mxu0 0
  %172 = vmatprep.subr.bf16.mxu0 0
  %173 = vmatpush1.bf16.msra.mxu0 0
  %174 = vmatprep.mubr.bf16.mxu0 0
  %175 = vmatmul.mubr.bf16.gmra.mrb[0].mxu0 %v86
  %v176 = vpop.f32.mrb[0].mxu0
  %v177 = vadd.f32 %v68, %v176
  %v178 = vpop.f32.mrb[0].mxu0
  %v179 = vpop.f32.mrb[0].mxu0
  %v180 = vadd.f32 %v68, %v179
  %v181 = vpop.f32.mrb[0].mxu0
  %182 = vmatprep.mubr.bf16.mxu0 0
  %183 = vmatmul.mubr.bf16.gmra.mrb[0].mxu0 %v87
  %v184 = vpop.f32.mrb[0].mxu0
  %v185 = vadd.f32 %v68, %v184
  %v186 = vpop.f32.mrb[0].mxu0
  %v187 = vpop.f32.mrb[0].mxu0
  %v188 = vadd.f32 %v68, %v187
  %v189 = vpop.f32.mrb[0].mxu0
  %190 = vmatprep.mubr.bf16.mxu0 0
  %191 = vmatmul.mubr.bf16.gmra.mrb[0].mxu0 %v88
  %v192 = vpop.f32.mrb[0].mxu0
  %v193 = vadd.f32 %v68, %v192
  %v194 = vpop.f32.mrb[0].mxu0
  %v195 = vpop.f32.mrb[0].mxu0
  %v196 = vadd.f32 %v68, %v195
  %v197 = vpop.f32.mrb[0].mxu0
  %198 = vmatprep.mubr.bf16.mxu0 0
  %199 = vmatmul.mubr.bf16.gmra.mrb[0].mxu0 %v89
  %v200 = vpop.f32.mrb[0].mxu0
  %v201 = vadd.f32 %v68, %v200
  %v202 = vpop.f32.mrb[0].mxu0
  %v203 = vpop.f32.mrb[0].mxu0
  %v204 = vadd.f32 %v68, %v203
  %v205 = vpop.f32.mrb[0].mxu0
  %206 = vdwg.mxu0
  %207 = vst [vmem:[#allocation2] sm:$0xff] %v177
  %208 = vst [vmem:[#allocation2 + $0x8] sm:$0xff] %v180
  %209 = vst [vmem:[#allocation2 + $0x10] sm:$0xff] %v185
  %210 = vst [vmem:[#allocation2 + $0x18] sm:$0xff] %v188
  %211 = vst [vmem:[#allocation2 + $0x20] sm:$0xff] %v193
  %212 = vst [vmem:[#allocation2 + $0x28] sm:$0xff] %v196
  %213 = vst [vmem:[#allocation2 + $0x30] sm:$0xff] %v201
  %214 = vst [vmem:[#allocation2 + $0x38] sm:$0xff] %v204
  %s215 = scalar_lea.vmem %s1, 64
  %v216 = vld [vmem:[%s215] sm:$0xf]
  %v217 = vld [vmem:[%s215 + $0x4] sm:$0xf]
  %v218 = vld [vmem:[%s215 + $0x8] sm:$0xf]
  %v219 = vld [vmem:[%s215 + $0xc] sm:$0xf]
  %v220 = vld [vmem:[%s215 + $0x10] sm:$0xf]
  %v221 = vld [vmem:[%s215 + $0x14] sm:$0xf]
  %v222 = vld [vmem:[%s215 + $0x18] sm:$0xf]
  %v223 = vld [vmem:[%s215 + $0x1c] sm:$0xf]
  %v224 = vld [vmem:[%s215 + $0x20] sm:$0xf]
  %v225 = vld [vmem:[%s215 + $0x24] sm:$0xf]
  %v226 = vld [vmem:[%s215 + $0x28] sm:$0xf]
  %v227 = vld [vmem:[%s215 + $0x2c] sm:$0xf]
  %v228 = vld [vmem:[%s215 + $0x30] sm:$0xf]
  %v229 = vld [vmem:[%s215 + $0x34] sm:$0xf]
  %v230 = vld [vmem:[%s215 + $0x38] sm:$0xf]
  %v231 = vld [vmem:[%s215 + $0x3c] sm:$0xf]
  %s232 = scalar_lea.vmem %s3, 1
  %v233 = vld [vmem:[%s232] sm:$0x1]
  %v235 = vlaneseq
  %v236 = vshrl.u32 %v235, 7
  %v237 = vsub.s32 0, %v236
  %v238 = vrot.slane %v233, %v237
  %v256 = vunpack.c.l.b16 %v216
  %v257 = vunpack.c.l.b16 %v217
  %v258 = vunpack.c.l.b16 %v218
  %v259 = vunpack.c.l.b16 %v219
  %v260 = vunpack.c.l.b16 %v220
  %v261 = vunpack.c.l.b16 %v221
  %v262 = vunpack.c.l.b16 %v222
  %v263 = vunpack.c.l.b16 %v223
  %v264 = vunpack.c.l.b16 %v224
  %v265 = vunpack.c.l.b16 %v225
  %v266 = vunpack.c.l.b16 %v226
  %v267 = vunpack.c.l.b16 %v227
  %v268 = vunpack.c.l.b16 %v228
  %v269 = vunpack.c.l.b16 %v229
  %v270 = vunpack.c.l.b16 %v230
  %v271 = vunpack.c.l.b16 %v231
  %v272 = vpack.c.b16 %v257, %v256
  %v273 = vpack.c.b16 %v259, %v258
  %v274 = vpack.c.b16 %v261, %v260
  %v275 = vpack.c.b16 %v263, %v262
  %v276 = vpack.c.b16 %v265, %v264
  %v277 = vpack.c.b16 %v267, %v266
  %v278 = vpack.c.b16 %v269, %v268
  %v279 = vpack.c.b16 %v271, %v270
  %288 = vmatprep.subr.bf16.mxu0 0
  %289 = vmatpush1.bf16.msra.mxu0 %v272
  %290 = vmatprep.subr.bf16.mxu0 0
  %291 = vmatpush1.bf16.msra.mxu0 %v273
  %292 = vmatprep.subr.bf16.mxu0 0
  %293 = vmatpush1.bf16.msra.mxu0 %v274
  %294 = vmatprep.subr.bf16.mxu0 0
  %295 = vmatpush1.bf16.msra.mxu0 %v275
  %296 = vmatprep.subr.bf16.mxu0 0
  %297 = vmatpush1.bf16.msra.mxu0 %v276
  %298 = vmatprep.subr.bf16.mxu0 0
  %299 = vmatpush1.bf16.msra.mxu0 %v277
  %300 = vmatprep.subr.bf16.mxu0 0
  %301 = vmatpush1.bf16.msra.mxu0 %v278
  %302 = vmatprep.subr.bf16.mxu0 0
  %303 = vmatpush1.bf16.msra.mxu0 %v279
  %304 = vmatprep.subr.bf16.mxu0 0
  %305 = vmatpush1.bf16.msra.mxu0 0
  %306 = vmatprep.subr.bf16.mxu0 0
  %307 = vmatpush1.bf16.msra.mxu0 0
  %308 = vmatprep.subr.bf16.mxu0 0
  %309 = vmatpush1.bf16.msra.mxu0 0
  %310 = vmatprep.subr.bf16.mxu0 0
  %311 = vmatpush1.bf16.msra.mxu0 0
  %312 = vmatprep.subr.bf16.mxu0 0
  %313 = vmatpush1.bf16.msra.mxu0 0
  %314 = vmatprep.subr.bf16.mxu0 0
  %315 = vmatpush1.bf16.msra.mxu0 0
  %316 = vmatprep.subr.bf16.mxu0 0
  %317 = vmatpush1.bf16.msra.mxu0 0
  %318 = vmatprep.subr.bf16.mxu0 0
  %319 = vmatpush1.bf16.msra.mxu0 0
  %320 = vmatprep.mubr.bf16.mxu0 0
  %321 = vmatmul.mubr.bf16.gmra.mrb[0].mxu0 %v86
  %v322 = vpop.f32.mrb[0].mxu0
  %v323 = vadd.f32 %v238, %v322
  %v324 = vpop.f32.mrb[0].mxu0
  %v325 = vpop.f32.mrb[0].mxu0
  %v326 = vadd.f32 %v238, %v325
  %v327 = vpop.f32.mrb[0].mxu0
  %328 = vmatprep.mubr.bf16.mxu0 0
  %329 = vmatmul.mubr.bf16.gmra.mrb[0].mxu0 %v87
  %v330 = vpop.f32.mrb[0].mxu0
  %v331 = vadd.f32 %v238, %v330
  %v332 = vpop.f32.mrb[0].mxu0
  %v333 = vpop.f32.mrb[0].mxu0
  %v334 = vadd.f32 %v238, %v333
  %v335 = vpop.f32.mrb[0].mxu0
  %336 = vmatprep.mubr.bf16.mxu0 0
  %337 = vmatmul.mubr.bf16.gmra.mrb[0].mxu0 %v88
  %v338 = vpop.f32.mrb[0].mxu0
  %v339 = vadd.f32 %v238, %v338
  %v340 = vpop.f32.mrb[0].mxu0
  %v341 = vpop.f32.mrb[0].mxu0
  %v342 = vadd.f32 %v238, %v341
  %v343 = vpop.f32.mrb[0].mxu0
  %344 = vmatprep.mubr.bf16.mxu0 0
  %345 = vmatmul.mubr.bf16.gmra.mrb[0].mxu0 %v89
  %v346 = vpop.f32.mrb[0].mxu0
  %v347 = vadd.f32 %v238, %v346
  %v348 = vpop.f32.mrb[0].mxu0
  %v349 = vpop.f32.mrb[0].mxu0
  %v350 = vadd.f32 %v238, %v349
  %v351 = vpop.f32.mrb[0].mxu0
  %352 = vdwg.mxu0
  %353 = vst [vmem:[#allocation3] sm:$0xff] %v323
  %354 = vst [vmem:[#allocation3 + $0x8] sm:$0xff] %v326
  %355 = vst [vmem:[#allocation3 + $0x10] sm:$0xff] %v331
  %356 = vst [vmem:[#allocation3 + $0x18] sm:$0xff] %v334
  %357 = vst [vmem:[#allocation3 + $0x20] sm:$0xff] %v339
  %358 = vst [vmem:[#allocation3 + $0x28] sm:$0xff] %v342
  %359 = vst [vmem:[#allocation3 + $0x30] sm:$0xff] %v347
  %360 = vst [vmem:[#allocation3 + $0x38] sm:$0xff] %v350
  %s361 = scalar_lea.vmem %s1, 128
  %v362 = vld [vmem:[%s361] sm:$0xf]
  %v363 = vld [vmem:[%s361 + $0x4] sm:$0xf]
  %v364 = vld [vmem:[%s361 + $0x8] sm:$0xf]
  %v365 = vld [vmem:[%s361 + $0xc] sm:$0xf]
  %v366 = vld [vmem:[%s361 + $0x10] sm:$0xf]
  %v367 = vld [vmem:[%s361 + $0x14] sm:$0xf]
  %v368 = vld [vmem:[%s361 + $0x18] sm:$0xf]
  %v369 = vld [vmem:[%s361 + $0x1c] sm:$0xf]
  %v370 = vld [vmem:[%s361 + $0x20] sm:$0xf]
  %v371 = vld [vmem:[%s361 + $0x24] sm:$0xf]
  %v372 = vld [vmem:[%s361 + $0x28] sm:$0xf]
  %v373 = vld [vmem:[%s361 + $0x2c] sm:$0xf]
  %v374 = vld [vmem:[%s361 + $0x30] sm:$0xf]
  %v375 = vld [vmem:[%s361 + $0x34] sm:$0xf]
  %v376 = vld [vmem:[%s361 + $0x38] sm:$0xf]
  %v377 = vld [vmem:[%s361 + $0x3c] sm:$0xf]
  %s378 = scalar_lea.vmem %s3, 2
  %v379 = vld [vmem:[%s378] sm:$0x1]
  %v381 = vlaneseq
  %v382 = vshrl.u32 %v381, 7
  %v383 = vsub.s32 0, %v382
  %v384 = vrot.slane %v379, %v383
  %v402 = vunpack.c.l.b16 %v362
  %v403 = vunpack.c.l.b16 %v363
  %v404 = vunpack.c.l.b16 %v364
  %v405 = vunpack.c.l.b16 %v365
  %v406 = vunpack.c.l.b16 %v366
  %v407 = vunpack.c.l.b16 %v367
  %v408 = vunpack.c.l.b16 %v368
  %v409 = vunpack.c.l.b16 %v369
  %v410 = vunpack.c.l.b16 %v370
  %v411 = vunpack.c.l.b16 %v371
  %v412 = vunpack.c.l.b16 %v372
  %v413 = vunpack.c.l.b16 %v373
  %v414 = vunpack.c.l.b16 %v374
  %v415 = vunpack.c.l.b16 %v375
  %v416 = vunpack.c.l.b16 %v376
  %v417 = vunpack.c.l.b16 %v377
  %v418 = vpack.c.b16 %v403, %v402
  %v419 = vpack.c.b16 %v405, %v404
  %v420 = vpack.c.b16 %v407, %v406
  %v421 = vpack.c.b16 %v409, %v408
  %v422 = vpack.c.b16 %v411, %v410
  %v423 = vpack.c.b16 %v413, %v412
  %v424 = vpack.c.b16 %v415, %v414
  %v425 = vpack.c.b16 %v417, %v416
  %434 = vmatprep.subr.bf16.mxu0 0
  %435 = vmatpush1.bf16.msra.mxu0 %v418
  %436 = vmatprep.subr.bf16.mxu0 0
  %437 = vmatpush1.bf16.msra.mxu0 %v419
  %438 = vmatprep.subr.bf16.mxu0 0
  %439 = vmatpush1.bf16.msra.mxu0 %v420
  %440 = vmatprep.subr.bf16.mxu0 0
  %441 = vmatpush1.bf16.msra.mxu0 %v421
  %442 = vmatprep.subr.bf16.mxu0 0
  %443 = vmatpush1.bf16.msra.mxu0 %v422
  %444 = vmatprep.subr.bf16.mxu0 0
  %445 = vmatpush1.bf16.msra.mxu0 %v423
  %446 = vmatprep.subr.bf16.mxu0 0
  %447 = vmatpush1.bf16.msra.mxu0 %v424
  %448 = vmatprep.subr.bf16.mxu0 0
  %449 = vmatpush1.bf16.msra.mxu0 %v425
  %450 = vmatprep.subr.bf16.mxu0 0
  %451 = vmatpush1.bf16.msra.mxu0 0
  %452 = vmatprep.subr.bf16.mxu0 0
  %453 = vmatpush1.bf16.msra.mxu0 0
  %454 = vmatprep.subr.bf16.mxu0 0
  %455 = vmatpush1.bf16.msra.mxu0 0
  %456 = vmatprep.subr.bf16.mxu0 0
  %457 = vmatpush1.bf16.msra.mxu0 0
  %458 = vmatprep.subr.bf16.mxu0 0
  %459 = vmatpush1.bf16.msra.mxu0 0
  %460 = vmatprep.subr.bf16.mxu0 0
  %461 = vmatpush1.bf16.msra.mxu0 0
  %462 = vmatprep.subr.bf16.mxu0 0
  %463 = vmatpush1.bf16.msra.mxu0 0
  %464 = vmatprep.subr.bf16.mxu0 0
  %465 = vmatpush1.bf16.msra.mxu0 0
  %466 = vmatprep.mubr.bf16.mxu0 0
  %467 = vmatmul.mubr.bf16.gmra.mrb[0].mxu0 %v86
  %v468 = vpop.f32.mrb[0].mxu0
  %v469 = vadd.f32 %v384, %v468
  %v470 = vpop.f32.mrb[0].mxu0
  %v471 = vpop.f32.mrb[0].mxu0
  %v472 = vadd.f32 %v384, %v471
  %v473 = vpop.f32.mrb[0].mxu0
  %474 = vmatprep.mubr.bf16.mxu0 0
  %475 = vmatmul.mubr.bf16.gmra.mrb[0].mxu0 %v87
  %v476 = vpop.f32.mrb[0].mxu0
  %v477 = vadd.f32 %v384, %v476
  %v478 = vpop.f32.mrb[0].mxu0
  %v479 = vpop.f32.mrb[0].mxu0
  %v480 = vadd.f32 %v384, %v479
  %v481 = vpop.f32.mrb[0].mxu0
  %482 = vmatprep.mubr.bf16.mxu0 0
  %483 = vmatmul.mubr.bf16.gmra.mrb[0].mxu0 %v88
  %v484 = vpop.f32.mrb[0].mxu0
  %v485 = vadd.f32 %v384, %v484
  %v486 = vpop.f32.mrb[0].mxu0
  %v487 = vpop.f32.mrb[0].mxu0
  %v488 = vadd.f32 %v384, %v487
  %v489 = vpop.f32.mrb[0].mxu0
  %490 = vmatprep.mubr.bf16.mxu0 0
  %491 = vmatmul.mubr.bf16.gmra.mrb[0].mxu0 %v89
  %v492 = vpop.f32.mrb[0].mxu0
  %v493 = vadd.f32 %v384, %v492
  %v494 = vpop.f32.mrb[0].mxu0
  %v495 = vpop.f32.mrb[0].mxu0
  %v496 = vadd.f32 %v384, %v495
  %v497 = vpop.f32.mrb[0].mxu0
  %498 = vdwg.mxu0
  %499 = vst [vmem:[#allocation4] sm:$0xff] %v469
  %500 = vst [vmem:[#allocation4 + $0x8] sm:$0xff] %v472
  %501 = vst [vmem:[#allocation4 + $0x10] sm:$0xff] %v477
  %502 = vst [vmem:[#allocation4 + $0x18] sm:$0xff] %v480
  %503 = vst [vmem:[#allocation4 + $0x20] sm:$0xff] %v485
  %504 = vst [vmem:[#allocation4 + $0x28] sm:$0xff] %v488
  %505 = vst [vmem:[#allocation4 + $0x30] sm:$0xff] %v493
  %506 = vst [vmem:[#allocation4 + $0x38] sm:$0xff] %v496
  %v507 = vld [vmem:[%s2] sm:$0xf]
  %v508 = vld [vmem:[%s2 + $0x4] sm:$0xf]
  %v509 = vld [vmem:[%s2 + $0x8] sm:$0xf]
  %v510 = vld [vmem:[%s2 + $0xc] sm:$0xf]
  %v511 = vld [vmem:[%s2 + $0x10] sm:$0xf]
  %v512 = vld [vmem:[%s2 + $0x14] sm:$0xf]
  %v513 = vld [vmem:[%s2 + $0x18] sm:$0xf]
  %v514 = vld [vmem:[%s2 + $0x1c] sm:$0xf]
  %v515 = vld [vmem:[%s2 + $0x20] sm:$0xf]
  %v516 = vld [vmem:[%s2 + $0x24] sm:$0xf]
  %v517 = vld [vmem:[%s2 + $0x28] sm:$0xf]
  %v518 = vld [vmem:[%s2 + $0x2c] sm:$0xf]
  %v519 = vld [vmem:[%s2 + $0x30] sm:$0xf]
  %v520 = vld [vmem:[%s2 + $0x34] sm:$0xf]
  %v521 = vld [vmem:[%s2 + $0x38] sm:$0xf]
  %v522 = vld [vmem:[%s2 + $0x3c] sm:$0xf]
  %s523 = scalar_lea.vmem %s2, 64
  %v524 = vld [vmem:[%s523] sm:$0xf]
  %v525 = vld [vmem:[%s523 + $0x4] sm:$0xf]
  %v526 = vld [vmem:[%s523 + $0x8] sm:$0xf]
  %v527 = vld [vmem:[%s523 + $0xc] sm:$0xf]
  %v528 = vld [vmem:[%s523 + $0x10] sm:$0xf]
  %v529 = vld [vmem:[%s523 + $0x14] sm:$0xf]
  %v530 = vld [vmem:[%s523 + $0x18] sm:$0xf]
  %v531 = vld [vmem:[%s523 + $0x1c] sm:$0xf]
  %v532 = vld [vmem:[%s523 + $0x20] sm:$0xf]
  %v533 = vld [vmem:[%s523 + $0x24] sm:$0xf]
  %v534 = vld [vmem:[%s523 + $0x28] sm:$0xf]
  %v535 = vld [vmem:[%s523 + $0x2c] sm:$0xf]
  %v536 = vld [vmem:[%s523 + $0x30] sm:$0xf]
  %v537 = vld [vmem:[%s523 + $0x34] sm:$0xf]
  %v538 = vld [vmem:[%s523 + $0x38] sm:$0xf]
  %v539 = vld [vmem:[%s523 + $0x3c] sm:$0xf]
  %s540 = scalar_lea.vmem %s2, 128
  %v541 = vld [vmem:[%s540] sm:$0xf]
  %v542 = vld [vmem:[%s540 + $0x4] sm:$0xf]
  %v543 = vld [vmem:[%s540 + $0x8] sm:$0xf]
  %v544 = vld [vmem:[%s540 + $0xc] sm:$0xf]
  %v545 = vld [vmem:[%s540 + $0x10] sm:$0xf]
  %v546 = vld [vmem:[%s540 + $0x14] sm:$0xf]
  %v547 = vld [vmem:[%s540 + $0x18] sm:$0xf]
  %v548 = vld [vmem:[%s540 + $0x1c] sm:$0xf]
  %v549 = vld [vmem:[%s540 + $0x20] sm:$0xf]
  %v550 = vld [vmem:[%s540 + $0x24] sm:$0xf]
  %v551 = vld [vmem:[%s540 + $0x28] sm:$0xf]
  %v552 = vld [vmem:[%s540 + $0x2c] sm:$0xf]
  %v553 = vld [vmem:[%s540 + $0x30] sm:$0xf]
  %v554 = vld [vmem:[%s540 + $0x34] sm:$0xf]
  %v555 = vld [vmem:[%s540 + $0x38] sm:$0xf]
  %v556 = vld [vmem:[%s540 + $0x3c] sm:$0xf]
  %v557 = vld [vmem:[%s4] sm:$0x1]
  %558 = vst [vmem:[#allocation6] sm:$0xff] 0.0
  %v559 = vld [vmem:[#allocation6] sm:$0xff]
  %v560 = vpack.c.bf16 %v559, %v559
  %v577 = vunpack.c.l.b16 %v507
  %v578 = vunpack.c.l.b16 %v508
  %v579 = vunpack.c.l.b16 %v509
  %v580 = vunpack.c.l.b16 %v510
  %v581 = vunpack.c.l.b16 %v511
  %v582 = vunpack.c.l.b16 %v512
  %v583 = vunpack.c.l.b16 %v513
  %v584 = vunpack.c.l.b16 %v514
  %v585 = vunpack.c.l.b16 %v515
  %v586 = vunpack.c.l.b16 %v516
  %v587 = vunpack.c.l.b16 %v517
  %v588 = vunpack.c.l.b16 %v518
  %v589 = vunpack.c.l.b16 %v519
  %v590 = vunpack.c.l.b16 %v520
  %v591 = vunpack.c.l.b16 %v521
  %v592 = vunpack.c.l.b16 %v522
  %v593 = vpack.c.b16 %v578, %v577
  %v594 = vpack.c.b16 %v580, %v579
  %v595 = vpack.c.b16 %v582, %v581
  %v596 = vpack.c.b16 %v584, %v583
  %v597 = vpack.c.b16 %v586, %v585
  %v598 = vpack.c.b16 %v588, %v587
  %v599 = vpack.c.b16 %v590, %v589
  %v600 = vpack.c.b16 %v592, %v591
  %609 = vmatprep.subr.bf16.mxu0 0
  %610 = vmatpush1.bf16.msra.mxu0 %v593
  %611 = vmatprep.subr.bf16.mxu0 0
  %612 = vmatpush1.bf16.msra.mxu0 %v594
  %613 = vmatprep.subr.bf16.mxu0 0
  %614 = vmatpush1.bf16.msra.mxu0 %v595
  %615 = vmatprep.subr.bf16.mxu0 0
  %616 = vmatpush1.bf16.msra.mxu0 %v596
  %617 = vmatprep.subr.bf16.mxu0 0
  %618 = vmatpush1.bf16.msra.mxu0 %v597
  %619 = vmatprep.subr.bf16.mxu0 0
  %620 = vmatpush1.bf16.msra.mxu0 %v598
  %621 = vmatprep.subr.bf16.mxu0 0
  %622 = vmatpush1.bf16.msra.mxu0 %v599
  %623 = vmatprep.subr.bf16.mxu0 0
  %624 = vmatpush1.bf16.msra.mxu0 %v600
  %625 = vmatprep.subr.bf16.mxu0 0
  %626 = vmatpush1.bf16.msra.mxu0 0
  %627 = vmatprep.subr.bf16.mxu0 0
  %628 = vmatpush1.bf16.msra.mxu0 0
  %629 = vmatprep.subr.bf16.mxu0 0
  %630 = vmatpush1.bf16.msra.mxu0 0
  %631 = vmatprep.subr.bf16.mxu0 0
  %632 = vmatpush1.bf16.msra.mxu0 0
  %633 = vmatprep.subr.bf16.mxu0 0
  %634 = vmatpush1.bf16.msra.mxu0 0
  %635 = vmatprep.subr.bf16.mxu0 0
  %636 = vmatpush1.bf16.msra.mxu0 0
  %637 = vmatprep.subr.bf16.mxu0 0
  %638 = vmatpush1.bf16.msra.mxu0 0
  %639 = vmatprep.subr.bf16.mxu0 0
  %640 = vmatpush1.bf16.msra.mxu0 0
  %641 = vmatprep.mubr.bf16.mxu0 0
  %642 = vmatmul.mubr.bf16.gmra.mrb[0].mxu0 %v560
  %v643 = vpop.f32.mrb[0].mxu0
  %v644 = vadd.f32 0.0, %v643
  %v645 = vpop.f32.mrb[0].mxu0
  %v646 = vpop.f32.mrb[0].mxu0
  %v647 = vpop.f32.mrb[0].mxu0
  %648 = vdwg.mxu0
  %v665 = vunpack.c.l.b16 %v524
  %v666 = vunpack.c.l.b16 %v525
  %v667 = vunpack.c.l.b16 %v526
  %v668 = vunpack.c.l.b16 %v527
  %v669 = vunpack.c.l.b16 %v528
  %v670 = vunpack.c.l.b16 %v529
  %v671 = vunpack.c.l.b16 %v530
  %v672 = vunpack.c.l.b16 %v531
  %v673 = vunpack.c.l.b16 %v532
  %v674 = vunpack.c.l.b16 %v533
  %v675 = vunpack.c.l.b16 %v534
  %v676 = vunpack.c.l.b16 %v535
  %v677 = vunpack.c.l.b16 %v536
  %v678 = vunpack.c.l.b16 %v537
  %v679 = vunpack.c.l.b16 %v538
  %v680 = vunpack.c.l.b16 %v539
  %v681 = vpack.c.b16 %v666, %v665
  %v682 = vpack.c.b16 %v668, %v667
  %v683 = vpack.c.b16 %v670, %v669
  %v684 = vpack.c.b16 %v672, %v671
  %v685 = vpack.c.b16 %v674, %v673
  %v686 = vpack.c.b16 %v676, %v675
  %v687 = vpack.c.b16 %v678, %v677
  %v688 = vpack.c.b16 %v680, %v679
  %697 = vmatprep.subr.bf16.mxu0 0
  %698 = vmatpush1.bf16.msra.mxu0 %v681
  %699 = vmatprep.subr.bf16.mxu0 0
  %700 = vmatpush1.bf16.msra.mxu0 %v682
  %701 = vmatprep.subr.bf16.mxu0 0
  %702 = vmatpush1.bf16.msra.mxu0 %v683
  %703 = vmatprep.subr.bf16.mxu0 0
  %704 = vmatpush1.bf16.msra.mxu0 %v684
  %705 = vmatprep.subr.bf16.mxu0 0
  %706 = vmatpush1.bf16.msra.mxu0 %v685
  %707 = vmatprep.subr.bf16.mxu0 0
  %708 = vmatpush1.bf16.msra.mxu0 %v686
  %709 = vmatprep.subr.bf16.mxu0 0
  %710 = vmatpush1.bf16.msra.mxu0 %v687
  %711 = vmatprep.subr.bf16.mxu0 0
  %712 = vmatpush1.bf16.msra.mxu0 %v688
  %713 = vmatprep.subr.bf16.mxu0 0
  %714 = vmatpush1.bf16.msra.mxu0 0
  %715 = vmatprep.subr.bf16.mxu0 0
  %716 = vmatpush1.bf16.msra.mxu0 0
  %717 = vmatprep.subr.bf16.mxu0 0
  %718 = vmatpush1.bf16.msra.mxu0 0
  %719 = vmatprep.subr.bf16.mxu0 0
  %720 = vmatpush1.bf16.msra.mxu0 0
  %721 = vmatprep.subr.bf16.mxu0 0
  %722 = vmatpush1.bf16.msra.mxu0 0
  %723 = vmatprep.subr.bf16.mxu0 0
  %724 = vmatpush1.bf16.msra.mxu0 0
  %725 = vmatprep.subr.bf16.mxu0 0
  %726 = vmatpush1.bf16.msra.mxu0 0
  %727 = vmatprep.subr.bf16.mxu0 0
  %728 = vmatpush1.bf16.msra.mxu0 0
  %729 = vmatprep.mubr.bf16.mxu0 0
  %730 = vmatmul.mubr.bf16.gmra.mrb[0].mxu0 %v560
  %v731 = vpop.f32.mrb[0].mxu0
  %v732 = vadd.f32 0.0, %v731
  %v733 = vpop.f32.mrb[0].mxu0
  %v734 = vpop.f32.mrb[0].mxu0
  %v735 = vpop.f32.mrb[0].mxu0
  %736 = vdwg.mxu0
  %v738 = vlaneseq
  %v739 = vshrl.u32 %v738, 7
  %v740 = vsub.s32 0, %v739
  %v741 = vrot.slane %v557, %v740
  %v759 = vunpack.c.l.b16 %v541
  %v760 = vunpack.c.l.b16 %v542
  %v761 = vunpack.c.l.b16 %v543
  %v762 = vunpack.c.l.b16 %v544
  %v763 = vunpack.c.l.b16 %v545
  %v764 = vunpack.c.l.b16 %v546
  %v765 = vunpack.c.l.b16 %v547
  %v766 = vunpack.c.l.b16 %v548
  %v767 = vunpack.c.l.b16 %v549
  %v768 = vunpack.c.l.b16 %v550
  %v769 = vunpack.c.l.b16 %v551
  %v770 = vunpack.c.l.b16 %v552
  %v771 = vunpack.c.l.b16 %v553
  %v772 = vunpack.c.l.b16 %v554
  %v773 = vunpack.c.l.b16 %v555
  %v774 = vunpack.c.l.b16 %v556
  %v775 = vpack.c.b16 %v760, %v759
  %v776 = vpack.c.b16 %v762, %v761
  %v777 = vpack.c.b16 %v764, %v763
  %v778 = vpack.c.b16 %v766, %v765
  %v779 = vpack.c.b16 %v768, %v767
  %v780 = vpack.c.b16 %v770, %v769
  %v781 = vpack.c.b16 %v772, %v771
  %v782 = vpack.c.b16 %v774, %v773
  %791 = vmatprep.subr.bf16.mxu0 0
  %792 = vmatpush1.bf16.msra.mxu0 %v775
  %793 = vmatprep.subr.bf16.mxu0 0
  %794 = vmatpush1.bf16.msra.mxu0 %v776
  %795 = vmatprep.subr.bf16.mxu0 0
  %796 = vmatpush1.bf16.msra.mxu0 %v777
  %797 = vmatprep.subr.bf16.mxu0 0
  %798 = vmatpush1.bf16.msra.mxu0 %v778
  %799 = vmatprep.subr.bf16.mxu0 0
  %800 = vmatpush1.bf16.msra.mxu0 %v779
  %801 = vmatprep.subr.bf16.mxu0 0
  %802 = vmatpush1.bf16.msra.mxu0 %v780
  %803 = vmatprep.subr.bf16.mxu0 0
  %804 = vmatpush1.bf16.msra.mxu0 %v781
  %805 = vmatprep.subr.bf16.mxu0 0
  %806 = vmatpush1.bf16.msra.mxu0 %v782
  %807 = vmatprep.subr.bf16.mxu0 0
  %808 = vmatpush1.bf16.msra.mxu0 0
  %809 = vmatprep.subr.bf16.mxu0 0
  %810 = vmatpush1.bf16.msra.mxu0 0
  %811 = vmatprep.subr.bf16.mxu0 0
  %812 = vmatpush1.bf16.msra.mxu0 0
  %813 = vmatprep.subr.bf16.mxu0 0
  %814 = vmatpush1.bf16.msra.mxu0 0
  %815 = vmatprep.subr.bf16.mxu0 0
  %816 = vmatpush1.bf16.msra.mxu0 0
  %817 = vmatprep.subr.bf16.mxu0 0
  %818 = vmatpush1.bf16.msra.mxu0 0
  %819 = vmatprep.subr.bf16.mxu0 0
  %820 = vmatpush1.bf16.msra.mxu0 0
  %821 = vmatprep.subr.bf16.mxu0 0
  %822 = vmatpush1.bf16.msra.mxu0 0
  %823 = vmatprep.mubr.bf16.mxu0 0
  %824 = vmatmul.mubr.bf16.gmra.mrb[0].mxu0 %v560
  %v825 = vpop.f32.mrb[0].mxu0
  %v826 = vadd.f32 %v741, %v825
  %v827 = vpop.f32.mrb[0].mxu0
  %v828 = vpop.f32.mrb[0].mxu0
  %v829 = vpop.f32.mrb[0].mxu0
  %830 = vdwg.mxu0
  %v831 = vld [vmem:[#allocation2] sm:$0xff]
  %v832 = vadd.f32 %v831, %v644
  %v833 = vxor.u32 %v832, 2147483648
  %v834 = vmul.f32 %v833, 1.442695
  %v835 = vpow.pop %v834
  %v836 = vadd.f32 %v835, 1.0
  %v837 = vrcp.pop %v836
  %v838 = vmul.f32 1.0, %v837
  %v839 = vld [vmem:[#allocation3] sm:$0xff]
  %v840 = vadd.f32 %v839, %v732
  %v841 = vxor.u32 %v840, 2147483648
  %v842 = vmul.f32 %v841, 1.442695
  %v843 = vpow.pop %v842
  %v844 = vadd.f32 %v843, 1.0
  %v845 = vrcp.pop %v844
  %v846 = vmul.f32 1.0, %v845
  %v847 = vld [vmem:[#allocation4] sm:$0xff]
  %v848 = vmul.f32 %v838, %v826
  %v849 = vadd.f32 %v847, %v848
  %v850 = vtanh.pop %v849
  %v851 = vsub.f32 1.0, %v846
  %v852 = vmul.f32 %v851, %v850
  %v853 = vmul.f32 %v846, %v559
  %v854 = vadd.f32 %v852, %v853
  %855 = vst [vmem:[#allocation6] sm:$0xff] %v854
  %856 = vst [vmem:[#allocation5] sm:$0xff] %v854
  %v857 = vld [vmem:[#allocation6] sm:$0xff]
  %v858 = vpack.c.bf16 %v857, %v857
  %859 = vmatprep.subr.bf16.mxu0 0
  %860 = vmatpush1.bf16.msra.mxu0 %v593
  %861 = vmatprep.subr.bf16.mxu0 0
  %862 = vmatpush1.bf16.msra.mxu0 %v594
  %863 = vmatprep.subr.bf16.mxu0 0
  %864 = vmatpush1.bf16.msra.mxu0 %v595
  %865 = vmatprep.subr.bf16.mxu0 0
  %866 = vmatpush1.bf16.msra.mxu0 %v596
  %867 = vmatprep.subr.bf16.mxu0 0
  %868 = vmatpush1.bf16.msra.mxu0 %v597
  %869 = vmatprep.subr.bf16.mxu0 0
  %870 = vmatpush1.bf16.msra.mxu0 %v598
  %871 = vmatprep.subr.bf16.mxu0 0
  %872 = vmatpush1.bf16.msra.mxu0 %v599
  %873 = vmatprep.subr.bf16.mxu0 0
  %874 = vmatpush1.bf16.msra.mxu0 %v600
  %875 = vmatprep.subr.bf16.mxu0 0
  %876 = vmatpush1.bf16.msra.mxu0 0
  %877 = vmatprep.subr.bf16.mxu0 0
  %878 = vmatpush1.bf16.msra.mxu0 0
  %879 = vmatprep.subr.bf16.mxu0 0
  %880 = vmatpush1.bf16.msra.mxu0 0
  %881 = vmatprep.subr.bf16.mxu0 0
  %882 = vmatpush1.bf16.msra.mxu0 0
  %883 = vmatprep.subr.bf16.mxu0 0
  %884 = vmatpush1.bf16.msra.mxu0 0
  %885 = vmatprep.subr.bf16.mxu0 0
  %886 = vmatpush1.bf16.msra.mxu0 0
  %887 = vmatprep.subr.bf16.mxu0 0
  %888 = vmatpush1.bf16.msra.mxu0 0
  %889 = vmatprep.subr.bf16.mxu0 0
  %890 = vmatpush1.bf16.msra.mxu0 0
  %891 = vmatprep.mubr.bf16.mxu0 0
  %892 = vmatmul.mubr.bf16.gmra.mrb[0].mxu0 %v858
  %v893 = vpop.f32.mrb[0].mxu0
  %v894 = vadd.f32 0.0, %v893
  %v895 = vpop.f32.mrb[0].mxu0
  %v896 = vpop.f32.mrb[0].mxu0
  %v897 = vpop.f32.mrb[0].mxu0
  %898 = vdwg.mxu0
  %899 = vmatprep.subr.bf16.mxu0 0
  %900 = vmatpush1.bf16.msra.mxu0 %v681
  %901 = vmatprep.subr.bf16.mxu0 0
  %902 = vmatpush1.bf16.msra.mxu0 %v682
  %903 = vmatprep.subr.bf16.mxu0 0
  %904 = vmatpush1.bf16.msra.mxu0 %v683
  %905 = vmatprep.subr.bf16.mxu0 0
  %906 = vmatpush1.bf16.msra.mxu0 %v684
  %907 = vmatprep.subr.bf16.mxu0 0
  %908 = vmatpush1.bf16.msra.mxu0 %v685
  %909 = vmatprep.subr.bf16.mxu0 0
  %910 = vmatpush1.bf16.msra.mxu0 %v686
  %911 = vmatprep.subr.bf16.mxu0 0
  %912 = vmatpush1.bf16.msra.mxu0 %v687
  %913 = vmatprep.subr.bf16.mxu0 0
  %914 = vmatpush1.bf16.msra.mxu0 %v688
  %915 = vmatprep.subr.bf16.mxu0 0
  %916 = vmatpush1.bf16.msra.mxu0 0
  %917 = vmatprep.subr.bf16.mxu0 0
  %918 = vmatpush1.bf16.msra.mxu0 0
  %919 = vmatprep.subr.bf16.mxu0 0
  %920 = vmatpush1.bf16.msra.mxu0 0
  %921 = vmatprep.subr.bf16.mxu0 0
  %922 = vmatpush1.bf16.msra.mxu0 0
  %923 = vmatprep.subr.bf16.mxu0 0
  %924 = vmatpush1.bf16.msra.mxu0 0
  %925 = vmatprep.subr.bf16.mxu0 0
  %926 = vmatpush1.bf16.msra.mxu0 0
  %927 = vmatprep.subr.bf16.mxu0 0
  %928 = vmatpush1.bf16.msra.mxu0 0
  %929 = vmatprep.subr.bf16.mxu0 0
  %930 = vmatpush1.bf16.msra.mxu0 0
  %931 = vmatprep.mubr.bf16.mxu0 0
  %932 = vmatmul.mubr.bf16.gmra.mrb[0].mxu0 %v858
  %v933 = vpop.f32.mrb[0].mxu0
  %v934 = vadd.f32 0.0, %v933
  %v935 = vpop.f32.mrb[0].mxu0
  %v936 = vpop.f32.mrb[0].mxu0
  %v937 = vpop.f32.mrb[0].mxu0
  %938 = vdwg.mxu0
  %939 = vmatprep.subr.bf16.mxu0 0
  %940 = vmatpush1.bf16.msra.mxu0 %v775
  %941 = vmatprep.subr.bf16.mxu0 0
  %942 = vmatpush1.bf16.msra.mxu0 %v776
  %943 = vmatprep.subr.bf16.mxu0 0
  %944 = vmatpush1.bf16.msra.mxu0 %v777
  %945 = vmatprep.subr.bf16.mxu0 0
  %946 = vmatpush1.bf16.msra.mxu0 %v778
  %947 = vmatprep.subr.bf16.mxu0 0
  %948 = vmatpush1.bf16.msra.mxu0 %v779
  %949 = vmatprep.subr.bf16.mxu0 0
  %950 = vmatpush1.bf16.msra.mxu0 %v780
  %951 = vmatprep.subr.bf16.mxu0 0
  %952 = vmatpush1.bf16.msra.mxu0 %v781
  %953 = vmatprep.subr.bf16.mxu0 0
  %954 = vmatpush1.bf16.msra.mxu0 %v782
  %955 = vmatprep.subr.bf16.mxu0 0
  %956 = vmatpush1.bf16.msra.mxu0 0
  %957 = vmatprep.subr.bf16.mxu0 0
  %958 = vmatpush1.bf16.msra.mxu0 0
  %959 = vmatprep.subr.bf16.mxu0 0
  %960 = vmatpush1.bf16.msra.mxu0 0
  %961 = vmatprep.subr.bf16.mxu0 0
  %962 = vmatpush1.bf16.msra.mxu0 0
  %963 = vmatprep.subr.bf16.mxu0 0
  %964 = vmatpush1.bf16.msra.mxu0 0
  %965 = vmatprep.subr.bf16.mxu0 0
  %966 = vmatpush1.bf16.msra.mxu0 0
  %967 = vmatprep.subr.bf16.mxu0 0
  %968 = vmatpush1.bf16.msra.mxu0 0
  %969 = vmatprep.subr.bf16.mxu0 0
  %970 = vmatpush1.bf16.msra.mxu0 0
  %971 = vmatprep.mubr.bf16.mxu0 0
  %972 = vmatmul.mubr.bf16.gmra.mrb[0].mxu0 %v858
  %v973 = vpop.f32.mrb[0].mxu0
  %v974 = vadd.f32 %v741, %v973
  %v975 = vpop.f32.mrb[0].mxu0
  %v976 = vpop.f32.mrb[0].mxu0
  %v977 = vpop.f32.mrb[0].mxu0
  %978 = vdwg.mxu0
  %s979 = scalar_lea.vmem [#allocation2], 8
  %v980 = vld [vmem:[%s979] sm:$0xff]
  %v981 = vadd.f32 %v980, %v894
  %v982 = vxor.u32 %v981, 2147483648
  %v983 = vmul.f32 %v982, 1.442695
  %v984 = vpow.pop %v983
  %v985 = vadd.f32 %v984, 1.0
  %v986 = vrcp.pop %v985
  %v987 = vmul.f32 1.0, %v986
  %s988 = scalar_lea.vmem [#allocation3], 8
  %v989 = vld [vmem:[%s988] sm:$0xff]
  %v990 = vadd.f32 %v989, %v934
  %v991 = vxor.u32 %v990, 2147483648
  %v992 = vmul.f32 %v991, 1.442695
  %v993 = vpow.pop %v992
  %v994 = vadd.f32 %v993, 1.0
  %v995 = vrcp.pop %v994
  %v996 = vmul.f32 1.0, %v995
  %s997 = scalar_lea.vmem [#allocation4], 8
  %v998 = vld [vmem:[%s997] sm:$0xff]
  %v999 = vmul.f32 %v987, %v974
  %v1000 = vadd.f32 %v998, %v999
  %v1001 = vtanh.pop %v1000
  %v1002 = vsub.f32 1.0, %v996
  %v1003 = vmul.f32 %v1002, %v1001
  %v1004 = vmul.f32 %v996, %v857
  %v1005 = vadd.f32 %v1003, %v1004
  %1006 = vst [vmem:[#allocation6] sm:$0xff] %v1005
  %s1007 = scalar_lea.vmem [#allocation5], 8
  %1008 = vst [vmem:[%s1007] sm:$0xff] %v1005
  %v1009 = vld [vmem:[#allocation6] sm:$0xff]
  %v1010 = vpack.c.bf16 %v1009, %v1009
  %1011 = vmatprep.subr.bf16.mxu0 0
  %1012 = vmatpush1.bf16.msra.mxu0 %v593
  %1013 = vmatprep.subr.bf16.mxu0 0
  %1014 = vmatpush1.bf16.msra.mxu0 %v594
  %1015 = vmatprep.subr.bf16.mxu0 0
  %1016 = vmatpush1.bf16.msra.mxu0 %v595
  %1017 = vmatprep.subr.bf16.mxu0 0
  %1018 = vmatpush1.bf16.msra.mxu0 %v596
  %1019 = vmatprep.subr.bf16.mxu0 0
  %1020 = vmatpush1.bf16.msra.mxu0 %v597
  %1021 = vmatprep.subr.bf16.mxu0 0
  %1022 = vmatpush1.bf16.msra.mxu0 %v598
  %1023 = vmatprep.subr.bf16.mxu0 0
  %1024 = vmatpush1.bf16.msra.mxu0 %v599
  %1025 = vmatprep.subr.bf16.mxu0 0
  %1026 = vmatpush1.bf16.msra.mxu0 %v600
  %1027 = vmatprep.subr.bf16.mxu0 0
  %1028 = vmatpush1.bf16.msra.mxu0 0
  %1029 = vmatprep.subr.bf16.mxu0 0
  %1030 = vmatpush1.bf16.msra.mxu0 0
  %1031 = vmatprep.subr.bf16.mxu0 0
  %1032 = vmatpush1.bf16.msra.mxu0 0
  %1033 = vmatprep.subr.bf16.mxu0 0
  %1034 = vmatpush1.bf16.msra.mxu0 0
  %1035 = vmatprep.subr.bf16.mxu0 0
  %1036 = vmatpush1.bf16.msra.mxu0 0
  %1037 = vmatprep.subr.bf16.mxu0 0
  %1038 = vmatpush1.bf16.msra.mxu0 0
  %1039 = vmatprep.subr.bf16.mxu0 0
  %1040 = vmatpush1.bf16.msra.mxu0 0
  %1041 = vmatprep.subr.bf16.mxu0 0
  %1042 = vmatpush1.bf16.msra.mxu0 0
  %1043 = vmatprep.mubr.bf16.mxu0 0
  %1044 = vmatmul.mubr.bf16.gmra.mrb[0].mxu0 %v1010
  %v1045 = vpop.f32.mrb[0].mxu0
  %v1046 = vadd.f32 0.0, %v1045
  %v1047 = vpop.f32.mrb[0].mxu0
  %v1048 = vpop.f32.mrb[0].mxu0
  %v1049 = vpop.f32.mrb[0].mxu0
  %1050 = vdwg.mxu0
  %1051 = vmatprep.subr.bf16.mxu0 0
  %1052 = vmatpush1.bf16.msra.mxu0 %v681
  %1053 = vmatprep.subr.bf16.mxu0 0
  %1054 = vmatpush1.bf16.msra.mxu0 %v682
  %1055 = vmatprep.subr.bf16.mxu0 0
  %1056 = vmatpush1.bf16.msra.mxu0 %v683
  %1057 = vmatprep.subr.bf16.mxu0 0
  %1058 = vmatpush1.bf16.msra.mxu0 %v684
  %1059 = vmatprep.subr.bf16.mxu0 0
  %1060 = vmatpush1.bf16.msra.mxu0 %v685
  %1061 = vmatprep.subr.bf16.mxu0 0
  %1062 = vmatpush1.bf16.msra.mxu0 %v686
  %1063 = vmatprep.subr.bf16.mxu0 0
  %1064 = vmatpush1.bf16.msra.mxu0 %v687
  %1065 = vmatprep.subr.bf16.mxu0 0
  %1066 = vmatpush1.bf16.msra.mxu0 %v688
  %1067 = vmatprep.subr.bf16.mxu0 0
  %1068 = vmatpush1.bf16.msra.mxu0 0
  %1069 = vmatprep.subr.bf16.mxu0 0
  %1070 = vmatpush1.bf16.msra.mxu0 0
  %1071 = vmatprep.subr.bf16.mxu0 0
  %1072 = vmatpush1.bf16.msra.mxu0 0
  %1073 = vmatprep.subr.bf16.mxu0 0
  %1074 = vmatpush1.bf16.msra.mxu0 0
  %1075 = vmatprep.subr.bf16.mxu0 0
  %1076 = vmatpush1.bf16.msra.mxu0 0
  %1077 = vmatprep.subr.bf16.mxu0 0
  %1078 = vmatpush1.bf16.msra.mxu0 0
  %1079 = vmatprep.subr.bf16.mxu0 0
  %1080 = vmatpush1.bf16.msra.mxu0 0
  %1081 = vmatprep.subr.bf16.mxu0 0
  %1082 = vmatpush1.bf16.msra.mxu0 0
  %1083 = vmatprep.mubr.bf16.mxu0 0
  %1084 = vmatmul.mubr.bf16.gmra.mrb[0].mxu0 %v1010
  %v1085 = vpop.f32.mrb[0].mxu0
  %v1086 = vadd.f32 0.0, %v1085
  %v1087 = vpop.f32.mrb[0].mxu0
  %v1088 = vpop.f32.mrb[0].mxu0
  %v1089 = vpop.f32.mrb[0].mxu0
  %1090 = vdwg.mxu0
  %1091 = vmatprep.subr.bf16.mxu0 0
  %1092 = vmatpush1.bf16.msra.mxu0 %v775
  %1093 = vmatprep.subr.bf16.mxu0 0
  %1094 = vmatpush1.bf16.msra.mxu0 %v776
  %1095 = vmatprep.subr.bf16.mxu0 0
  %1096 = vmatpush1.bf16.msra.mxu0 %v777
  %1097 = vmatprep.subr.bf16.mxu0 0
  %1098 = vmatpush1.bf16.msra.mxu0 %v778
  %1099 = vmatprep.subr.bf16.mxu0 0
  %1100 = vmatpush1.bf16.msra.mxu0 %v779
  %1101 = vmatprep.subr.bf16.mxu0 0
  %1102 = vmatpush1.bf16.msra.mxu0 %v780
  %1103 = vmatprep.subr.bf16.mxu0 0
  %1104 = vmatpush1.bf16.msra.mxu0 %v781
  %1105 = vmatprep.subr.bf16.mxu0 0
  %1106 = vmatpush1.bf16.msra.mxu0 %v782
  %1107 = vmatprep.subr.bf16.mxu0 0
  %1108 = vmatpush1.bf16.msra.mxu0 0
  %1109 = vmatprep.subr.bf16.mxu0 0
  %1110 = vmatpush1.bf16.msra.mxu0 0
  %1111 = vmatprep.subr.bf16.mxu0 0
  %1112 = vmatpush1.bf16.msra.mxu0 0
  %1113 = vmatprep.subr.bf16.mxu0 0
  %1114 = vmatpush1.bf16.msra.mxu0 0
  %1115 = vmatprep.subr.bf16.mxu0 0
  %1116 = vmatpush1.bf16.msra.mxu0 0
  %1117 = vmatprep.subr.bf16.mxu0 0
  %1118 = vmatpush1.bf16.msra.mxu0 0
  %1119 = vmatprep.subr.bf16.mxu0 0
  %1120 = vmatpush1.bf16.msra.mxu0 0
  %1121 = vmatprep.subr.bf16.mxu0 0
  %1122 = vmatpush1.bf16.msra.mxu0 0
  %1123 = vmatprep.mubr.bf16.mxu0 0
  %1124 = vmatmul.mubr.bf16.gmra.mrb[0].mxu0 %v1010
  %v1125 = vpop.f32.mrb[0].mxu0
  %v1126 = vadd.f32 %v741, %v1125
  %v1127 = vpop.f32.mrb[0].mxu0
  %v1128 = vpop.f32.mrb[0].mxu0
  %v1129 = vpop.f32.mrb[0].mxu0
  %1130 = vdwg.mxu0
  %s1131 = scalar_lea.vmem [#allocation2], 16
  %v1132 = vld [vmem:[%s1131] sm:$0xff]
  %v1133 = vadd.f32 %v1132, %v1046
  %v1134 = vxor.u32 %v1133, 2147483648
  %v1135 = vmul.f32 %v1134, 1.442695
  %v1136 = vpow.pop %v1135
  %v1137 = vadd.f32 %v1136, 1.0
  %v1138 = vrcp.pop %v1137
  %v1139 = vmul.f32 1.0, %v1138
  %s1140 = scalar_lea.vmem [#allocation3], 16
  %v1141 = vld [vmem:[%s1140] sm:$0xff]
  %v1142 = vadd.f32 %v1141, %v1086
  %v1143 = vxor.u32 %v1142, 2147483648
  %v1144 = vmul.f32 %v1143, 1.442695
  %v1145 = vpow.pop %v1144
  %v1146 = vadd.f32 %v1145, 1.0
  %v1147 = vrcp.pop %v1146
  %v1148 = vmul.f32 1.0, %v1147
  %s1149 = scalar_lea.vmem [#allocation4], 16
  %v1150 = vld [vmem:[%s1149] sm:$0xff]
  %v1151 = vmul.f32 %v1139, %v1126
  %v1152 = vadd.f32 %v1150, %v1151
  %v1153 = vtanh.pop %v1152
  %v1154 = vsub.f32 1.0, %v1148
  %v1155 = vmul.f32 %v1154, %v1153
  %v1156 = vmul.f32 %v1148, %v1009
  %v1157 = vadd.f32 %v1155, %v1156
  %1158 = vst [vmem:[#allocation6] sm:$0xff] %v1157
  %s1159 = scalar_lea.vmem [#allocation5], 16
  %1160 = vst [vmem:[%s1159] sm:$0xff] %v1157
  %v1161 = vld [vmem:[#allocation6] sm:$0xff]
  %v1162 = vpack.c.bf16 %v1161, %v1161
  %1163 = vmatprep.subr.bf16.mxu0 0
  %1164 = vmatpush1.bf16.msra.mxu0 %v593
  %1165 = vmatprep.subr.bf16.mxu0 0
  %1166 = vmatpush1.bf16.msra.mxu0 %v594
  %1167 = vmatprep.subr.bf16.mxu0 0
  %1168 = vmatpush1.bf16.msra.mxu0 %v595
  %1169 = vmatprep.subr.bf16.mxu0 0
  %1170 = vmatpush1.bf16.msra.mxu0 %v596
  %1171 = vmatprep.subr.bf16.mxu0 0
  %1172 = vmatpush1.bf16.msra.mxu0 %v597
  %1173 = vmatprep.subr.bf16.mxu0 0
  %1174 = vmatpush1.bf16.msra.mxu0 %v598
  %1175 = vmatprep.subr.bf16.mxu0 0
  %1176 = vmatpush1.bf16.msra.mxu0 %v599
  %1177 = vmatprep.subr.bf16.mxu0 0
  %1178 = vmatpush1.bf16.msra.mxu0 %v600
  %1179 = vmatprep.subr.bf16.mxu0 0
  %1180 = vmatpush1.bf16.msra.mxu0 0
  %1181 = vmatprep.subr.bf16.mxu0 0
  %1182 = vmatpush1.bf16.msra.mxu0 0
  %1183 = vmatprep.subr.bf16.mxu0 0
  %1184 = vmatpush1.bf16.msra.mxu0 0
  %1185 = vmatprep.subr.bf16.mxu0 0
  %1186 = vmatpush1.bf16.msra.mxu0 0
  %1187 = vmatprep.subr.bf16.mxu0 0
  %1188 = vmatpush1.bf16.msra.mxu0 0
  %1189 = vmatprep.subr.bf16.mxu0 0
  %1190 = vmatpush1.bf16.msra.mxu0 0
  %1191 = vmatprep.subr.bf16.mxu0 0
  %1192 = vmatpush1.bf16.msra.mxu0 0
  %1193 = vmatprep.subr.bf16.mxu0 0
  %1194 = vmatpush1.bf16.msra.mxu0 0
  %1195 = vmatprep.mubr.bf16.mxu0 0
  %1196 = vmatmul.mubr.bf16.gmra.mrb[0].mxu0 %v1162
  %v1197 = vpop.f32.mrb[0].mxu0
  %v1198 = vadd.f32 0.0, %v1197
  %v1199 = vpop.f32.mrb[0].mxu0
  %v1200 = vpop.f32.mrb[0].mxu0
  %v1201 = vpop.f32.mrb[0].mxu0
  %1202 = vdwg.mxu0
  %1203 = vmatprep.subr.bf16.mxu0 0
  %1204 = vmatpush1.bf16.msra.mxu0 %v681
  %1205 = vmatprep.subr.bf16.mxu0 0
  %1206 = vmatpush1.bf16.msra.mxu0 %v682
  %1207 = vmatprep.subr.bf16.mxu0 0
  %1208 = vmatpush1.bf16.msra.mxu0 %v683
  %1209 = vmatprep.subr.bf16.mxu0 0
  %1210 = vmatpush1.bf16.msra.mxu0 %v684
  %1211 = vmatprep.subr.bf16.mxu0 0
  %1212 = vmatpush1.bf16.msra.mxu0 %v685
  %1213 = vmatprep.subr.bf16.mxu0 0
  %1214 = vmatpush1.bf16.msra.mxu0 %v686
  %1215 = vmatprep.subr.bf16.mxu0 0
  %1216 = vmatpush1.bf16.msra.mxu0 %v687
  %1217 = vmatprep.subr.bf16.mxu0 0
  %1218 = vmatpush1.bf16.msra.mxu0 %v688
  %1219 = vmatprep.subr.bf16.mxu0 0
  %1220 = vmatpush1.bf16.msra.mxu0 0
  %1221 = vmatprep.subr.bf16.mxu0 0
  %1222 = vmatpush1.bf16.msra.mxu0 0
  %1223 = vmatprep.subr.bf16.mxu0 0
  %1224 = vmatpush1.bf16.msra.mxu0 0
  %1225 = vmatprep.subr.bf16.mxu0 0
  %1226 = vmatpush1.bf16.msra.mxu0 0
  %1227 = vmatprep.subr.bf16.mxu0 0
  %1228 = vmatpush1.bf16.msra.mxu0 0
  %1229 = vmatprep.subr.bf16.mxu0 0
  %1230 = vmatpush1.bf16.msra.mxu0 0
  %1231 = vmatprep.subr.bf16.mxu0 0
  %1232 = vmatpush1.bf16.msra.mxu0 0
  %1233 = vmatprep.subr.bf16.mxu0 0
  %1234 = vmatpush1.bf16.msra.mxu0 0
  %1235 = vmatprep.mubr.bf16.mxu0 0
  %1236 = vmatmul.mubr.bf16.gmra.mrb[0].mxu0 %v1162
  %v1237 = vpop.f32.mrb[0].mxu0
  %v1238 = vadd.f32 0.0, %v1237
  %v1239 = vpop.f32.mrb[0].mxu0
  %v1240 = vpop.f32.mrb[0].mxu0
  %v1241 = vpop.f32.mrb[0].mxu0
  %1242 = vdwg.mxu0
  %1243 = vmatprep.subr.bf16.mxu0 0
  %1244 = vmatpush1.bf16.msra.mxu0 %v775
  %1245 = vmatprep.subr.bf16.mxu0 0
  %1246 = vmatpush1.bf16.msra.mxu0 %v776
  %1247 = vmatprep.subr.bf16.mxu0 0
  %1248 = vmatpush1.bf16.msra.mxu0 %v777
  %1249 = vmatprep.subr.bf16.mxu0 0
  %1250 = vmatpush1.bf16.msra.mxu0 %v778
  %1251 = vmatprep.subr.bf16.mxu0 0
  %1252 = vmatpush1.bf16.msra.mxu0 %v779
  %1253 = vmatprep.subr.bf16.mxu0 0
  %1254 = vmatpush1.bf16.msra.mxu0 %v780
  %1255 = vmatprep.subr.bf16.mxu0 0
  %1256 = vmatpush1.bf16.msra.mxu0 %v781
  %1257 = vmatprep.subr.bf16.mxu0 0
  %1258 = vmatpush1.bf16.msra.mxu0 %v782
  %1259 = vmatprep.subr.bf16.mxu0 0
  %1260 = vmatpush1.bf16.msra.mxu0 0
  %1261 = vmatprep.subr.bf16.mxu0 0
  %1262 = vmatpush1.bf16.msra.mxu0 0
  %1263 = vmatprep.subr.bf16.mxu0 0
  %1264 = vmatpush1.bf16.msra.mxu0 0
  %1265 = vmatprep.subr.bf16.mxu0 0
  %1266 = vmatpush1.bf16.msra.mxu0 0
  %1267 = vmatprep.subr.bf16.mxu0 0
  %1268 = vmatpush1.bf16.msra.mxu0 0
  %1269 = vmatprep.subr.bf16.mxu0 0
  %1270 = vmatpush1.bf16.msra.mxu0 0
  %1271 = vmatprep.subr.bf16.mxu0 0
  %1272 = vmatpush1.bf16.msra.mxu0 0
  %1273 = vmatprep.subr.bf16.mxu0 0
  %1274 = vmatpush1.bf16.msra.mxu0 0
  %1275 = vmatprep.mubr.bf16.mxu0 0
  %1276 = vmatmul.mubr.bf16.gmra.mrb[0].mxu0 %v1162
  %v1277 = vpop.f32.mrb[0].mxu0
  %v1278 = vadd.f32 %v741, %v1277
  %v1279 = vpop.f32.mrb[0].mxu0
  %v1280 = vpop.f32.mrb[0].mxu0
  %v1281 = vpop.f32.mrb[0].mxu0
  %1282 = vdwg.mxu0
  %s1283 = scalar_lea.vmem [#allocation2], 24
  %v1284 = vld [vmem:[%s1283] sm:$0xff]
  %v1285 = vadd.f32 %v1284, %v1198
  %v1286 = vxor.u32 %v1285, 2147483648
  %v1287 = vmul.f32 %v1286, 1.442695
  %v1288 = vpow.pop %v1287
  %v1289 = vadd.f32 %v1288, 1.0
  %v1290 = vrcp.pop %v1289
  %v1291 = vmul.f32 1.0, %v1290
  %s1292 = scalar_lea.vmem [#allocation3], 24
  %v1293 = vld [vmem:[%s1292] sm:$0xff]
  %v1294 = vadd.f32 %v1293, %v1238
  %v1295 = vxor.u32 %v1294, 2147483648
  %v1296 = vmul.f32 %v1295, 1.442695
  %v1297 = vpow.pop %v1296
  %v1298 = vadd.f32 %v1297, 1.0
  %v1299 = vrcp.pop %v1298
  %v1300 = vmul.f32 1.0, %v1299
  %s1301 = scalar_lea.vmem [#allocation4], 24
  %v1302 = vld [vmem:[%s1301] sm:$0xff]
  %v1303 = vmul.f32 %v1291, %v1278
  %v1304 = vadd.f32 %v1302, %v1303
  %v1305 = vtanh.pop %v1304
  %v1306 = vsub.f32 1.0, %v1300
  %v1307 = vmul.f32 %v1306, %v1305
  %v1308 = vmul.f32 %v1300, %v1161
  %v1309 = vadd.f32 %v1307, %v1308
  %1310 = vst [vmem:[#allocation6] sm:$0xff] %v1309
  %s1311 = scalar_lea.vmem [#allocation5], 24
  %1312 = vst [vmem:[%s1311] sm:$0xff] %v1309
  %v1313 = vld [vmem:[#allocation6] sm:$0xff]
  %v1314 = vpack.c.bf16 %v1313, %v1313
  %1315 = vmatprep.subr.bf16.mxu0 0
  %1316 = vmatpush1.bf16.msra.mxu0 %v593
  %1317 = vmatprep.subr.bf16.mxu0 0
  %1318 = vmatpush1.bf16.msra.mxu0 %v594
  %1319 = vmatprep.subr.bf16.mxu0 0
  %1320 = vmatpush1.bf16.msra.mxu0 %v595
  %1321 = vmatprep.subr.bf16.mxu0 0
  %1322 = vmatpush1.bf16.msra.mxu0 %v596
  %1323 = vmatprep.subr.bf16.mxu0 0
  %1324 = vmatpush1.bf16.msra.mxu0 %v597
  %1325 = vmatprep.subr.bf16.mxu0 0
  %1326 = vmatpush1.bf16.msra.mxu0 %v598
  %1327 = vmatprep.subr.bf16.mxu0 0
  %1328 = vmatpush1.bf16.msra.mxu0 %v599
  %1329 = vmatprep.subr.bf16.mxu0 0
  %1330 = vmatpush1.bf16.msra.mxu0 %v600
  %1331 = vmatprep.subr.bf16.mxu0 0
  %1332 = vmatpush1.bf16.msra.mxu0 0
  %1333 = vmatprep.subr.bf16.mxu0 0
  %1334 = vmatpush1.bf16.msra.mxu0 0
  %1335 = vmatprep.subr.bf16.mxu0 0
  %1336 = vmatpush1.bf16.msra.mxu0 0
  %1337 = vmatprep.subr.bf16.mxu0 0
  %1338 = vmatpush1.bf16.msra.mxu0 0
  %1339 = vmatprep.subr.bf16.mxu0 0
  %1340 = vmatpush1.bf16.msra.mxu0 0
  %1341 = vmatprep.subr.bf16.mxu0 0
  %1342 = vmatpush1.bf16.msra.mxu0 0
  %1343 = vmatprep.subr.bf16.mxu0 0
  %1344 = vmatpush1.bf16.msra.mxu0 0
  %1345 = vmatprep.subr.bf16.mxu0 0
  %1346 = vmatpush1.bf16.msra.mxu0 0
  %1347 = vmatprep.mubr.bf16.mxu0 0
  %1348 = vmatmul.mubr.bf16.gmra.mrb[0].mxu0 %v1314
  %v1349 = vpop.f32.mrb[0].mxu0
  %v1350 = vadd.f32 0.0, %v1349
  %v1351 = vpop.f32.mrb[0].mxu0
  %v1352 = vpop.f32.mrb[0].mxu0
  %v1353 = vpop.f32.mrb[0].mxu0
  %1354 = vdwg.mxu0
  %1355 = vmatprep.subr.bf16.mxu0 0
  %1356 = vmatpush1.bf16.msra.mxu0 %v681
  %1357 = vmatprep.subr.bf16.mxu0 0
  %1358 = vmatpush1.bf16.msra.mxu0 %v682
  %1359 = vmatprep.subr.bf16.mxu0 0
  %1360 = vmatpush1.bf16.msra.mxu0 %v683
  %1361 = vmatprep.subr.bf16.mxu0 0
  %1362 = vmatpush1.bf16.msra.mxu0 %v684
  %1363 = vmatprep.subr.bf16.mxu0 0
  %1364 = vmatpush1.bf16.msra.mxu0 %v685
  %1365 = vmatprep.subr.bf16.mxu0 0
  %1366 = vmatpush1.bf16.msra.mxu0 %v686
  %1367 = vmatprep.subr.bf16.mxu0 0
  %1368 = vmatpush1.bf16.msra.mxu0 %v687
  %1369 = vmatprep.subr.bf16.mxu0 0
  %1370 = vmatpush1.bf16.msra.mxu0 %v688
  %1371 = vmatprep.subr.bf16.mxu0 0
  %1372 = vmatpush1.bf16.msra.mxu0 0
  %1373 = vmatprep.subr.bf16.mxu0 0
  %1374 = vmatpush1.bf16.msra.mxu0 0
  %1375 = vmatprep.subr.bf16.mxu0 0
  %1376 = vmatpush1.bf16.msra.mxu0 0
  %1377 = vmatprep.subr.bf16.mxu0 0
  %1378 = vmatpush1.bf16.msra.mxu0 0
  %1379 = vmatprep.subr.bf16.mxu0 0
  %1380 = vmatpush1.bf16.msra.mxu0 0
  %1381 = vmatprep.subr.bf16.mxu0 0
  %1382 = vmatpush1.bf16.msra.mxu0 0
  %1383 = vmatprep.subr.bf16.mxu0 0
  %1384 = vmatpush1.bf16.msra.mxu0 0
  %1385 = vmatprep.subr.bf16.mxu0 0
  %1386 = vmatpush1.bf16.msra.mxu0 0
  %1387 = vmatprep.mubr.bf16.mxu0 0
  %1388 = vmatmul.mubr.bf16.gmra.mrb[0].mxu0 %v1314
  %v1389 = vpop.f32.mrb[0].mxu0
  %v1390 = vadd.f32 0.0, %v1389
  %v1391 = vpop.f32.mrb[0].mxu0
  %v1392 = vpop.f32.mrb[0].mxu0
  %v1393 = vpop.f32.mrb[0].mxu0
  %1394 = vdwg.mxu0
  %1395 = vmatprep.subr.bf16.mxu0 0
  %1396 = vmatpush1.bf16.msra.mxu0 %v775
  %1397 = vmatprep.subr.bf16.mxu0 0
  %1398 = vmatpush1.bf16.msra.mxu0 %v776
  %1399 = vmatprep.subr.bf16.mxu0 0
  %1400 = vmatpush1.bf16.msra.mxu0 %v777
  %1401 = vmatprep.subr.bf16.mxu0 0
  %1402 = vmatpush1.bf16.msra.mxu0 %v778
  %1403 = vmatprep.subr.bf16.mxu0 0
  %1404 = vmatpush1.bf16.msra.mxu0 %v779
  %1405 = vmatprep.subr.bf16.mxu0 0
  %1406 = vmatpush1.bf16.msra.mxu0 %v780
  %1407 = vmatprep.subr.bf16.mxu0 0
  %1408 = vmatpush1.bf16.msra.mxu0 %v781
  %1409 = vmatprep.subr.bf16.mxu0 0
  %1410 = vmatpush1.bf16.msra.mxu0 %v782
  %1411 = vmatprep.subr.bf16.mxu0 0
  %1412 = vmatpush1.bf16.msra.mxu0 0
  %1413 = vmatprep.subr.bf16.mxu0 0
  %1414 = vmatpush1.bf16.msra.mxu0 0
  %1415 = vmatprep.subr.bf16.mxu0 0
  %1416 = vmatpush1.bf16.msra.mxu0 0
  %1417 = vmatprep.subr.bf16.mxu0 0
  %1418 = vmatpush1.bf16.msra.mxu0 0
  %1419 = vmatprep.subr.bf16.mxu0 0
  %1420 = vmatpush1.bf16.msra.mxu0 0
  %1421 = vmatprep.subr.bf16.mxu0 0
  %1422 = vmatpush1.bf16.msra.mxu0 0
  %1423 = vmatprep.subr.bf16.mxu0 0
  %1424 = vmatpush1.bf16.msra.mxu0 0
  %1425 = vmatprep.subr.bf16.mxu0 0
  %1426 = vmatpush1.bf16.msra.mxu0 0
  %1427 = vmatprep.mubr.bf16.mxu0 0
  %1428 = vmatmul.mubr.bf16.gmra.mrb[0].mxu0 %v1314
  %v1429 = vpop.f32.mrb[0].mxu0
  %v1430 = vadd.f32 %v741, %v1429
  %v1431 = vpop.f32.mrb[0].mxu0
  %v1432 = vpop.f32.mrb[0].mxu0
  %v1433 = vpop.f32.mrb[0].mxu0
  %1434 = vdwg.mxu0
  %s1435 = scalar_lea.vmem [#allocation2], 32
  %v1436 = vld [vmem:[%s1435] sm:$0xff]
  %v1437 = vadd.f32 %v1436, %v1350
  %v1438 = vxor.u32 %v1437, 2147483648
  %v1439 = vmul.f32 %v1438, 1.442695
  %v1440 = vpow.pop %v1439
  %v1441 = vadd.f32 %v1440, 1.0
  %v1442 = vrcp.pop %v1441
  %v1443 = vmul.f32 1.0, %v1442
  %s1444 = scalar_lea.vmem [#allocation3], 32
  %v1445 = vld [vmem:[%s1444] sm:$0xff]
  %v1446 = vadd.f32 %v1445, %v1390
  %v1447 = vxor.u32 %v1446, 2147483648
  %v1448 = vmul.f32 %v1447, 1.442695
  %v1449 = vpow.pop %v1448
  %v1450 = vadd.f32 %v1449, 1.0
  %v1451 = vrcp.pop %v1450
  %v1452 = vmul.f32 1.0, %v1451
  %s1453 = scalar_lea.vmem [#allocation4], 32
  %v1454 = vld [vmem:[%s1453] sm:$0xff]
  %v1455 = vmul.f32 %v1443, %v1430
  %v1456 = vadd.f32 %v1454, %v1455
  %v1457 = vtanh.pop %v1456
  %v1458 = vsub.f32 1.0, %v1452
  %v1459 = vmul.f32 %v1458, %v1457
  %v1460 = vmul.f32 %v1452, %v1313
  %v1461 = vadd.f32 %v1459, %v1460
  %1462 = vst [vmem:[#allocation6] sm:$0xff] %v1461
  %s1463 = scalar_lea.vmem [#allocation5], 32
  %1464 = vst [vmem:[%s1463] sm:$0xff] %v1461
  %v1465 = vld [vmem:[#allocation6] sm:$0xff]
  %v1466 = vpack.c.bf16 %v1465, %v1465
  %1467 = vmatprep.subr.bf16.mxu0 0
  %1468 = vmatpush1.bf16.msra.mxu0 %v593
  %1469 = vmatprep.subr.bf16.mxu0 0
  %1470 = vmatpush1.bf16.msra.mxu0 %v594
  %1471 = vmatprep.subr.bf16.mxu0 0
  %1472 = vmatpush1.bf16.msra.mxu0 %v595
  %1473 = vmatprep.subr.bf16.mxu0 0
  %1474 = vmatpush1.bf16.msra.mxu0 %v596
  %1475 = vmatprep.subr.bf16.mxu0 0
  %1476 = vmatpush1.bf16.msra.mxu0 %v597
  %1477 = vmatprep.subr.bf16.mxu0 0
  %1478 = vmatpush1.bf16.msra.mxu0 %v598
  %1479 = vmatprep.subr.bf16.mxu0 0
  %1480 = vmatpush1.bf16.msra.mxu0 %v599
  %1481 = vmatprep.subr.bf16.mxu0 0
  %1482 = vmatpush1.bf16.msra.mxu0 %v600
  %1483 = vmatprep.subr.bf16.mxu0 0
  %1484 = vmatpush1.bf16.msra.mxu0 0
  %1485 = vmatprep.subr.bf16.mxu0 0
  %1486 = vmatpush1.bf16.msra.mxu0 0
  %1487 = vmatprep.subr.bf16.mxu0 0
  %1488 = vmatpush1.bf16.msra.mxu0 0
  %1489 = vmatprep.subr.bf16.mxu0 0
  %1490 = vmatpush1.bf16.msra.mxu0 0
  %1491 = vmatprep.subr.bf16.mxu0 0
  %1492 = vmatpush1.bf16.msra.mxu0 0
  %1493 = vmatprep.subr.bf16.mxu0 0
  %1494 = vmatpush1.bf16.msra.mxu0 0
  %1495 = vmatprep.subr.bf16.mxu0 0
  %1496 = vmatpush1.bf16.msra.mxu0 0
  %1497 = vmatprep.subr.bf16.mxu0 0
  %1498 = vmatpush1.bf16.msra.mxu0 0
  %1499 = vmatprep.mubr.bf16.mxu0 0
  %1500 = vmatmul.mubr.bf16.gmra.mrb[0].mxu0 %v1466
  %v1501 = vpop.f32.mrb[0].mxu0
  %v1502 = vadd.f32 0.0, %v1501
  %v1503 = vpop.f32.mrb[0].mxu0
  %v1504 = vpop.f32.mrb[0].mxu0
  %v1505 = vpop.f32.mrb[0].mxu0
  %1506 = vdwg.mxu0
  %1507 = vmatprep.subr.bf16.mxu0 0
  %1508 = vmatpush1.bf16.msra.mxu0 %v681
  %1509 = vmatprep.subr.bf16.mxu0 0
  %1510 = vmatpush1.bf16.msra.mxu0 %v682
  %1511 = vmatprep.subr.bf16.mxu0 0
  %1512 = vmatpush1.bf16.msra.mxu0 %v683
  %1513 = vmatprep.subr.bf16.mxu0 0
  %1514 = vmatpush1.bf16.msra.mxu0 %v684
  %1515 = vmatprep.subr.bf16.mxu0 0
  %1516 = vmatpush1.bf16.msra.mxu0 %v685
  %1517 = vmatprep.subr.bf16.mxu0 0
  %1518 = vmatpush1.bf16.msra.mxu0 %v686
  %1519 = vmatprep.subr.bf16.mxu0 0
  %1520 = vmatpush1.bf16.msra.mxu0 %v687
  %1521 = vmatprep.subr.bf16.mxu0 0
  %1522 = vmatpush1.bf16.msra.mxu0 %v688
  %1523 = vmatprep.subr.bf16.mxu0 0
  %1524 = vmatpush1.bf16.msra.mxu0 0
  %1525 = vmatprep.subr.bf16.mxu0 0
  %1526 = vmatpush1.bf16.msra.mxu0 0
  %1527 = vmatprep.subr.bf16.mxu0 0
  %1528 = vmatpush1.bf16.msra.mxu0 0
  %1529 = vmatprep.subr.bf16.mxu0 0
  %1530 = vmatpush1.bf16.msra.mxu0 0
  %1531 = vmatprep.subr.bf16.mxu0 0
  %1532 = vmatpush1.bf16.msra.mxu0 0
  %1533 = vmatprep.subr.bf16.mxu0 0
  %1534 = vmatpush1.bf16.msra.mxu0 0
  %1535 = vmatprep.subr.bf16.mxu0 0
  %1536 = vmatpush1.bf16.msra.mxu0 0
  %1537 = vmatprep.subr.bf16.mxu0 0
  %1538 = vmatpush1.bf16.msra.mxu0 0
  %1539 = vmatprep.mubr.bf16.mxu0 0
  %1540 = vmatmul.mubr.bf16.gmra.mrb[0].mxu0 %v1466
  %v1541 = vpop.f32.mrb[0].mxu0
  %v1542 = vadd.f32 0.0, %v1541
  %v1543 = vpop.f32.mrb[0].mxu0
  %v1544 = vpop.f32.mrb[0].mxu0
  %v1545 = vpop.f32.mrb[0].mxu0
  %1546 = vdwg.mxu0
  %1547 = vmatprep.subr.bf16.mxu0 0
  %1548 = vmatpush1.bf16.msra.mxu0 %v775
  %1549 = vmatprep.subr.bf16.mxu0 0
  %1550 = vmatpush1.bf16.msra.mxu0 %v776
  %1551 = vmatprep.subr.bf16.mxu0 0
  %1552 = vmatpush1.bf16.msra.mxu0 %v777
  %1553 = vmatprep.subr.bf16.mxu0 0
  %1554 = vmatpush1.bf16.msra.mxu0 %v778
  %1555 = vmatprep.subr.bf16.mxu0 0
  %1556 = vmatpush1.bf16.msra.mxu0 %v779
  %1557 = vmatprep.subr.bf16.mxu0 0
  %1558 = vmatpush1.bf16.msra.mxu0 %v780
  %1559 = vmatprep.subr.bf16.mxu0 0
  %1560 = vmatpush1.bf16.msra.mxu0 %v781
  %1561 = vmatprep.subr.bf16.mxu0 0
  %1562 = vmatpush1.bf16.msra.mxu0 %v782
  %1563 = vmatprep.subr.bf16.mxu0 0
  %1564 = vmatpush1.bf16.msra.mxu0 0
  %1565 = vmatprep.subr.bf16.mxu0 0
  %1566 = vmatpush1.bf16.msra.mxu0 0
  %1567 = vmatprep.subr.bf16.mxu0 0
  %1568 = vmatpush1.bf16.msra.mxu0 0
  %1569 = vmatprep.subr.bf16.mxu0 0
  %1570 = vmatpush1.bf16.msra.mxu0 0
  %1571 = vmatprep.subr.bf16.mxu0 0
  %1572 = vmatpush1.bf16.msra.mxu0 0
  %1573 = vmatprep.subr.bf16.mxu0 0
  %1574 = vmatpush1.bf16.msra.mxu0 0
  %1575 = vmatprep.subr.bf16.mxu0 0
  %1576 = vmatpush1.bf16.msra.mxu0 0
  %1577 = vmatprep.subr.bf16.mxu0 0
  %1578 = vmatpush1.bf16.msra.mxu0 0
  %1579 = vmatprep.mubr.bf16.mxu0 0
  %1580 = vmatmul.mubr.bf16.gmra.mrb[0].mxu0 %v1466
  %v1581 = vpop.f32.mrb[0].mxu0
  %v1582 = vadd.f32 %v741, %v1581
  %v1583 = vpop.f32.mrb[0].mxu0
  %v1584 = vpop.f32.mrb[0].mxu0
  %v1585 = vpop.f32.mrb[0].mxu0
  %1586 = vdwg.mxu0
  %s1587 = scalar_lea.vmem [#allocation2], 40
  %v1588 = vld [vmem:[%s1587] sm:$0xff]
  %v1589 = vadd.f32 %v1588, %v1502
  %v1590 = vxor.u32 %v1589, 2147483648
  %v1591 = vmul.f32 %v1590, 1.442695
  %v1592 = vpow.pop %v1591
  %v1593 = vadd.f32 %v1592, 1.0
  %v1594 = vrcp.pop %v1593
  %v1595 = vmul.f32 1.0, %v1594
  %s1596 = scalar_lea.vmem [#allocation3], 40
  %v1597 = vld [vmem:[%s1596] sm:$0xff]
  %v1598 = vadd.f32 %v1597, %v1542
  %v1599 = vxor.u32 %v1598, 2147483648
  %v1600 = vmul.f32 %v1599, 1.442695
  %v1601 = vpow.pop %v1600
  %v1602 = vadd.f32 %v1601, 1.0
  %v1603 = vrcp.pop %v1602
  %v1604 = vmul.f32 1.0, %v1603
  %s1605 = scalar_lea.vmem [#allocation4], 40
  %v1606 = vld [vmem:[%s1605] sm:$0xff]
  %v1607 = vmul.f32 %v1595, %v1582
  %v1608 = vadd.f32 %v1606, %v1607
  %v1609 = vtanh.pop %v1608
  %v1610 = vsub.f32 1.0, %v1604
  %v1611 = vmul.f32 %v1610, %v1609
  %v1612 = vmul.f32 %v1604, %v1465
  %v1613 = vadd.f32 %v1611, %v1612
  %1614 = vst [vmem:[#allocation6] sm:$0xff] %v1613
  %s1615 = scalar_lea.vmem [#allocation5], 40
  %1616 = vst [vmem:[%s1615] sm:$0xff] %v1613
  %v1617 = vld [vmem:[#allocation6] sm:$0xff]
  %v1618 = vpack.c.bf16 %v1617, %v1617
  %1619 = vmatprep.subr.bf16.mxu0 0
  %1620 = vmatpush1.bf16.msra.mxu0 %v593
  %1621 = vmatprep.subr.bf16.mxu0 0
  %1622 = vmatpush1.bf16.msra.mxu0 %v594
  %1623 = vmatprep.subr.bf16.mxu0 0
  %1624 = vmatpush1.bf16.msra.mxu0 %v595
  %1625 = vmatprep.subr.bf16.mxu0 0
  %1626 = vmatpush1.bf16.msra.mxu0 %v596
  %1627 = vmatprep.subr.bf16.mxu0 0
  %1628 = vmatpush1.bf16.msra.mxu0 %v597
  %1629 = vmatprep.subr.bf16.mxu0 0
  %1630 = vmatpush1.bf16.msra.mxu0 %v598
  %1631 = vmatprep.subr.bf16.mxu0 0
  %1632 = vmatpush1.bf16.msra.mxu0 %v599
  %1633 = vmatprep.subr.bf16.mxu0 0
  %1634 = vmatpush1.bf16.msra.mxu0 %v600
  %1635 = vmatprep.subr.bf16.mxu0 0
  %1636 = vmatpush1.bf16.msra.mxu0 0
  %1637 = vmatprep.subr.bf16.mxu0 0
  %1638 = vmatpush1.bf16.msra.mxu0 0
  %1639 = vmatprep.subr.bf16.mxu0 0
  %1640 = vmatpush1.bf16.msra.mxu0 0
  %1641 = vmatprep.subr.bf16.mxu0 0
  %1642 = vmatpush1.bf16.msra.mxu0 0
  %1643 = vmatprep.subr.bf16.mxu0 0
  %1644 = vmatpush1.bf16.msra.mxu0 0
  %1645 = vmatprep.subr.bf16.mxu0 0
  %1646 = vmatpush1.bf16.msra.mxu0 0
  %1647 = vmatprep.subr.bf16.mxu0 0
  %1648 = vmatpush1.bf16.msra.mxu0 0
  %1649 = vmatprep.subr.bf16.mxu0 0
  %1650 = vmatpush1.bf16.msra.mxu0 0
  %1651 = vmatprep.mubr.bf16.mxu0 0
  %1652 = vmatmul.mubr.bf16.gmra.mrb[0].mxu0 %v1618
  %v1653 = vpop.f32.mrb[0].mxu0
  %v1654 = vadd.f32 0.0, %v1653
  %v1655 = vpop.f32.mrb[0].mxu0
  %v1656 = vpop.f32.mrb[0].mxu0
  %v1657 = vpop.f32.mrb[0].mxu0
  %1658 = vdwg.mxu0
  %1659 = vmatprep.subr.bf16.mxu0 0
  %1660 = vmatpush1.bf16.msra.mxu0 %v681
  %1661 = vmatprep.subr.bf16.mxu0 0
  %1662 = vmatpush1.bf16.msra.mxu0 %v682
  %1663 = vmatprep.subr.bf16.mxu0 0
  %1664 = vmatpush1.bf16.msra.mxu0 %v683
  %1665 = vmatprep.subr.bf16.mxu0 0
  %1666 = vmatpush1.bf16.msra.mxu0 %v684
  %1667 = vmatprep.subr.bf16.mxu0 0
  %1668 = vmatpush1.bf16.msra.mxu0 %v685
  %1669 = vmatprep.subr.bf16.mxu0 0
  %1670 = vmatpush1.bf16.msra.mxu0 %v686
  %1671 = vmatprep.subr.bf16.mxu0 0
  %1672 = vmatpush1.bf16.msra.mxu0 %v687
  %1673 = vmatprep.subr.bf16.mxu0 0
  %1674 = vmatpush1.bf16.msra.mxu0 %v688
  %1675 = vmatprep.subr.bf16.mxu0 0
  %1676 = vmatpush1.bf16.msra.mxu0 0
  %1677 = vmatprep.subr.bf16.mxu0 0
  %1678 = vmatpush1.bf16.msra.mxu0 0
  %1679 = vmatprep.subr.bf16.mxu0 0
  %1680 = vmatpush1.bf16.msra.mxu0 0
  %1681 = vmatprep.subr.bf16.mxu0 0
  %1682 = vmatpush1.bf16.msra.mxu0 0
  %1683 = vmatprep.subr.bf16.mxu0 0
  %1684 = vmatpush1.bf16.msra.mxu0 0
  %1685 = vmatprep.subr.bf16.mxu0 0
  %1686 = vmatpush1.bf16.msra.mxu0 0
  %1687 = vmatprep.subr.bf16.mxu0 0
  %1688 = vmatpush1.bf16.msra.mxu0 0
  %1689 = vmatprep.subr.bf16.mxu0 0
  %1690 = vmatpush1.bf16.msra.mxu0 0
  %1691 = vmatprep.mubr.bf16.mxu0 0
  %1692 = vmatmul.mubr.bf16.gmra.mrb[0].mxu0 %v1618
  %v1693 = vpop.f32.mrb[0].mxu0
  %v1694 = vadd.f32 0.0, %v1693
  %v1695 = vpop.f32.mrb[0].mxu0
  %v1696 = vpop.f32.mrb[0].mxu0
  %v1697 = vpop.f32.mrb[0].mxu0
  %1698 = vdwg.mxu0
  %1699 = vmatprep.subr.bf16.mxu0 0
  %1700 = vmatpush1.bf16.msra.mxu0 %v775
  %1701 = vmatprep.subr.bf16.mxu0 0
  %1702 = vmatpush1.bf16.msra.mxu0 %v776
  %1703 = vmatprep.subr.bf16.mxu0 0
  %1704 = vmatpush1.bf16.msra.mxu0 %v777
  %1705 = vmatprep.subr.bf16.mxu0 0
  %1706 = vmatpush1.bf16.msra.mxu0 %v778
  %1707 = vmatprep.subr.bf16.mxu0 0
  %1708 = vmatpush1.bf16.msra.mxu0 %v779
  %1709 = vmatprep.subr.bf16.mxu0 0
  %1710 = vmatpush1.bf16.msra.mxu0 %v780
  %1711 = vmatprep.subr.bf16.mxu0 0
  %1712 = vmatpush1.bf16.msra.mxu0 %v781
  %1713 = vmatprep.subr.bf16.mxu0 0
  %1714 = vmatpush1.bf16.msra.mxu0 %v782
  %1715 = vmatprep.subr.bf16.mxu0 0
  %1716 = vmatpush1.bf16.msra.mxu0 0
  %1717 = vmatprep.subr.bf16.mxu0 0
  %1718 = vmatpush1.bf16.msra.mxu0 0
  %1719 = vmatprep.subr.bf16.mxu0 0
  %1720 = vmatpush1.bf16.msra.mxu0 0
  %1721 = vmatprep.subr.bf16.mxu0 0
  %1722 = vmatpush1.bf16.msra.mxu0 0
  %1723 = vmatprep.subr.bf16.mxu0 0
  %1724 = vmatpush1.bf16.msra.mxu0 0
  %1725 = vmatprep.subr.bf16.mxu0 0
  %1726 = vmatpush1.bf16.msra.mxu0 0
  %1727 = vmatprep.subr.bf16.mxu0 0
  %1728 = vmatpush1.bf16.msra.mxu0 0
  %1729 = vmatprep.subr.bf16.mxu0 0
  %1730 = vmatpush1.bf16.msra.mxu0 0
  %1731 = vmatprep.mubr.bf16.mxu0 0
  %1732 = vmatmul.mubr.bf16.gmra.mrb[0].mxu0 %v1618
  %v1733 = vpop.f32.mrb[0].mxu0
  %v1734 = vadd.f32 %v741, %v1733
  %v1735 = vpop.f32.mrb[0].mxu0
  %v1736 = vpop.f32.mrb[0].mxu0
  %v1737 = vpop.f32.mrb[0].mxu0
  %1738 = vdwg.mxu0
  %s1739 = scalar_lea.vmem [#allocation2], 48
  %v1740 = vld [vmem:[%s1739] sm:$0xff]
  %v1741 = vadd.f32 %v1740, %v1654
  %v1742 = vxor.u32 %v1741, 2147483648
  %v1743 = vmul.f32 %v1742, 1.442695
  %v1744 = vpow.pop %v1743
  %v1745 = vadd.f32 %v1744, 1.0
  %v1746 = vrcp.pop %v1745
  %v1747 = vmul.f32 1.0, %v1746
  %s1748 = scalar_lea.vmem [#allocation3], 48
  %v1749 = vld [vmem:[%s1748] sm:$0xff]
  %v1750 = vadd.f32 %v1749, %v1694
  %v1751 = vxor.u32 %v1750, 2147483648
  %v1752 = vmul.f32 %v1751, 1.442695
  %v1753 = vpow.pop %v1752
  %v1754 = vadd.f32 %v1753, 1.0
  %v1755 = vrcp.pop %v1754
  %v1756 = vmul.f32 1.0, %v1755
  %s1757 = scalar_lea.vmem [#allocation4], 48
  %v1758 = vld [vmem:[%s1757] sm:$0xff]
  %v1759 = vmul.f32 %v1747, %v1734
  %v1760 = vadd.f32 %v1758, %v1759
  %v1761 = vtanh.pop %v1760
  %v1762 = vsub.f32 1.0, %v1756
  %v1763 = vmul.f32 %v1762, %v1761
  %v1764 = vmul.f32 %v1756, %v1617
  %v1765 = vadd.f32 %v1763, %v1764
  %1766 = vst [vmem:[#allocation6] sm:$0xff] %v1765
  %s1767 = scalar_lea.vmem [#allocation5], 48
  %1768 = vst [vmem:[%s1767] sm:$0xff] %v1765
  %v1769 = vld [vmem:[#allocation6] sm:$0xff]
  %v1770 = vpack.c.bf16 %v1769, %v1769
  %1771 = vmatprep.subr.bf16.mxu0 0
  %1772 = vmatpush1.bf16.msra.mxu0 %v593
  %1773 = vmatprep.subr.bf16.mxu0 0
  %1774 = vmatpush1.bf16.msra.mxu0 %v594
  %1775 = vmatprep.subr.bf16.mxu0 0
  %1776 = vmatpush1.bf16.msra.mxu0 %v595
  %1777 = vmatprep.subr.bf16.mxu0 0
  %1778 = vmatpush1.bf16.msra.mxu0 %v596
  %1779 = vmatprep.subr.bf16.mxu0 0
  %1780 = vmatpush1.bf16.msra.mxu0 %v597
  %1781 = vmatprep.subr.bf16.mxu0 0
  %1782 = vmatpush1.bf16.msra.mxu0 %v598
  %1783 = vmatprep.subr.bf16.mxu0 0
  %1784 = vmatpush1.bf16.msra.mxu0 %v599
  %1785 = vmatprep.subr.bf16.mxu0 0
  %1786 = vmatpush1.bf16.msra.mxu0 %v600
  %1787 = vmatprep.subr.bf16.mxu0 0
  %1788 = vmatpush1.bf16.msra.mxu0 0
  %1789 = vmatprep.subr.bf16.mxu0 0
  %1790 = vmatpush1.bf16.msra.mxu0 0
  %1791 = vmatprep.subr.bf16.mxu0 0
  %1792 = vmatpush1.bf16.msra.mxu0 0
  %1793 = vmatprep.subr.bf16.mxu0 0
  %1794 = vmatpush1.bf16.msra.mxu0 0
  %1795 = vmatprep.subr.bf16.mxu0 0
  %1796 = vmatpush1.bf16.msra.mxu0 0
  %1797 = vmatprep.subr.bf16.mxu0 0
  %1798 = vmatpush1.bf16.msra.mxu0 0
  %1799 = vmatprep.subr.bf16.mxu0 0
  %1800 = vmatpush1.bf16.msra.mxu0 0
  %1801 = vmatprep.subr.bf16.mxu0 0
  %1802 = vmatpush1.bf16.msra.mxu0 0
  %1803 = vmatprep.mubr.bf16.mxu0 0
  %1804 = vmatmul.mubr.bf16.gmra.mrb[0].mxu0 %v1770
  %v1805 = vpop.f32.mrb[0].mxu0
  %v1806 = vadd.f32 0.0, %v1805
  %v1807 = vpop.f32.mrb[0].mxu0
  %v1808 = vpop.f32.mrb[0].mxu0
  %v1809 = vpop.f32.mrb[0].mxu0
  %1810 = vdwg.mxu0
  %1811 = vmatprep.subr.bf16.mxu0 0
  %1812 = vmatpush1.bf16.msra.mxu0 %v681
  %1813 = vmatprep.subr.bf16.mxu0 0
  %1814 = vmatpush1.bf16.msra.mxu0 %v682
  %1815 = vmatprep.subr.bf16.mxu0 0
  %1816 = vmatpush1.bf16.msra.mxu0 %v683
  %1817 = vmatprep.subr.bf16.mxu0 0
  %1818 = vmatpush1.bf16.msra.mxu0 %v684
  %1819 = vmatprep.subr.bf16.mxu0 0
  %1820 = vmatpush1.bf16.msra.mxu0 %v685
  %1821 = vmatprep.subr.bf16.mxu0 0
  %1822 = vmatpush1.bf16.msra.mxu0 %v686
  %1823 = vmatprep.subr.bf16.mxu0 0
  %1824 = vmatpush1.bf16.msra.mxu0 %v687
  %1825 = vmatprep.subr.bf16.mxu0 0
  %1826 = vmatpush1.bf16.msra.mxu0 %v688
  %1827 = vmatprep.subr.bf16.mxu0 0
  %1828 = vmatpush1.bf16.msra.mxu0 0
  %1829 = vmatprep.subr.bf16.mxu0 0
  %1830 = vmatpush1.bf16.msra.mxu0 0
  %1831 = vmatprep.subr.bf16.mxu0 0
  %1832 = vmatpush1.bf16.msra.mxu0 0
  %1833 = vmatprep.subr.bf16.mxu0 0
  %1834 = vmatpush1.bf16.msra.mxu0 0
  %1835 = vmatprep.subr.bf16.mxu0 0
  %1836 = vmatpush1.bf16.msra.mxu0 0
  %1837 = vmatprep.subr.bf16.mxu0 0
  %1838 = vmatpush1.bf16.msra.mxu0 0
  %1839 = vmatprep.subr.bf16.mxu0 0
  %1840 = vmatpush1.bf16.msra.mxu0 0
  %1841 = vmatprep.subr.bf16.mxu0 0
  %1842 = vmatpush1.bf16.msra.mxu0 0
  %1843 = vmatprep.mubr.bf16.mxu0 0
  %1844 = vmatmul.mubr.bf16.gmra.mrb[0].mxu0 %v1770
  %v1845 = vpop.f32.mrb[0].mxu0
  %v1846 = vadd.f32 0.0, %v1845
  %v1847 = vpop.f32.mrb[0].mxu0
  %v1848 = vpop.f32.mrb[0].mxu0
  %v1849 = vpop.f32.mrb[0].mxu0
  %1850 = vdwg.mxu0
  %1851 = vmatprep.subr.bf16.mxu0 0
  %1852 = vmatpush1.bf16.msra.mxu0 %v775
  %1853 = vmatprep.subr.bf16.mxu0 0
  %1854 = vmatpush1.bf16.msra.mxu0 %v776
  %1855 = vmatprep.subr.bf16.mxu0 0
  %1856 = vmatpush1.bf16.msra.mxu0 %v777
  %1857 = vmatprep.subr.bf16.mxu0 0
  %1858 = vmatpush1.bf16.msra.mxu0 %v778
  %1859 = vmatprep.subr.bf16.mxu0 0
  %1860 = vmatpush1.bf16.msra.mxu0 %v779
  %1861 = vmatprep.subr.bf16.mxu0 0
  %1862 = vmatpush1.bf16.msra.mxu0 %v780
  %1863 = vmatprep.subr.bf16.mxu0 0
  %1864 = vmatpush1.bf16.msra.mxu0 %v781
  %1865 = vmatprep.subr.bf16.mxu0 0
  %1866 = vmatpush1.bf16.msra.mxu0 %v782
  %1867 = vmatprep.subr.bf16.mxu0 0
  %1868 = vmatpush1.bf16.msra.mxu0 0
  %1869 = vmatprep.subr.bf16.mxu0 0
  %1870 = vmatpush1.bf16.msra.mxu0 0
  %1871 = vmatprep.subr.bf16.mxu0 0
  %1872 = vmatpush1.bf16.msra.mxu0 0
  %1873 = vmatprep.subr.bf16.mxu0 0
  %1874 = vmatpush1.bf16.msra.mxu0 0
  %1875 = vmatprep.subr.bf16.mxu0 0
  %1876 = vmatpush1.bf16.msra.mxu0 0
  %1877 = vmatprep.subr.bf16.mxu0 0
  %1878 = vmatpush1.bf16.msra.mxu0 0
  %1879 = vmatprep.subr.bf16.mxu0 0
  %1880 = vmatpush1.bf16.msra.mxu0 0
  %1881 = vmatprep.subr.bf16.mxu0 0
  %1882 = vmatpush1.bf16.msra.mxu0 0
  %1883 = vmatprep.mubr.bf16.mxu0 0
  %1884 = vmatmul.mubr.bf16.gmra.mrb[0].mxu0 %v1770
  %v1885 = vpop.f32.mrb[0].mxu0
  %v1886 = vadd.f32 %v741, %v1885
  %v1887 = vpop.f32.mrb[0].mxu0
  %v1888 = vpop.f32.mrb[0].mxu0
  %v1889 = vpop.f32.mrb[0].mxu0
  %1890 = vdwg.mxu0
  %s1891 = scalar_lea.vmem [#allocation2], 56
  %v1892 = vld [vmem:[%s1891] sm:$0xff]
  %v1893 = vadd.f32 %v1892, %v1806
  %v1894 = vxor.u32 %v1893, 2147483648
  %v1895 = vmul.f32 %v1894, 1.442695
  %v1896 = vpow.pop %v1895
  %v1897 = vadd.f32 %v1896, 1.0
  %v1898 = vrcp.pop %v1897
  %v1899 = vmul.f32 1.0, %v1898
  %s1900 = scalar_lea.vmem [#allocation3], 56
  %v1901 = vld [vmem:[%s1900] sm:$0xff]
  %v1902 = vadd.f32 %v1901, %v1846
  %v1903 = vxor.u32 %v1902, 2147483648
  %v1904 = vmul.f32 %v1903, 1.442695
  %v1905 = vpow.pop %v1904
  %v1906 = vadd.f32 %v1905, 1.0
  %v1907 = vrcp.pop %v1906
  %v1908 = vmul.f32 1.0, %v1907
  %s1909 = scalar_lea.vmem [#allocation4], 56
  %v1910 = vld [vmem:[%s1909] sm:$0xff]
  %v1911 = vmul.f32 %v1899, %v1886
  %v1912 = vadd.f32 %v1910, %v1911
  %v1913 = vtanh.pop %v1912
  %v1914 = vsub.f32 1.0, %v1908
  %v1915 = vmul.f32 %v1914, %v1913
  %v1916 = vmul.f32 %v1908, %v1769
  %v1917 = vadd.f32 %v1915, %v1916
  %1918 = vst [vmem:[#allocation6] sm:$0xff] %v1917
  %s1919 = scalar_lea.vmem [#allocation5], 56
  %1920 = vst [vmem:[%s1919] sm:$0xff] %v1917
  %v1921 = vld [vmem:[#allocation5] sm:$0xff]
  %v1922 = vld [vmem:[#allocation5 + $0x8] sm:$0xff]
  %v1923 = vld [vmem:[#allocation5 + $0x10] sm:$0xff]
  %v1924 = vld [vmem:[#allocation5 + $0x18] sm:$0xff]
  %v1925 = vld [vmem:[#allocation5 + $0x20] sm:$0xff]
  %v1926 = vld [vmem:[#allocation5 + $0x28] sm:$0xff]
  %v1927 = vld [vmem:[#allocation5 + $0x30] sm:$0xff]
  %v1928 = vld [vmem:[#allocation5 + $0x38] sm:$0xff]
  %v1929 = vpack.c.bf16 %v1922, %v1921
  %v1930 = vpack.c.bf16 %v1924, %v1923
  %v1931 = vpack.c.bf16 %v1926, %v1925
  %v1932 = vpack.c.bf16 %v1928, %v1927
  %v1933 = vld [vmem:[%s5] sm:$0xf]
  %v1934 = vld [vmem:[%s5 + $0x4] sm:$0xf]
  %v1935 = vld [vmem:[%s5 + $0x8] sm:$0xf]
  %v1936 = vld [vmem:[%s5 + $0xc] sm:$0xf]
  %v1937 = vld [vmem:[%s5 + $0x10] sm:$0xf]
  %v1938 = vld [vmem:[%s5 + $0x14] sm:$0xf]
  %v1939 = vld [vmem:[%s5 + $0x18] sm:$0xf]
  %v1940 = vld [vmem:[%s5 + $0x1c] sm:$0xf]
  %v1941 = vld [vmem:[%s5 + $0x20] sm:$0xf]
  %v1942 = vld [vmem:[%s5 + $0x24] sm:$0xf]
  %v1943 = vld [vmem:[%s5 + $0x28] sm:$0xf]
  %v1944 = vld [vmem:[%s5 + $0x2c] sm:$0xf]
  %v1945 = vld [vmem:[%s5 + $0x30] sm:$0xf]
  %v1946 = vld [vmem:[%s5 + $0x34] sm:$0xf]
  %v1947 = vld [vmem:[%s5 + $0x38] sm:$0xf]
  %v1948 = vld [vmem:[%s5 + $0x3c] sm:$0xf]
  %v1949 = vld [vmem:[%s7] sm:$0x1]
  %v1951 = vlaneseq
  %v1952 = vshrl.u32 %v1951, 7
  %v1953 = vsub.s32 0, %v1952
  %v1954 = vrot.slane %v1949, %v1953
  %v1972 = vunpack.c.l.b16 %v1933
  %v1973 = vunpack.c.l.b16 %v1934
  %v1974 = vunpack.c.l.b16 %v1935
  %v1975 = vunpack.c.l.b16 %v1936
  %v1976 = vunpack.c.l.b16 %v1937
  %v1977 = vunpack.c.l.b16 %v1938
  %v1978 = vunpack.c.l.b16 %v1939
  %v1979 = vunpack.c.l.b16 %v1940
  %v1980 = vunpack.c.l.b16 %v1941
  %v1981 = vunpack.c.l.b16 %v1942
  %v1982 = vunpack.c.l.b16 %v1943
  %v1983 = vunpack.c.l.b16 %v1944
  %v1984 = vunpack.c.l.b16 %v1945
  %v1985 = vunpack.c.l.b16 %v1946
  %v1986 = vunpack.c.l.b16 %v1947
  %v1987 = vunpack.c.l.b16 %v1948
  %v1988 = vpack.c.b16 %v1973, %v1972
  %v1989 = vpack.c.b16 %v1975, %v1974
  %v1990 = vpack.c.b16 %v1977, %v1976
  %v1991 = vpack.c.b16 %v1979, %v1978
  %v1992 = vpack.c.b16 %v1981, %v1980
  %v1993 = vpack.c.b16 %v1983, %v1982
  %v1994 = vpack.c.b16 %v1985, %v1984
  %v1995 = vpack.c.b16 %v1987, %v1986
  %2004 = vmatprep.subr.bf16.mxu0 0
  %2005 = vmatpush1.bf16.msra.mxu0 %v1988
  %2006 = vmatprep.subr.bf16.mxu0 0
  %2007 = vmatpush1.bf16.msra.mxu0 %v1989
  %2008 = vmatprep.subr.bf16.mxu0 0
  %2009 = vmatpush1.bf16.msra.mxu0 %v1990
  %2010 = vmatprep.subr.bf16.mxu0 0
  %2011 = vmatpush1.bf16.msra.mxu0 %v1991
  %2012 = vmatprep.subr.bf16.mxu0 0
  %2013 = vmatpush1.bf16.msra.mxu0 %v1992
  %2014 = vmatprep.subr.bf16.mxu0 0
  %2015 = vmatpush1.bf16.msra.mxu0 %v1993
  %2016 = vmatprep.subr.bf16.mxu0 0
  %2017 = vmatpush1.bf16.msra.mxu0 %v1994
  %2018 = vmatprep.subr.bf16.mxu0 0
  %2019 = vmatpush1.bf16.msra.mxu0 %v1995
  %2020 = vmatprep.subr.bf16.mxu0 0
  %2021 = vmatpush1.bf16.msra.mxu0 0
  %2022 = vmatprep.subr.bf16.mxu0 0
  %2023 = vmatpush1.bf16.msra.mxu0 0
  %2024 = vmatprep.subr.bf16.mxu0 0
  %2025 = vmatpush1.bf16.msra.mxu0 0
  %2026 = vmatprep.subr.bf16.mxu0 0
  %2027 = vmatpush1.bf16.msra.mxu0 0
  %2028 = vmatprep.subr.bf16.mxu0 0
  %2029 = vmatpush1.bf16.msra.mxu0 0
  %2030 = vmatprep.subr.bf16.mxu0 0
  %2031 = vmatpush1.bf16.msra.mxu0 0
  %2032 = vmatprep.subr.bf16.mxu0 0
  %2033 = vmatpush1.bf16.msra.mxu0 0
  %2034 = vmatprep.subr.bf16.mxu0 0
  %2035 = vmatpush1.bf16.msra.mxu0 0
  %2036 = vmatprep.mubr.bf16.mxu0 0
  %2037 = vmatmul.mubr.bf16.gmra.mrb[0].mxu0 %v1929
  %v2038 = vpop.f32.mrb[0].mxu0
  %v2039 = vadd.f32 %v1954, %v2038
  %v2040 = vpop.f32.mrb[0].mxu0
  %v2041 = vpop.f32.mrb[0].mxu0
  %v2042 = vadd.f32 %v1954, %v2041
  %v2043 = vpop.f32.mrb[0].mxu0
  %2044 = vmatprep.mubr.bf16.mxu0 0
  %2045 = vmatmul.mubr.bf16.gmra.mrb[0].mxu0 %v1930
  %v2046 = vpop.f32.mrb[0].mxu0
  %v2047 = vadd.f32 %v1954, %v2046
  %v2048 = vpop.f32.mrb[0].mxu0
  %v2049 = vpop.f32.mrb[0].mxu0
  %v2050 = vadd.f32 %v1954, %v2049
  %v2051 = vpop.f32.mrb[0].mxu0
  %2052 = vmatprep.mubr.bf16.mxu0 0
  %2053 = vmatmul.mubr.bf16.gmra.mrb[0].mxu0 %v1931
  %v2054 = vpop.f32.mrb[0].mxu0
  %v2055 = vadd.f32 %v1954, %v2054
  %v2056 = vpop.f32.mrb[0].mxu0
  %v2057 = vpop.f32.mrb[0].mxu0
  %v2058 = vadd.f32 %v1954, %v2057
  %v2059 = vpop.f32.mrb[0].mxu0
  %2060 = vmatprep.mubr.bf16.mxu0 0
  %2061 = vmatmul.mubr.bf16.gmra.mrb[0].mxu0 %v1932
  %v2062 = vpop.f32.mrb[0].mxu0
  %v2063 = vadd.f32 %v1954, %v2062
  %v2064 = vpop.f32.mrb[0].mxu0
  %v2065 = vpop.f32.mrb[0].mxu0
  %v2066 = vadd.f32 %v1954, %v2065
  %v2067 = vpop.f32.mrb[0].mxu0
  %2068 = vdwg.mxu0
  %2069 = vst [vmem:[#allocation2] sm:$0xff] %v2039
  %2070 = vst [vmem:[#allocation2 + $0x8] sm:$0xff] %v2042
  %2071 = vst [vmem:[#allocation2 + $0x10] sm:$0xff] %v2047
  %2072 = vst [vmem:[#allocation2 + $0x18] sm:$0xff] %v2050
  %2073 = vst [vmem:[#allocation2 + $0x20] sm:$0xff] %v2055
  %2074 = vst [vmem:[#allocation2 + $0x28] sm:$0xff] %v2058
  %2075 = vst [vmem:[#allocation2 + $0x30] sm:$0xff] %v2063
  %2076 = vst [vmem:[#allocation2 + $0x38] sm:$0xff] %v2066
  %s2077 = scalar_lea.vmem %s5, 64
  %v2078 = vld [vmem:[%s2077] sm:$0xf]
  %v2079 = vld [vmem:[%s2077 + $0x4] sm:$0xf]
  %v2080 = vld [vmem:[%s2077 + $0x8] sm:$0xf]
  %v2081 = vld [vmem:[%s2077 + $0xc] sm:$0xf]
  %v2082 = vld [vmem:[%s2077 + $0x10] sm:$0xf]
  %v2083 = vld [vmem:[%s2077 + $0x14] sm:$0xf]
  %v2084 = vld [vmem:[%s2077 + $0x18] sm:$0xf]
  %v2085 = vld [vmem:[%s2077 + $0x1c] sm:$0xf]
  %v2086 = vld [vmem:[%s2077 + $0x20] sm:$0xf]
  %v2087 = vld [vmem:[%s2077 + $0x24] sm:$0xf]
  %v2088 = vld [vmem:[%s2077 + $0x28] sm:$0xf]
  %v2089 = vld [vmem:[%s2077 + $0x2c] sm:$0xf]
  %v2090 = vld [vmem:[%s2077 + $0x30] sm:$0xf]
  %v2091 = vld [vmem:[%s2077 + $0x34] sm:$0xf]
  %v2092 = vld [vmem:[%s2077 + $0x38] sm:$0xf]
  %v2093 = vld [vmem:[%s2077 + $0x3c] sm:$0xf]
  %s2094 = scalar_lea.vmem %s7, 1
  %v2095 = vld [vmem:[%s2094] sm:$0x1]
  %v2097 = vlaneseq
  %v2098 = vshrl.u32 %v2097, 7
  %v2099 = vsub.s32 0, %v2098
  %v2100 = vrot.slane %v2095, %v2099
  %v2118 = vunpack.c.l.b16 %v2078
  %v2119 = vunpack.c.l.b16 %v2079
  %v2120 = vunpack.c.l.b16 %v2080
  %v2121 = vunpack.c.l.b16 %v2081
  %v2122 = vunpack.c.l.b16 %v2082
  %v2123 = vunpack.c.l.b16 %v2083
  %v2124 = vunpack.c.l.b16 %v2084
  %v2125 = vunpack.c.l.b16 %v2085
  %v2126 = vunpack.c.l.b16 %v2086
  %v2127 = vunpack.c.l.b16 %v2087
  %v2128 = vunpack.c.l.b16 %v2088
  %v2129 = vunpack.c.l.b16 %v2089
  %v2130 = vunpack.c.l.b16 %v2090
  %v2131 = vunpack.c.l.b16 %v2091
  %v2132 = vunpack.c.l.b16 %v2092
  %v2133 = vunpack.c.l.b16 %v2093
  %v2134 = vpack.c.b16 %v2119, %v2118
  %v2135 = vpack.c.b16 %v2121, %v2120
  %v2136 = vpack.c.b16 %v2123, %v2122
  %v2137 = vpack.c.b16 %v2125, %v2124
  %v2138 = vpack.c.b16 %v2127, %v2126
  %v2139 = vpack.c.b16 %v2129, %v2128
  %v2140 = vpack.c.b16 %v2131, %v2130
  %v2141 = vpack.c.b16 %v2133, %v2132
  %2150 = vmatprep.subr.bf16.mxu0 0
  %2151 = vmatpush1.bf16.msra.mxu0 %v2134
  %2152 = vmatprep.subr.bf16.mxu0 0
  %2153 = vmatpush1.bf16.msra.mxu0 %v2135
  %2154 = vmatprep.subr.bf16.mxu0 0
  %2155 = vmatpush1.bf16.msra.mxu0 %v2136
  %2156 = vmatprep.subr.bf16.mxu0 0
  %2157 = vmatpush1.bf16.msra.mxu0 %v2137
  %2158 = vmatprep.subr.bf16.mxu0 0
  %2159 = vmatpush1.bf16.msra.mxu0 %v2138
  %2160 = vmatprep.subr.bf16.mxu0 0
  %2161 = vmatpush1.bf16.msra.mxu0 %v2139
  %2162 = vmatprep.subr.bf16.mxu0 0
  %2163 = vmatpush1.bf16.msra.mxu0 %v2140
  %2164 = vmatprep.subr.bf16.mxu0 0
  %2165 = vmatpush1.bf16.msra.mxu0 %v2141
  %2166 = vmatprep.subr.bf16.mxu0 0
  %2167 = vmatpush1.bf16.msra.mxu0 0
  %2168 = vmatprep.subr.bf16.mxu0 0
  %2169 = vmatpush1.bf16.msra.mxu0 0
  %2170 = vmatprep.subr.bf16.mxu0 0
  %2171 = vmatpush1.bf16.msra.mxu0 0
  %2172 = vmatprep.subr.bf16.mxu0 0
  %2173 = vmatpush1.bf16.msra.mxu0 0
  %2174 = vmatprep.subr.bf16.mxu0 0
  %2175 = vmatpush1.bf16.msra.mxu0 0
  %2176 = vmatprep.subr.bf16.mxu0 0
  %2177 = vmatpush1.bf16.msra.mxu0 0
  %2178 = vmatprep.subr.bf16.mxu0 0
  %2179 = vmatpush1.bf16.msra.mxu0 0
  %2180 = vmatprep.subr.bf16.mxu0 0
  %2181 = vmatpush1.bf16.msra.mxu0 0
  %2182 = vmatprep.mubr.bf16.mxu0 0
  %2183 = vmatmul.mubr.bf16.gmra.mrb[0].mxu0 %v1929
  %v2184 = vpop.f32.mrb[0].mxu0
  %v2185 = vadd.f32 %v2100, %v2184
  %v2186 = vpop.f32.mrb[0].mxu0
  %v2187 = vpop.f32.mrb[0].mxu0
  %v2188 = vadd.f32 %v2100, %v2187
  %v2189 = vpop.f32.mrb[0].mxu0
  %2190 = vmatprep.mubr.bf16.mxu0 0
  %2191 = vmatmul.mubr.bf16.gmra.mrb[0].mxu0 %v1930
  %v2192 = vpop.f32.mrb[0].mxu0
  %v2193 = vadd.f32 %v2100, %v2192
  %v2194 = vpop.f32.mrb[0].mxu0
  %v2195 = vpop.f32.mrb[0].mxu0
  %v2196 = vadd.f32 %v2100, %v2195
  %v2197 = vpop.f32.mrb[0].mxu0
  %2198 = vmatprep.mubr.bf16.mxu0 0
  %2199 = vmatmul.mubr.bf16.gmra.mrb[0].mxu0 %v1931
  %v2200 = vpop.f32.mrb[0].mxu0
  %v2201 = vadd.f32 %v2100, %v2200
  %v2202 = vpop.f32.mrb[0].mxu0
  %v2203 = vpop.f32.mrb[0].mxu0
  %v2204 = vadd.f32 %v2100, %v2203
  %v2205 = vpop.f32.mrb[0].mxu0
  %2206 = vmatprep.mubr.bf16.mxu0 0
  %2207 = vmatmul.mubr.bf16.gmra.mrb[0].mxu0 %v1932
  %v2208 = vpop.f32.mrb[0].mxu0
  %v2209 = vadd.f32 %v2100, %v2208
  %v2210 = vpop.f32.mrb[0].mxu0
  %v2211 = vpop.f32.mrb[0].mxu0
  %v2212 = vadd.f32 %v2100, %v2211
  %v2213 = vpop.f32.mrb[0].mxu0
  %2214 = vdwg.mxu0
  %2215 = vst [vmem:[#allocation3] sm:$0xff] %v2185
  %2216 = vst [vmem:[#allocation3 + $0x8] sm:$0xff] %v2188
  %2217 = vst [vmem:[#allocation3 + $0x10] sm:$0xff] %v2193
  %2218 = vst [vmem:[#allocation3 + $0x18] sm:$0xff] %v2196
  %2219 = vst [vmem:[#allocation3 + $0x20] sm:$0xff] %v2201
  %2220 = vst [vmem:[#allocation3 + $0x28] sm:$0xff] %v2204
  %2221 = vst [vmem:[#allocation3 + $0x30] sm:$0xff] %v2209
  %2222 = vst [vmem:[#allocation3 + $0x38] sm:$0xff] %v2212
  %s2223 = scalar_lea.vmem %s5, 128
  %v2224 = vld [vmem:[%s2223] sm:$0xf]
  %v2225 = vld [vmem:[%s2223 + $0x4] sm:$0xf]
  %v2226 = vld [vmem:[%s2223 + $0x8] sm:$0xf]
  %v2227 = vld [vmem:[%s2223 + $0xc] sm:$0xf]
  %v2228 = vld [vmem:[%s2223 + $0x10] sm:$0xf]
  %v2229 = vld [vmem:[%s2223 + $0x14] sm:$0xf]
  %v2230 = vld [vmem:[%s2223 + $0x18] sm:$0xf]
  %v2231 = vld [vmem:[%s2223 + $0x1c] sm:$0xf]
  %v2232 = vld [vmem:[%s2223 + $0x20] sm:$0xf]
  %v2233 = vld [vmem:[%s2223 + $0x24] sm:$0xf]
  %v2234 = vld [vmem:[%s2223 + $0x28] sm:$0xf]
  %v2235 = vld [vmem:[%s2223 + $0x2c] sm:$0xf]
  %v2236 = vld [vmem:[%s2223 + $0x30] sm:$0xf]
  %v2237 = vld [vmem:[%s2223 + $0x34] sm:$0xf]
  %v2238 = vld [vmem:[%s2223 + $0x38] sm:$0xf]
  %v2239 = vld [vmem:[%s2223 + $0x3c] sm:$0xf]
  %s2240 = scalar_lea.vmem %s7, 2
  %v2241 = vld [vmem:[%s2240] sm:$0x1]
  %v2243 = vlaneseq
  %v2244 = vshrl.u32 %v2243, 7
  %v2245 = vsub.s32 0, %v2244
  %v2246 = vrot.slane %v2241, %v2245
  %v2264 = vunpack.c.l.b16 %v2224
  %v2265 = vunpack.c.l.b16 %v2225
  %v2266 = vunpack.c.l.b16 %v2226
  %v2267 = vunpack.c.l.b16 %v2227
  %v2268 = vunpack.c.l.b16 %v2228
  %v2269 = vunpack.c.l.b16 %v2229
  %v2270 = vunpack.c.l.b16 %v2230
  %v2271 = vunpack.c.l.b16 %v2231
  %v2272 = vunpack.c.l.b16 %v2232
  %v2273 = vunpack.c.l.b16 %v2233
  %v2274 = vunpack.c.l.b16 %v2234
  %v2275 = vunpack.c.l.b16 %v2235
  %v2276 = vunpack.c.l.b16 %v2236
  %v2277 = vunpack.c.l.b16 %v2237
  %v2278 = vunpack.c.l.b16 %v2238
  %v2279 = vunpack.c.l.b16 %v2239
  %v2280 = vpack.c.b16 %v2265, %v2264
  %v2281 = vpack.c.b16 %v2267, %v2266
  %v2282 = vpack.c.b16 %v2269, %v2268
  %v2283 = vpack.c.b16 %v2271, %v2270
  %v2284 = vpack.c.b16 %v2273, %v2272
  %v2285 = vpack.c.b16 %v2275, %v2274
  %v2286 = vpack.c.b16 %v2277, %v2276
  %v2287 = vpack.c.b16 %v2279, %v2278
  %2296 = vmatprep.subr.bf16.mxu0 0
  %2297 = vmatpush1.bf16.msra.mxu0 %v2280
  %2298 = vmatprep.subr.bf16.mxu0 0
  %2299 = vmatpush1.bf16.msra.mxu0 %v2281
  %2300 = vmatprep.subr.bf16.mxu0 0
  %2301 = vmatpush1.bf16.msra.mxu0 %v2282
  %2302 = vmatprep.subr.bf16.mxu0 0
  %2303 = vmatpush1.bf16.msra.mxu0 %v2283
  %2304 = vmatprep.subr.bf16.mxu0 0
  %2305 = vmatpush1.bf16.msra.mxu0 %v2284
  %2306 = vmatprep.subr.bf16.mxu0 0
  %2307 = vmatpush1.bf16.msra.mxu0 %v2285
  %2308 = vmatprep.subr.bf16.mxu0 0
  %2309 = vmatpush1.bf16.msra.mxu0 %v2286
  %2310 = vmatprep.subr.bf16.mxu0 0
  %2311 = vmatpush1.bf16.msra.mxu0 %v2287
  %2312 = vmatprep.subr.bf16.mxu0 0
  %2313 = vmatpush1.bf16.msra.mxu0 0
  %2314 = vmatprep.subr.bf16.mxu0 0
  %2315 = vmatpush1.bf16.msra.mxu0 0
  %2316 = vmatprep.subr.bf16.mxu0 0
  %2317 = vmatpush1.bf16.msra.mxu0 0
  %2318 = vmatprep.subr.bf16.mxu0 0
  %2319 = vmatpush1.bf16.msra.mxu0 0
  %2320 = vmatprep.subr.bf16.mxu0 0
  %2321 = vmatpush1.bf16.msra.mxu0 0
  %2322 = vmatprep.subr.bf16.mxu0 0
  %2323 = vmatpush1.bf16.msra.mxu0 0
  %2324 = vmatprep.subr.bf16.mxu0 0
  %2325 = vmatpush1.bf16.msra.mxu0 0
  %2326 = vmatprep.subr.bf16.mxu0 0
  %2327 = vmatpush1.bf16.msra.mxu0 0
  %2328 = vmatprep.mubr.bf16.mxu0 0
  %2329 = vmatmul.mubr.bf16.gmra.mrb[0].mxu0 %v1929
  %v2330 = vpop.f32.mrb[0].mxu0
  %v2331 = vadd.f32 %v2246, %v2330
  %v2332 = vpop.f32.mrb[0].mxu0
  %v2333 = vpop.f32.mrb[0].mxu0
  %v2334 = vadd.f32 %v2246, %v2333
  %v2335 = vpop.f32.mrb[0].mxu0
  %2336 = vmatprep.mubr.bf16.mxu0 0
  %2337 = vmatmul.mubr.bf16.gmra.mrb[0].mxu0 %v1930
  %v2338 = vpop.f32.mrb[0].mxu0
  %v2339 = vadd.f32 %v2246, %v2338
  %v2340 = vpop.f32.mrb[0].mxu0
  %v2341 = vpop.f32.mrb[0].mxu0
  %v2342 = vadd.f32 %v2246, %v2341
  %v2343 = vpop.f32.mrb[0].mxu0
  %2344 = vmatprep.mubr.bf16.mxu0 0
  %2345 = vmatmul.mubr.bf16.gmra.mrb[0].mxu0 %v1931
  %v2346 = vpop.f32.mrb[0].mxu0
  %v2347 = vadd.f32 %v2246, %v2346
  %v2348 = vpop.f32.mrb[0].mxu0
  %v2349 = vpop.f32.mrb[0].mxu0
  %v2350 = vadd.f32 %v2246, %v2349
  %v2351 = vpop.f32.mrb[0].mxu0
  %2352 = vmatprep.mubr.bf16.mxu0 0
  %2353 = vmatmul.mubr.bf16.gmra.mrb[0].mxu0 %v1932
  %v2354 = vpop.f32.mrb[0].mxu0
  %v2355 = vadd.f32 %v2246, %v2354
  %v2356 = vpop.f32.mrb[0].mxu0
  %v2357 = vpop.f32.mrb[0].mxu0
  %v2358 = vadd.f32 %v2246, %v2357
  %v2359 = vpop.f32.mrb[0].mxu0
  %2360 = vdwg.mxu0
  %2361 = vst [vmem:[#allocation4] sm:$0xff] %v2331
  %2362 = vst [vmem:[#allocation4 + $0x8] sm:$0xff] %v2334
  %2363 = vst [vmem:[#allocation4 + $0x10] sm:$0xff] %v2339
  %2364 = vst [vmem:[#allocation4 + $0x18] sm:$0xff] %v2342
  %2365 = vst [vmem:[#allocation4 + $0x20] sm:$0xff] %v2347
  %2366 = vst [vmem:[#allocation4 + $0x28] sm:$0xff] %v2350
  %2367 = vst [vmem:[#allocation4 + $0x30] sm:$0xff] %v2355
  %2368 = vst [vmem:[#allocation4 + $0x38] sm:$0xff] %v2358
  %v2369 = vld [vmem:[%s6] sm:$0xf]
  %v2370 = vld [vmem:[%s6 + $0x4] sm:$0xf]
  %v2371 = vld [vmem:[%s6 + $0x8] sm:$0xf]
  %v2372 = vld [vmem:[%s6 + $0xc] sm:$0xf]
  %v2373 = vld [vmem:[%s6 + $0x10] sm:$0xf]
  %v2374 = vld [vmem:[%s6 + $0x14] sm:$0xf]
  %v2375 = vld [vmem:[%s6 + $0x18] sm:$0xf]
  %v2376 = vld [vmem:[%s6 + $0x1c] sm:$0xf]
  %v2377 = vld [vmem:[%s6 + $0x20] sm:$0xf]
  %v2378 = vld [vmem:[%s6 + $0x24] sm:$0xf]
  %v2379 = vld [vmem:[%s6 + $0x28] sm:$0xf]
  %v2380 = vld [vmem:[%s6 + $0x2c] sm:$0xf]
  %v2381 = vld [vmem:[%s6 + $0x30] sm:$0xf]
  %v2382 = vld [vmem:[%s6 + $0x34] sm:$0xf]
  %v2383 = vld [vmem:[%s6 + $0x38] sm:$0xf]
  %v2384 = vld [vmem:[%s6 + $0x3c] sm:$0xf]
  %s2385 = scalar_lea.vmem %s6, 64
  %v2386 = vld [vmem:[%s2385] sm:$0xf]
  %v2387 = vld [vmem:[%s2385 + $0x4] sm:$0xf]
  %v2388 = vld [vmem:[%s2385 + $0x8] sm:$0xf]
  %v2389 = vld [vmem:[%s2385 + $0xc] sm:$0xf]
  %v2390 = vld [vmem:[%s2385 + $0x10] sm:$0xf]
  %v2391 = vld [vmem:[%s2385 + $0x14] sm:$0xf]
  %v2392 = vld [vmem:[%s2385 + $0x18] sm:$0xf]
  %v2393 = vld [vmem:[%s2385 + $0x1c] sm:$0xf]
  %v2394 = vld [vmem:[%s2385 + $0x20] sm:$0xf]
  %v2395 = vld [vmem:[%s2385 + $0x24] sm:$0xf]
  %v2396 = vld [vmem:[%s2385 + $0x28] sm:$0xf]
  %v2397 = vld [vmem:[%s2385 + $0x2c] sm:$0xf]
  %v2398 = vld [vmem:[%s2385 + $0x30] sm:$0xf]
  %v2399 = vld [vmem:[%s2385 + $0x34] sm:$0xf]
  %v2400 = vld [vmem:[%s2385 + $0x38] sm:$0xf]
  %v2401 = vld [vmem:[%s2385 + $0x3c] sm:$0xf]
  %s2402 = scalar_lea.vmem %s6, 128
  %v2403 = vld [vmem:[%s2402] sm:$0xf]
  %v2404 = vld [vmem:[%s2402 + $0x4] sm:$0xf]
  %v2405 = vld [vmem:[%s2402 + $0x8] sm:$0xf]
  %v2406 = vld [vmem:[%s2402 + $0xc] sm:$0xf]
  %v2407 = vld [vmem:[%s2402 + $0x10] sm:$0xf]
  %v2408 = vld [vmem:[%s2402 + $0x14] sm:$0xf]
  %v2409 = vld [vmem:[%s2402 + $0x18] sm:$0xf]
  %v2410 = vld [vmem:[%s2402 + $0x1c] sm:$0xf]
  %v2411 = vld [vmem:[%s2402 + $0x20] sm:$0xf]
  %v2412 = vld [vmem:[%s2402 + $0x24] sm:$0xf]
  %v2413 = vld [vmem:[%s2402 + $0x28] sm:$0xf]
  %v2414 = vld [vmem:[%s2402 + $0x2c] sm:$0xf]
  %v2415 = vld [vmem:[%s2402 + $0x30] sm:$0xf]
  %v2416 = vld [vmem:[%s2402 + $0x34] sm:$0xf]
  %v2417 = vld [vmem:[%s2402 + $0x38] sm:$0xf]
  %v2418 = vld [vmem:[%s2402 + $0x3c] sm:$0xf]
  %v2419 = vld [vmem:[%s8] sm:$0x1]
  %2420 = vst [vmem:[#allocation6] sm:$0xff] 0.0
  %v2421 = vld [vmem:[#allocation6] sm:$0xff]
  %v2422 = vpack.c.bf16 %v2421, %v2421
  %v2439 = vunpack.c.l.b16 %v2369
  %v2440 = vunpack.c.l.b16 %v2370
  %v2441 = vunpack.c.l.b16 %v2371
  %v2442 = vunpack.c.l.b16 %v2372
  %v2443 = vunpack.c.l.b16 %v2373
  %v2444 = vunpack.c.l.b16 %v2374
  %v2445 = vunpack.c.l.b16 %v2375
  %v2446 = vunpack.c.l.b16 %v2376
  %v2447 = vunpack.c.l.b16 %v2377
  %v2448 = vunpack.c.l.b16 %v2378
  %v2449 = vunpack.c.l.b16 %v2379
  %v2450 = vunpack.c.l.b16 %v2380
  %v2451 = vunpack.c.l.b16 %v2381
  %v2452 = vunpack.c.l.b16 %v2382
  %v2453 = vunpack.c.l.b16 %v2383
  %v2454 = vunpack.c.l.b16 %v2384
  %v2455 = vpack.c.b16 %v2440, %v2439
  %v2456 = vpack.c.b16 %v2442, %v2441
  %v2457 = vpack.c.b16 %v2444, %v2443
  %v2458 = vpack.c.b16 %v2446, %v2445
  %v2459 = vpack.c.b16 %v2448, %v2447
  %v2460 = vpack.c.b16 %v2450, %v2449
  %v2461 = vpack.c.b16 %v2452, %v2451
  %v2462 = vpack.c.b16 %v2454, %v2453
  %2471 = vmatprep.subr.bf16.mxu0 0
  %2472 = vmatpush1.bf16.msra.mxu0 %v2455
  %2473 = vmatprep.subr.bf16.mxu0 0
  %2474 = vmatpush1.bf16.msra.mxu0 %v2456
  %2475 = vmatprep.subr.bf16.mxu0 0
  %2476 = vmatpush1.bf16.msra.mxu0 %v2457
  %2477 = vmatprep.subr.bf16.mxu0 0
  %2478 = vmatpush1.bf16.msra.mxu0 %v2458
  %2479 = vmatprep.subr.bf16.mxu0 0
  %2480 = vmatpush1.bf16.msra.mxu0 %v2459
  %2481 = vmatprep.subr.bf16.mxu0 0
  %2482 = vmatpush1.bf16.msra.mxu0 %v2460
  %2483 = vmatprep.subr.bf16.mxu0 0
  %2484 = vmatpush1.bf16.msra.mxu0 %v2461
  %2485 = vmatprep.subr.bf16.mxu0 0
  %2486 = vmatpush1.bf16.msra.mxu0 %v2462
  %2487 = vmatprep.subr.bf16.mxu0 0
  %2488 = vmatpush1.bf16.msra.mxu0 0
  %2489 = vmatprep.subr.bf16.mxu0 0
  %2490 = vmatpush1.bf16.msra.mxu0 0
  %2491 = vmatprep.subr.bf16.mxu0 0
  %2492 = vmatpush1.bf16.msra.mxu0 0
  %2493 = vmatprep.subr.bf16.mxu0 0
  %2494 = vmatpush1.bf16.msra.mxu0 0
  %2495 = vmatprep.subr.bf16.mxu0 0
  %2496 = vmatpush1.bf16.msra.mxu0 0
  %2497 = vmatprep.subr.bf16.mxu0 0
  %2498 = vmatpush1.bf16.msra.mxu0 0
  %2499 = vmatprep.subr.bf16.mxu0 0
  %2500 = vmatpush1.bf16.msra.mxu0 0
  %2501 = vmatprep.subr.bf16.mxu0 0
  %2502 = vmatpush1.bf16.msra.mxu0 0
  %2503 = vmatprep.mubr.bf16.mxu0 0
  %2504 = vmatmul.mubr.bf16.gmra.mrb[0].mxu0 %v2422
  %v2505 = vpop.f32.mrb[0].mxu0
  %v2506 = vadd.f32 0.0, %v2505
  %v2507 = vpop.f32.mrb[0].mxu0
  %v2508 = vpop.f32.mrb[0].mxu0
  %v2509 = vpop.f32.mrb[0].mxu0
  %2510 = vdwg.mxu0
  %v2527 = vunpack.c.l.b16 %v2386
  %v2528 = vunpack.c.l.b16 %v2387
  %v2529 = vunpack.c.l.b16 %v2388
  %v2530 = vunpack.c.l.b16 %v2389
  %v2531 = vunpack.c.l.b16 %v2390
  %v2532 = vunpack.c.l.b16 %v2391
  %v2533 = vunpack.c.l.b16 %v2392
  %v2534 = vunpack.c.l.b16 %v2393
  %v2535 = vunpack.c.l.b16 %v2394
  %v2536 = vunpack.c.l.b16 %v2395
  %v2537 = vunpack.c.l.b16 %v2396
  %v2538 = vunpack.c.l.b16 %v2397
  %v2539 = vunpack.c.l.b16 %v2398
  %v2540 = vunpack.c.l.b16 %v2399
  %v2541 = vunpack.c.l.b16 %v2400
  %v2542 = vunpack.c.l.b16 %v2401
  %v2543 = vpack.c.b16 %v2528, %v2527
  %v2544 = vpack.c.b16 %v2530, %v2529
  %v2545 = vpack.c.b16 %v2532, %v2531
  %v2546 = vpack.c.b16 %v2534, %v2533
  %v2547 = vpack.c.b16 %v2536, %v2535
  %v2548 = vpack.c.b16 %v2538, %v2537
  %v2549 = vpack.c.b16 %v2540, %v2539
  %v2550 = vpack.c.b16 %v2542, %v2541
  %2559 = vmatprep.subr.bf16.mxu0 0
  %2560 = vmatpush1.bf16.msra.mxu0 %v2543
  %2561 = vmatprep.subr.bf16.mxu0 0
  %2562 = vmatpush1.bf16.msra.mxu0 %v2544
  %2563 = vmatprep.subr.bf16.mxu0 0
  %2564 = vmatpush1.bf16.msra.mxu0 %v2545
  %2565 = vmatprep.subr.bf16.mxu0 0
  %2566 = vmatpush1.bf16.msra.mxu0 %v2546
  %2567 = vmatprep.subr.bf16.mxu0 0
  %2568 = vmatpush1.bf16.msra.mxu0 %v2547
  %2569 = vmatprep.subr.bf16.mxu0 0
  %2570 = vmatpush1.bf16.msra.mxu0 %v2548
  %2571 = vmatprep.subr.bf16.mxu0 0
  %2572 = vmatpush1.bf16.msra.mxu0 %v2549
  %2573 = vmatprep.subr.bf16.mxu0 0
  %2574 = vmatpush1.bf16.msra.mxu0 %v2550
  %2575 = vmatprep.subr.bf16.mxu0 0
  %2576 = vmatpush1.bf16.msra.mxu0 0
  %2577 = vmatprep.subr.bf16.mxu0 0
  %2578 = vmatpush1.bf16.msra.mxu0 0
  %2579 = vmatprep.subr.bf16.mxu0 0
  %2580 = vmatpush1.bf16.msra.mxu0 0
  %2581 = vmatprep.subr.bf16.mxu0 0
  %2582 = vmatpush1.bf16.msra.mxu0 0
  %2583 = vmatprep.subr.bf16.mxu0 0
  %2584 = vmatpush1.bf16.msra.mxu0 0
  %2585 = vmatprep.subr.bf16.mxu0 0
  %2586 = vmatpush1.bf16.msra.mxu0 0
  %2587 = vmatprep.subr.bf16.mxu0 0
  %2588 = vmatpush1.bf16.msra.mxu0 0
  %2589 = vmatprep.subr.bf16.mxu0 0
  %2590 = vmatpush1.bf16.msra.mxu0 0
  %2591 = vmatprep.mubr.bf16.mxu0 0
  %2592 = vmatmul.mubr.bf16.gmra.mrb[0].mxu0 %v2422
  %v2593 = vpop.f32.mrb[0].mxu0
  %v2594 = vadd.f32 0.0, %v2593
  %v2595 = vpop.f32.mrb[0].mxu0
  %v2596 = vpop.f32.mrb[0].mxu0
  %v2597 = vpop.f32.mrb[0].mxu0
  %2598 = vdwg.mxu0
  %v2600 = vlaneseq
  %v2601 = vshrl.u32 %v2600, 7
  %v2602 = vsub.s32 0, %v2601
  %v2603 = vrot.slane %v2419, %v2602
  %v2621 = vunpack.c.l.b16 %v2403
  %v2622 = vunpack.c.l.b16 %v2404
  %v2623 = vunpack.c.l.b16 %v2405
  %v2624 = vunpack.c.l.b16 %v2406
  %v2625 = vunpack.c.l.b16 %v2407
  %v2626 = vunpack.c.l.b16 %v2408
  %v2627 = vunpack.c.l.b16 %v2409
  %v2628 = vunpack.c.l.b16 %v2410
  %v2629 = vunpack.c.l.b16 %v2411
  %v2630 = vunpack.c.l.b16 %v2412
  %v2631 = vunpack.c.l.b16 %v2413
  %v2632 = vunpack.c.l.b16 %v2414
  %v2633 = vunpack.c.l.b16 %v2415
  %v2634 = vunpack.c.l.b16 %v2416
  %v2635 = vunpack.c.l.b16 %v2417
  %v2636 = vunpack.c.l.b16 %v2418
  %v2637 = vpack.c.b16 %v2622, %v2621
  %v2638 = vpack.c.b16 %v2624, %v2623
  %v2639 = vpack.c.b16 %v2626, %v2625
  %v2640 = vpack.c.b16 %v2628, %v2627
  %v2641 = vpack.c.b16 %v2630, %v2629
  %v2642 = vpack.c.b16 %v2632, %v2631
  %v2643 = vpack.c.b16 %v2634, %v2633
  %v2644 = vpack.c.b16 %v2636, %v2635
  %2653 = vmatprep.subr.bf16.mxu0 0
  %2654 = vmatpush1.bf16.msra.mxu0 %v2637
  %2655 = vmatprep.subr.bf16.mxu0 0
  %2656 = vmatpush1.bf16.msra.mxu0 %v2638
  %2657 = vmatprep.subr.bf16.mxu0 0
  %2658 = vmatpush1.bf16.msra.mxu0 %v2639
  %2659 = vmatprep.subr.bf16.mxu0 0
  %2660 = vmatpush1.bf16.msra.mxu0 %v2640
  %2661 = vmatprep.subr.bf16.mxu0 0
  %2662 = vmatpush1.bf16.msra.mxu0 %v2641
  %2663 = vmatprep.subr.bf16.mxu0 0
  %2664 = vmatpush1.bf16.msra.mxu0 %v2642
  %2665 = vmatprep.subr.bf16.mxu0 0
  %2666 = vmatpush1.bf16.msra.mxu0 %v2643
  %2667 = vmatprep.subr.bf16.mxu0 0
  %2668 = vmatpush1.bf16.msra.mxu0 %v2644
  %2669 = vmatprep.subr.bf16.mxu0 0
  %2670 = vmatpush1.bf16.msra.mxu0 0
  %2671 = vmatprep.subr.bf16.mxu0 0
  %2672 = vmatpush1.bf16.msra.mxu0 0
  %2673 = vmatprep.subr.bf16.mxu0 0
  %2674 = vmatpush1.bf16.msra.mxu0 0
  %2675 = vmatprep.subr.bf16.mxu0 0
  %2676 = vmatpush1.bf16.msra.mxu0 0
  %2677 = vmatprep.subr.bf16.mxu0 0
  %2678 = vmatpush1.bf16.msra.mxu0 0
  %2679 = vmatprep.subr.bf16.mxu0 0
  %2680 = vmatpush1.bf16.msra.mxu0 0
  %2681 = vmatprep.subr.bf16.mxu0 0
  %2682 = vmatpush1.bf16.msra.mxu0 0
  %2683 = vmatprep.subr.bf16.mxu0 0
  %2684 = vmatpush1.bf16.msra.mxu0 0
  %2685 = vmatprep.mubr.bf16.mxu0 0
  %2686 = vmatmul.mubr.bf16.gmra.mrb[0].mxu0 %v2422
  %v2687 = vpop.f32.mrb[0].mxu0
  %v2688 = vadd.f32 %v2603, %v2687
  %v2689 = vpop.f32.mrb[0].mxu0
  %v2690 = vpop.f32.mrb[0].mxu0
  %v2691 = vpop.f32.mrb[0].mxu0
  %2692 = vdwg.mxu0
  %v2693 = vld [vmem:[#allocation2] sm:$0xff]
  %v2694 = vadd.f32 %v2693, %v2506
  %v2695 = vxor.u32 %v2694, 2147483648
  %v2696 = vmul.f32 %v2695, 1.442695
  %v2697 = vpow.pop %v2696
  %v2698 = vadd.f32 %v2697, 1.0
  %v2699 = vrcp.pop %v2698
  %v2700 = vmul.f32 1.0, %v2699
  %v2701 = vld [vmem:[#allocation3] sm:$0xff]
  %v2702 = vadd.f32 %v2701, %v2594
  %v2703 = vxor.u32 %v2702, 2147483648
  %v2704 = vmul.f32 %v2703, 1.442695
  %v2705 = vpow.pop %v2704
  %v2706 = vadd.f32 %v2705, 1.0
  %v2707 = vrcp.pop %v2706
  %v2708 = vmul.f32 1.0, %v2707
  %v2709 = vld [vmem:[#allocation4] sm:$0xff]
  %v2710 = vmul.f32 %v2700, %v2688
  %v2711 = vadd.f32 %v2709, %v2710
  %v2712 = vtanh.pop %v2711
  %v2713 = vsub.f32 1.0, %v2708
  %v2714 = vmul.f32 %v2713, %v2712
  %v2715 = vmul.f32 %v2708, %v2421
  %v2716 = vadd.f32 %v2714, %v2715
  %2717 = vst [vmem:[#allocation6] sm:$0xff] %v2716
  %v2718 = vld [vmem:[#allocation6] sm:$0xff]
  %v2719 = vpack.c.bf16 %v2718, %v2718
  %2720 = vmatprep.subr.bf16.mxu0 0
  %2721 = vmatpush1.bf16.msra.mxu0 %v2455
  %2722 = vmatprep.subr.bf16.mxu0 0
  %2723 = vmatpush1.bf16.msra.mxu0 %v2456
  %2724 = vmatprep.subr.bf16.mxu0 0
  %2725 = vmatpush1.bf16.msra.mxu0 %v2457
  %2726 = vmatprep.subr.bf16.mxu0 0
  %2727 = vmatpush1.bf16.msra.mxu0 %v2458
  %2728 = vmatprep.subr.bf16.mxu0 0
  %2729 = vmatpush1.bf16.msra.mxu0 %v2459
  %2730 = vmatprep.subr.bf16.mxu0 0
  %2731 = vmatpush1.bf16.msra.mxu0 %v2460
  %2732 = vmatprep.subr.bf16.mxu0 0
  %2733 = vmatpush1.bf16.msra.mxu0 %v2461
  %2734 = vmatprep.subr.bf16.mxu0 0
  %2735 = vmatpush1.bf16.msra.mxu0 %v2462
  %2736 = vmatprep.subr.bf16.mxu0 0
  %2737 = vmatpush1.bf16.msra.mxu0 0
  %2738 = vmatprep.subr.bf16.mxu0 0
  %2739 = vmatpush1.bf16.msra.mxu0 0
  %2740 = vmatprep.subr.bf16.mxu0 0
  %2741 = vmatpush1.bf16.msra.mxu0 0
  %2742 = vmatprep.subr.bf16.mxu0 0
  %2743 = vmatpush1.bf16.msra.mxu0 0
  %2744 = vmatprep.subr.bf16.mxu0 0
  %2745 = vmatpush1.bf16.msra.mxu0 0
  %2746 = vmatprep.subr.bf16.mxu0 0
  %2747 = vmatpush1.bf16.msra.mxu0 0
  %2748 = vmatprep.subr.bf16.mxu0 0
  %2749 = vmatpush1.bf16.msra.mxu0 0
  %2750 = vmatprep.subr.bf16.mxu0 0
  %2751 = vmatpush1.bf16.msra.mxu0 0
  %2752 = vmatprep.mubr.bf16.mxu0 0
  %2753 = vmatmul.mubr.bf16.gmra.mrb[0].mxu0 %v2719
  %v2754 = vpop.f32.mrb[0].mxu0
  %v2755 = vadd.f32 0.0, %v2754
  %v2756 = vpop.f32.mrb[0].mxu0
  %v2757 = vpop.f32.mrb[0].mxu0
  %v2758 = vpop.f32.mrb[0].mxu0
  %2759 = vdwg.mxu0
  %2760 = vmatprep.subr.bf16.mxu0 0
  %2761 = vmatpush1.bf16.msra.mxu0 %v2543
  %2762 = vmatprep.subr.bf16.mxu0 0
  %2763 = vmatpush1.bf16.msra.mxu0 %v2544
  %2764 = vmatprep.subr.bf16.mxu0 0
  %2765 = vmatpush1.bf16.msra.mxu0 %v2545
  %2766 = vmatprep.subr.bf16.mxu0 0
  %2767 = vmatpush1.bf16.msra.mxu0 %v2546
  %2768 = vmatprep.subr.bf16.mxu0 0
  %2769 = vmatpush1.bf16.msra.mxu0 %v2547
  %2770 = vmatprep.subr.bf16.mxu0 0
  %2771 = vmatpush1.bf16.msra.mxu0 %v2548
  %2772 = vmatprep.subr.bf16.mxu0 0
  %2773 = vmatpush1.bf16.msra.mxu0 %v2549
  %2774 = vmatprep.subr.bf16.mxu0 0
  %2775 = vmatpush1.bf16.msra.mxu0 %v2550
  %2776 = vmatprep.subr.bf16.mxu0 0
  %2777 = vmatpush1.bf16.msra.mxu0 0
  %2778 = vmatprep.subr.bf16.mxu0 0
  %2779 = vmatpush1.bf16.msra.mxu0 0
  %2780 = vmatprep.subr.bf16.mxu0 0
  %2781 = vmatpush1.bf16.msra.mxu0 0
  %2782 = vmatprep.subr.bf16.mxu0 0
  %2783 = vmatpush1.bf16.msra.mxu0 0
  %2784 = vmatprep.subr.bf16.mxu0 0
  %2785 = vmatpush1.bf16.msra.mxu0 0
  %2786 = vmatprep.subr.bf16.mxu0 0
  %2787 = vmatpush1.bf16.msra.mxu0 0
  %2788 = vmatprep.subr.bf16.mxu0 0
  %2789 = vmatpush1.bf16.msra.mxu0 0
  %2790 = vmatprep.subr.bf16.mxu0 0
  %2791 = vmatpush1.bf16.msra.mxu0 0
  %2792 = vmatprep.mubr.bf16.mxu0 0
  %2793 = vmatmul.mubr.bf16.gmra.mrb[0].mxu0 %v2719
  %v2794 = vpop.f32.mrb[0].mxu0
  %v2795 = vadd.f32 0.0, %v2794
  %v2796 = vpop.f32.mrb[0].mxu0
  %v2797 = vpop.f32.mrb[0].mxu0
  %v2798 = vpop.f32.mrb[0].mxu0
  %2799 = vdwg.mxu0
  %2800 = vmatprep.subr.bf16.mxu0 0
  %2801 = vmatpush1.bf16.msra.mxu0 %v2637
  %2802 = vmatprep.subr.bf16.mxu0 0
  %2803 = vmatpush1.bf16.msra.mxu0 %v2638
  %2804 = vmatprep.subr.bf16.mxu0 0
  %2805 = vmatpush1.bf16.msra.mxu0 %v2639
  %2806 = vmatprep.subr.bf16.mxu0 0
  %2807 = vmatpush1.bf16.msra.mxu0 %v2640
  %2808 = vmatprep.subr.bf16.mxu0 0
  %2809 = vmatpush1.bf16.msra.mxu0 %v2641
  %2810 = vmatprep.subr.bf16.mxu0 0
  %2811 = vmatpush1.bf16.msra.mxu0 %v2642
  %2812 = vmatprep.subr.bf16.mxu0 0
  %2813 = vmatpush1.bf16.msra.mxu0 %v2643
  %2814 = vmatprep.subr.bf16.mxu0 0
  %2815 = vmatpush1.bf16.msra.mxu0 %v2644
  %2816 = vmatprep.subr.bf16.mxu0 0
  %2817 = vmatpush1.bf16.msra.mxu0 0
  %2818 = vmatprep.subr.bf16.mxu0 0
  %2819 = vmatpush1.bf16.msra.mxu0 0
  %2820 = vmatprep.subr.bf16.mxu0 0
  %2821 = vmatpush1.bf16.msra.mxu0 0
  %2822 = vmatprep.subr.bf16.mxu0 0
  %2823 = vmatpush1.bf16.msra.mxu0 0
  %2824 = vmatprep.subr.bf16.mxu0 0
  %2825 = vmatpush1.bf16.msra.mxu0 0
  %2826 = vmatprep.subr.bf16.mxu0 0
  %2827 = vmatpush1.bf16.msra.mxu0 0
  %2828 = vmatprep.subr.bf16.mxu0 0
  %2829 = vmatpush1.bf16.msra.mxu0 0
  %2830 = vmatprep.subr.bf16.mxu0 0
  %2831 = vmatpush1.bf16.msra.mxu0 0
  %2832 = vmatprep.mubr.bf16.mxu0 0
  %2833 = vmatmul.mubr.bf16.gmra.mrb[0].mxu0 %v2719
  %v2834 = vpop.f32.mrb[0].mxu0
  %v2835 = vadd.f32 %v2603, %v2834
  %v2836 = vpop.f32.mrb[0].mxu0
  %v2837 = vpop.f32.mrb[0].mxu0
  %v2838 = vpop.f32.mrb[0].mxu0
  %2839 = vdwg.mxu0
  %v2840 = vld [vmem:[%s979] sm:$0xff]
  %v2841 = vadd.f32 %v2840, %v2755
  %v2842 = vxor.u32 %v2841, 2147483648
  %v2843 = vmul.f32 %v2842, 1.442695
  %v2844 = vpow.pop %v2843
  %v2845 = vadd.f32 %v2844, 1.0
  %v2846 = vrcp.pop %v2845
  %v2847 = vmul.f32 1.0, %v2846
  %v2848 = vld [vmem:[%s988] sm:$0xff]
  %v2849 = vadd.f32 %v2848, %v2795
  %v2850 = vxor.u32 %v2849, 2147483648
  %v2851 = vmul.f32 %v2850, 1.442695
  %v2852 = vpow.pop %v2851
  %v2853 = vadd.f32 %v2852, 1.0
  %v2854 = vrcp.pop %v2853
  %v2855 = vmul.f32 1.0, %v2854
  %v2856 = vld [vmem:[%s997] sm:$0xff]
  %v2857 = vmul.f32 %v2847, %v2835
  %v2858 = vadd.f32 %v2856, %v2857
  %v2859 = vtanh.pop %v2858
  %v2860 = vsub.f32 1.0, %v2855
  %v2861 = vmul.f32 %v2860, %v2859
  %v2862 = vmul.f32 %v2855, %v2718
  %v2863 = vadd.f32 %v2861, %v2862
  %2864 = vst [vmem:[#allocation6] sm:$0xff] %v2863
  %v2865 = vld [vmem:[#allocation6] sm:$0xff]
  %v2866 = vpack.c.bf16 %v2865, %v2865
  %2867 = vmatprep.subr.bf16.mxu0 0
  %2868 = vmatpush1.bf16.msra.mxu0 %v2455
  %2869 = vmatprep.subr.bf16.mxu0 0
  %2870 = vmatpush1.bf16.msra.mxu0 %v2456
  %2871 = vmatprep.subr.bf16.mxu0 0
  %2872 = vmatpush1.bf16.msra.mxu0 %v2457
  %2873 = vmatprep.subr.bf16.mxu0 0
  %2874 = vmatpush1.bf16.msra.mxu0 %v2458
  %2875 = vmatprep.subr.bf16.mxu0 0
  %2876 = vmatpush1.bf16.msra.mxu0 %v2459
  %2877 = vmatprep.subr.bf16.mxu0 0
  %2878 = vmatpush1.bf16.msra.mxu0 %v2460
  %2879 = vmatprep.subr.bf16.mxu0 0
  %2880 = vmatpush1.bf16.msra.mxu0 %v2461
  %2881 = vmatprep.subr.bf16.mxu0 0
  %2882 = vmatpush1.bf16.msra.mxu0 %v2462
  %2883 = vmatprep.subr.bf16.mxu0 0
  %2884 = vmatpush1.bf16.msra.mxu0 0
  %2885 = vmatprep.subr.bf16.mxu0 0
  %2886 = vmatpush1.bf16.msra.mxu0 0
  %2887 = vmatprep.subr.bf16.mxu0 0
  %2888 = vmatpush1.bf16.msra.mxu0 0
  %2889 = vmatprep.subr.bf16.mxu0 0
  %2890 = vmatpush1.bf16.msra.mxu0 0
  %2891 = vmatprep.subr.bf16.mxu0 0
  %2892 = vmatpush1.bf16.msra.mxu0 0
  %2893 = vmatprep.subr.bf16.mxu0 0
  %2894 = vmatpush1.bf16.msra.mxu0 0
  %2895 = vmatprep.subr.bf16.mxu0 0
  %2896 = vmatpush1.bf16.msra.mxu0 0
  %2897 = vmatprep.subr.bf16.mxu0 0
  %2898 = vmatpush1.bf16.msra.mxu0 0
  %2899 = vmatprep.mubr.bf16.mxu0 0
  %2900 = vmatmul.mubr.bf16.gmra.mrb[0].mxu0 %v2866
  %v2901 = vpop.f32.mrb[0].mxu0
  %v2902 = vadd.f32 0.0, %v2901
  %v2903 = vpop.f32.mrb[0].mxu0
  %v2904 = vpop.f32.mrb[0].mxu0
  %v2905 = vpop.f32.mrb[0].mxu0
  %2906 = vdwg.mxu0
  %2907 = vmatprep.subr.bf16.mxu0 0
  %2908 = vmatpush1.bf16.msra.mxu0 %v2543
  %2909 = vmatprep.subr.bf16.mxu0 0
  %2910 = vmatpush1.bf16.msra.mxu0 %v2544
  %2911 = vmatprep.subr.bf16.mxu0 0
  %2912 = vmatpush1.bf16.msra.mxu0 %v2545
  %2913 = vmatprep.subr.bf16.mxu0 0
  %2914 = vmatpush1.bf16.msra.mxu0 %v2546
  %2915 = vmatprep.subr.bf16.mxu0 0
  %2916 = vmatpush1.bf16.msra.mxu0 %v2547
  %2917 = vmatprep.subr.bf16.mxu0 0
  %2918 = vmatpush1.bf16.msra.mxu0 %v2548
  %2919 = vmatprep.subr.bf16.mxu0 0
  %2920 = vmatpush1.bf16.msra.mxu0 %v2549
  %2921 = vmatprep.subr.bf16.mxu0 0
  %2922 = vmatpush1.bf16.msra.mxu0 %v2550
  %2923 = vmatprep.subr.bf16.mxu0 0
  %2924 = vmatpush1.bf16.msra.mxu0 0
  %2925 = vmatprep.subr.bf16.mxu0 0
  %2926 = vmatpush1.bf16.msra.mxu0 0
  %2927 = vmatprep.subr.bf16.mxu0 0
  %2928 = vmatpush1.bf16.msra.mxu0 0
  %2929 = vmatprep.subr.bf16.mxu0 0
  %2930 = vmatpush1.bf16.msra.mxu0 0
  %2931 = vmatprep.subr.bf16.mxu0 0
  %2932 = vmatpush1.bf16.msra.mxu0 0
  %2933 = vmatprep.subr.bf16.mxu0 0
  %2934 = vmatpush1.bf16.msra.mxu0 0
  %2935 = vmatprep.subr.bf16.mxu0 0
  %2936 = vmatpush1.bf16.msra.mxu0 0
  %2937 = vmatprep.subr.bf16.mxu0 0
  %2938 = vmatpush1.bf16.msra.mxu0 0
  %2939 = vmatprep.mubr.bf16.mxu0 0
  %2940 = vmatmul.mubr.bf16.gmra.mrb[0].mxu0 %v2866
  %v2941 = vpop.f32.mrb[0].mxu0
  %v2942 = vadd.f32 0.0, %v2941
  %v2943 = vpop.f32.mrb[0].mxu0
  %v2944 = vpop.f32.mrb[0].mxu0
  %v2945 = vpop.f32.mrb[0].mxu0
  %2946 = vdwg.mxu0
  %2947 = vmatprep.subr.bf16.mxu0 0
  %2948 = vmatpush1.bf16.msra.mxu0 %v2637
  %2949 = vmatprep.subr.bf16.mxu0 0
  %2950 = vmatpush1.bf16.msra.mxu0 %v2638
  %2951 = vmatprep.subr.bf16.mxu0 0
  %2952 = vmatpush1.bf16.msra.mxu0 %v2639
  %2953 = vmatprep.subr.bf16.mxu0 0
  %2954 = vmatpush1.bf16.msra.mxu0 %v2640
  %2955 = vmatprep.subr.bf16.mxu0 0
  %2956 = vmatpush1.bf16.msra.mxu0 %v2641
  %2957 = vmatprep.subr.bf16.mxu0 0
  %2958 = vmatpush1.bf16.msra.mxu0 %v2642
  %2959 = vmatprep.subr.bf16.mxu0 0
  %2960 = vmatpush1.bf16.msra.mxu0 %v2643
  %2961 = vmatprep.subr.bf16.mxu0 0
  %2962 = vmatpush1.bf16.msra.mxu0 %v2644
  %2963 = vmatprep.subr.bf16.mxu0 0
  %2964 = vmatpush1.bf16.msra.mxu0 0
  %2965 = vmatprep.subr.bf16.mxu0 0
  %2966 = vmatpush1.bf16.msra.mxu0 0
  %2967 = vmatprep.subr.bf16.mxu0 0
  %2968 = vmatpush1.bf16.msra.mxu0 0
  %2969 = vmatprep.subr.bf16.mxu0 0
  %2970 = vmatpush1.bf16.msra.mxu0 0
  %2971 = vmatprep.subr.bf16.mxu0 0
  %2972 = vmatpush1.bf16.msra.mxu0 0
  %2973 = vmatprep.subr.bf16.mxu0 0
  %2974 = vmatpush1.bf16.msra.mxu0 0
  %2975 = vmatprep.subr.bf16.mxu0 0
  %2976 = vmatpush1.bf16.msra.mxu0 0
  %2977 = vmatprep.subr.bf16.mxu0 0
  %2978 = vmatpush1.bf16.msra.mxu0 0
  %2979 = vmatprep.mubr.bf16.mxu0 0
  %2980 = vmatmul.mubr.bf16.gmra.mrb[0].mxu0 %v2866
  %v2981 = vpop.f32.mrb[0].mxu0
  %v2982 = vadd.f32 %v2603, %v2981
  %v2983 = vpop.f32.mrb[0].mxu0
  %v2984 = vpop.f32.mrb[0].mxu0
  %v2985 = vpop.f32.mrb[0].mxu0
  %2986 = vdwg.mxu0
  %v2987 = vld [vmem:[%s1131] sm:$0xff]
  %v2988 = vadd.f32 %v2987, %v2902
  %v2989 = vxor.u32 %v2988, 2147483648
  %v2990 = vmul.f32 %v2989, 1.442695
  %v2991 = vpow.pop %v2990
  %v2992 = vadd.f32 %v2991, 1.0
  %v2993 = vrcp.pop %v2992
  %v2994 = vmul.f32 1.0, %v2993
  %v2995 = vld [vmem:[%s1140] sm:$0xff]
  %v2996 = vadd.f32 %v2995, %v2942
  %v2997 = vxor.u32 %v2996, 2147483648
  %v2998 = vmul.f32 %v2997, 1.442695
  %v2999 = vpow.pop %v2998
  %v3000 = vadd.f32 %v2999, 1.0
  %v3001 = vrcp.pop %v3000
  %v3002 = vmul.f32 1.0, %v3001
  %v3003 = vld [vmem:[%s1149] sm:$0xff]
  %v3004 = vmul.f32 %v2994, %v2982
  %v3005 = vadd.f32 %v3003, %v3004
  %v3006 = vtanh.pop %v3005
  %v3007 = vsub.f32 1.0, %v3002
  %v3008 = vmul.f32 %v3007, %v3006
  %v3009 = vmul.f32 %v3002, %v2865
  %v3010 = vadd.f32 %v3008, %v3009
  %3011 = vst [vmem:[#allocation6] sm:$0xff] %v3010
  %v3012 = vld [vmem:[#allocation6] sm:$0xff]
  %v3013 = vpack.c.bf16 %v3012, %v3012
  %3014 = vmatprep.subr.bf16.mxu0 0
  %3015 = vmatpush1.bf16.msra.mxu0 %v2455
  %3016 = vmatprep.subr.bf16.mxu0 0
  %3017 = vmatpush1.bf16.msra.mxu0 %v2456
  %3018 = vmatprep.subr.bf16.mxu0 0
  %3019 = vmatpush1.bf16.msra.mxu0 %v2457
  %3020 = vmatprep.subr.bf16.mxu0 0
  %3021 = vmatpush1.bf16.msra.mxu0 %v2458
  %3022 = vmatprep.subr.bf16.mxu0 0
  %3023 = vmatpush1.bf16.msra.mxu0 %v2459
  %3024 = vmatprep.subr.bf16.mxu0 0
  %3025 = vmatpush1.bf16.msra.mxu0 %v2460
  %3026 = vmatprep.subr.bf16.mxu0 0
  %3027 = vmatpush1.bf16.msra.mxu0 %v2461
  %3028 = vmatprep.subr.bf16.mxu0 0
  %3029 = vmatpush1.bf16.msra.mxu0 %v2462
  %3030 = vmatprep.subr.bf16.mxu0 0
  %3031 = vmatpush1.bf16.msra.mxu0 0
  %3032 = vmatprep.subr.bf16.mxu0 0
  %3033 = vmatpush1.bf16.msra.mxu0 0
  %3034 = vmatprep.subr.bf16.mxu0 0
  %3035 = vmatpush1.bf16.msra.mxu0 0
  %3036 = vmatprep.subr.bf16.mxu0 0
  %3037 = vmatpush1.bf16.msra.mxu0 0
  %3038 = vmatprep.subr.bf16.mxu0 0
  %3039 = vmatpush1.bf16.msra.mxu0 0
  %3040 = vmatprep.subr.bf16.mxu0 0
  %3041 = vmatpush1.bf16.msra.mxu0 0
  %3042 = vmatprep.subr.bf16.mxu0 0
  %3043 = vmatpush1.bf16.msra.mxu0 0
  %3044 = vmatprep.subr.bf16.mxu0 0
  %3045 = vmatpush1.bf16.msra.mxu0 0
  %3046 = vmatprep.mubr.bf16.mxu0 0
  %3047 = vmatmul.mubr.bf16.gmra.mrb[0].mxu0 %v3013
  %v3048 = vpop.f32.mrb[0].mxu0
  %v3049 = vadd.f32 0.0, %v3048
  %v3050 = vpop.f32.mrb[0].mxu0
  %v3051 = vpop.f32.mrb[0].mxu0
  %v3052 = vpop.f32.mrb[0].mxu0
  %3053 = vdwg.mxu0
  %3054 = vmatprep.subr.bf16.mxu0 0
  %3055 = vmatpush1.bf16.msra.mxu0 %v2543
  %3056 = vmatprep.subr.bf16.mxu0 0
  %3057 = vmatpush1.bf16.msra.mxu0 %v2544
  %3058 = vmatprep.subr.bf16.mxu0 0
  %3059 = vmatpush1.bf16.msra.mxu0 %v2545
  %3060 = vmatprep.subr.bf16.mxu0 0
  %3061 = vmatpush1.bf16.msra.mxu0 %v2546
  %3062 = vmatprep.subr.bf16.mxu0 0
  %3063 = vmatpush1.bf16.msra.mxu0 %v2547
  %3064 = vmatprep.subr.bf16.mxu0 0
  %3065 = vmatpush1.bf16.msra.mxu0 %v2548
  %3066 = vmatprep.subr.bf16.mxu0 0
  %3067 = vmatpush1.bf16.msra.mxu0 %v2549
  %3068 = vmatprep.subr.bf16.mxu0 0
  %3069 = vmatpush1.bf16.msra.mxu0 %v2550
  %3070 = vmatprep.subr.bf16.mxu0 0
  %3071 = vmatpush1.bf16.msra.mxu0 0
  %3072 = vmatprep.subr.bf16.mxu0 0
  %3073 = vmatpush1.bf16.msra.mxu0 0
  %3074 = vmatprep.subr.bf16.mxu0 0
  %3075 = vmatpush1.bf16.msra.mxu0 0
  %3076 = vmatprep.subr.bf16.mxu0 0
  %3077 = vmatpush1.bf16.msra.mxu0 0
  %3078 = vmatprep.subr.bf16.mxu0 0
  %3079 = vmatpush1.bf16.msra.mxu0 0
  %3080 = vmatprep.subr.bf16.mxu0 0
  %3081 = vmatpush1.bf16.msra.mxu0 0
  %3082 = vmatprep.subr.bf16.mxu0 0
  %3083 = vmatpush1.bf16.msra.mxu0 0
  %3084 = vmatprep.subr.bf16.mxu0 0
  %3085 = vmatpush1.bf16.msra.mxu0 0
  %3086 = vmatprep.mubr.bf16.mxu0 0
  %3087 = vmatmul.mubr.bf16.gmra.mrb[0].mxu0 %v3013
  %v3088 = vpop.f32.mrb[0].mxu0
  %v3089 = vadd.f32 0.0, %v3088
  %v3090 = vpop.f32.mrb[0].mxu0
  %v3091 = vpop.f32.mrb[0].mxu0
  %v3092 = vpop.f32.mrb[0].mxu0
  %3093 = vdwg.mxu0
  %3094 = vmatprep.subr.bf16.mxu0 0
  %3095 = vmatpush1.bf16.msra.mxu0 %v2637
  %3096 = vmatprep.subr.bf16.mxu0 0
  %3097 = vmatpush1.bf16.msra.mxu0 %v2638
  %3098 = vmatprep.subr.bf16.mxu0 0
  %3099 = vmatpush1.bf16.msra.mxu0 %v2639
  %3100 = vmatprep.subr.bf16.mxu0 0
  %3101 = vmatpush1.bf16.msra.mxu0 %v2640
  %3102 = vmatprep.subr.bf16.mxu0 0
  %3103 = vmatpush1.bf16.msra.mxu0 %v2641
  %3104 = vmatprep.subr.bf16.mxu0 0
  %3105 = vmatpush1.bf16.msra.mxu0 %v2642
  %3106 = vmatprep.subr.bf16.mxu0 0
  %3107 = vmatpush1.bf16.msra.mxu0 %v2643
  %3108 = vmatprep.subr.bf16.mxu0 0
  %3109 = vmatpush1.bf16.msra.mxu0 %v2644
  %3110 = vmatprep.subr.bf16.mxu0 0
  %3111 = vmatpush1.bf16.msra.mxu0 0
  %3112 = vmatprep.subr.bf16.mxu0 0
  %3113 = vmatpush1.bf16.msra.mxu0 0
  %3114 = vmatprep.subr.bf16.mxu0 0
  %3115 = vmatpush1.bf16.msra.mxu0 0
  %3116 = vmatprep.subr.bf16.mxu0 0
  %3117 = vmatpush1.bf16.msra.mxu0 0
  %3118 = vmatprep.subr.bf16.mxu0 0
  %3119 = vmatpush1.bf16.msra.mxu0 0
  %3120 = vmatprep.subr.bf16.mxu0 0
  %3121 = vmatpush1.bf16.msra.mxu0 0
  %3122 = vmatprep.subr.bf16.mxu0 0
  %3123 = vmatpush1.bf16.msra.mxu0 0
  %3124 = vmatprep.subr.bf16.mxu0 0
  %3125 = vmatpush1.bf16.msra.mxu0 0
  %3126 = vmatprep.mubr.bf16.mxu0 0
  %3127 = vmatmul.mubr.bf16.gmra.mrb[0].mxu0 %v3013
  %v3128 = vpop.f32.mrb[0].mxu0
  %v3129 = vadd.f32 %v2603, %v3128
  %v3130 = vpop.f32.mrb[0].mxu0
  %v3131 = vpop.f32.mrb[0].mxu0
  %v3132 = vpop.f32.mrb[0].mxu0
  %3133 = vdwg.mxu0
  %v3134 = vld [vmem:[%s1283] sm:$0xff]
  %v3135 = vadd.f32 %v3134, %v3049
  %v3136 = vxor.u32 %v3135, 2147483648
  %v3137 = vmul.f32 %v3136, 1.442695
  %v3138 = vpow.pop %v3137
  %v3139 = vadd.f32 %v3138, 1.0
  %v3140 = vrcp.pop %v3139
  %v3141 = vmul.f32 1.0, %v3140
  %v3142 = vld [vmem:[%s1292] sm:$0xff]
  %v3143 = vadd.f32 %v3142, %v3089
  %v3144 = vxor.u32 %v3143, 2147483648
  %v3145 = vmul.f32 %v3144, 1.442695
  %v3146 = vpow.pop %v3145
  %v3147 = vadd.f32 %v3146, 1.0
  %v3148 = vrcp.pop %v3147
  %v3149 = vmul.f32 1.0, %v3148
  %v3150 = vld [vmem:[%s1301] sm:$0xff]
  %v3151 = vmul.f32 %v3141, %v3129
  %v3152 = vadd.f32 %v3150, %v3151
  %v3153 = vtanh.pop %v3152
  %v3154 = vsub.f32 1.0, %v3149
  %v3155 = vmul.f32 %v3154, %v3153
  %v3156 = vmul.f32 %v3149, %v3012
  %v3157 = vadd.f32 %v3155, %v3156
  %3158 = vst [vmem:[#allocation6] sm:$0xff] %v3157
  %v3159 = vld [vmem:[#allocation6] sm:$0xff]
  %v3160 = vpack.c.bf16 %v3159, %v3159
  %3161 = vmatprep.subr.bf16.mxu0 0
  %3162 = vmatpush1.bf16.msra.mxu0 %v2455
  %3163 = vmatprep.subr.bf16.mxu0 0
  %3164 = vmatpush1.bf16.msra.mxu0 %v2456
  %3165 = vmatprep.subr.bf16.mxu0 0
  %3166 = vmatpush1.bf16.msra.mxu0 %v2457
  %3167 = vmatprep.subr.bf16.mxu0 0
  %3168 = vmatpush1.bf16.msra.mxu0 %v2458
  %3169 = vmatprep.subr.bf16.mxu0 0
  %3170 = vmatpush1.bf16.msra.mxu0 %v2459
  %3171 = vmatprep.subr.bf16.mxu0 0
  %3172 = vmatpush1.bf16.msra.mxu0 %v2460
  %3173 = vmatprep.subr.bf16.mxu0 0
  %3174 = vmatpush1.bf16.msra.mxu0 %v2461
  %3175 = vmatprep.subr.bf16.mxu0 0
  %3176 = vmatpush1.bf16.msra.mxu0 %v2462
  %3177 = vmatprep.subr.bf16.mxu0 0
  %3178 = vmatpush1.bf16.msra.mxu0 0
  %3179 = vmatprep.subr.bf16.mxu0 0
  %3180 = vmatpush1.bf16.msra.mxu0 0
  %3181 = vmatprep.subr.bf16.mxu0 0
  %3182 = vmatpush1.bf16.msra.mxu0 0
  %3183 = vmatprep.subr.bf16.mxu0 0
  %3184 = vmatpush1.bf16.msra.mxu0 0
  %3185 = vmatprep.subr.bf16.mxu0 0
  %3186 = vmatpush1.bf16.msra.mxu0 0
  %3187 = vmatprep.subr.bf16.mxu0 0
  %3188 = vmatpush1.bf16.msra.mxu0 0
  %3189 = vmatprep.subr.bf16.mxu0 0
  %3190 = vmatpush1.bf16.msra.mxu0 0
  %3191 = vmatprep.subr.bf16.mxu0 0
  %3192 = vmatpush1.bf16.msra.mxu0 0
  %3193 = vmatprep.mubr.bf16.mxu0 0
  %3194 = vmatmul.mubr.bf16.gmra.mrb[0].mxu0 %v3160
  %v3195 = vpop.f32.mrb[0].mxu0
  %v3196 = vadd.f32 0.0, %v3195
  %v3197 = vpop.f32.mrb[0].mxu0
  %v3198 = vpop.f32.mrb[0].mxu0
  %v3199 = vpop.f32.mrb[0].mxu0
  %3200 = vdwg.mxu0
  %3201 = vmatprep.subr.bf16.mxu0 0
  %3202 = vmatpush1.bf16.msra.mxu0 %v2543
  %3203 = vmatprep.subr.bf16.mxu0 0
  %3204 = vmatpush1.bf16.msra.mxu0 %v2544
  %3205 = vmatprep.subr.bf16.mxu0 0
  %3206 = vmatpush1.bf16.msra.mxu0 %v2545
  %3207 = vmatprep.subr.bf16.mxu0 0
  %3208 = vmatpush1.bf16.msra.mxu0 %v2546
  %3209 = vmatprep.subr.bf16.mxu0 0
  %3210 = vmatpush1.bf16.msra.mxu0 %v2547
  %3211 = vmatprep.subr.bf16.mxu0 0
  %3212 = vmatpush1.bf16.msra.mxu0 %v2548
  %3213 = vmatprep.subr.bf16.mxu0 0
  %3214 = vmatpush1.bf16.msra.mxu0 %v2549
  %3215 = vmatprep.subr.bf16.mxu0 0
  %3216 = vmatpush1.bf16.msra.mxu0 %v2550
  %3217 = vmatprep.subr.bf16.mxu0 0
  %3218 = vmatpush1.bf16.msra.mxu0 0
  %3219 = vmatprep.subr.bf16.mxu0 0
  %3220 = vmatpush1.bf16.msra.mxu0 0
  %3221 = vmatprep.subr.bf16.mxu0 0
  %3222 = vmatpush1.bf16.msra.mxu0 0
  %3223 = vmatprep.subr.bf16.mxu0 0
  %3224 = vmatpush1.bf16.msra.mxu0 0
  %3225 = vmatprep.subr.bf16.mxu0 0
  %3226 = vmatpush1.bf16.msra.mxu0 0
  %3227 = vmatprep.subr.bf16.mxu0 0
  %3228 = vmatpush1.bf16.msra.mxu0 0
  %3229 = vmatprep.subr.bf16.mxu0 0
  %3230 = vmatpush1.bf16.msra.mxu0 0
  %3231 = vmatprep.subr.bf16.mxu0 0
  %3232 = vmatpush1.bf16.msra.mxu0 0
  %3233 = vmatprep.mubr.bf16.mxu0 0
  %3234 = vmatmul.mubr.bf16.gmra.mrb[0].mxu0 %v3160
  %v3235 = vpop.f32.mrb[0].mxu0
  %v3236 = vadd.f32 0.0, %v3235
  %v3237 = vpop.f32.mrb[0].mxu0
  %v3238 = vpop.f32.mrb[0].mxu0
  %v3239 = vpop.f32.mrb[0].mxu0
  %3240 = vdwg.mxu0
  %3241 = vmatprep.subr.bf16.mxu0 0
  %3242 = vmatpush1.bf16.msra.mxu0 %v2637
  %3243 = vmatprep.subr.bf16.mxu0 0
  %3244 = vmatpush1.bf16.msra.mxu0 %v2638
  %3245 = vmatprep.subr.bf16.mxu0 0
  %3246 = vmatpush1.bf16.msra.mxu0 %v2639
  %3247 = vmatprep.subr.bf16.mxu0 0
  %3248 = vmatpush1.bf16.msra.mxu0 %v2640
  %3249 = vmatprep.subr.bf16.mxu0 0
  %3250 = vmatpush1.bf16.msra.mxu0 %v2641
  %3251 = vmatprep.subr.bf16.mxu0 0
  %3252 = vmatpush1.bf16.msra.mxu0 %v2642
  %3253 = vmatprep.subr.bf16.mxu0 0
  %3254 = vmatpush1.bf16.msra.mxu0 %v2643
  %3255 = vmatprep.subr.bf16.mxu0 0
  %3256 = vmatpush1.bf16.msra.mxu0 %v2644
  %3257 = vmatprep.subr.bf16.mxu0 0
  %3258 = vmatpush1.bf16.msra.mxu0 0
  %3259 = vmatprep.subr.bf16.mxu0 0
  %3260 = vmatpush1.bf16.msra.mxu0 0
  %3261 = vmatprep.subr.bf16.mxu0 0
  %3262 = vmatpush1.bf16.msra.mxu0 0
  %3263 = vmatprep.subr.bf16.mxu0 0
  %3264 = vmatpush1.bf16.msra.mxu0 0
  %3265 = vmatprep.subr.bf16.mxu0 0
  %3266 = vmatpush1.bf16.msra.mxu0 0
  %3267 = vmatprep.subr.bf16.mxu0 0
  %3268 = vmatpush1.bf16.msra.mxu0 0
  %3269 = vmatprep.subr.bf16.mxu0 0
  %3270 = vmatpush1.bf16.msra.mxu0 0
  %3271 = vmatprep.subr.bf16.mxu0 0
  %3272 = vmatpush1.bf16.msra.mxu0 0
  %3273 = vmatprep.mubr.bf16.mxu0 0
  %3274 = vmatmul.mubr.bf16.gmra.mrb[0].mxu0 %v3160
  %v3275 = vpop.f32.mrb[0].mxu0
  %v3276 = vadd.f32 %v2603, %v3275
  %v3277 = vpop.f32.mrb[0].mxu0
  %v3278 = vpop.f32.mrb[0].mxu0
  %v3279 = vpop.f32.mrb[0].mxu0
  %3280 = vdwg.mxu0
  %v3281 = vld [vmem:[%s1435] sm:$0xff]
  %v3282 = vadd.f32 %v3281, %v3196
  %v3283 = vxor.u32 %v3282, 2147483648
  %v3284 = vmul.f32 %v3283, 1.442695
  %v3285 = vpow.pop %v3284
  %v3286 = vadd.f32 %v3285, 1.0
  %v3287 = vrcp.pop %v3286
  %v3288 = vmul.f32 1.0, %v3287
  %v3289 = vld [vmem:[%s1444] sm:$0xff]
  %v3290 = vadd.f32 %v3289, %v3236
  %v3291 = vxor.u32 %v3290, 2147483648
  %v3292 = vmul.f32 %v3291, 1.442695
  %v3293 = vpow.pop %v3292
  %v3294 = vadd.f32 %v3293, 1.0
  %v3295 = vrcp.pop %v3294
  %v3296 = vmul.f32 1.0, %v3295
  %v3297 = vld [vmem:[%s1453] sm:$0xff]
  %v3298 = vmul.f32 %v3288, %v3276
  %v3299 = vadd.f32 %v3297, %v3298
  %v3300 = vtanh.pop %v3299
  %v3301 = vsub.f32 1.0, %v3296
  %v3302 = vmul.f32 %v3301, %v3300
  %v3303 = vmul.f32 %v3296, %v3159
  %v3304 = vadd.f32 %v3302, %v3303
  %3305 = vst [vmem:[#allocation6] sm:$0xff] %v3304
  %v3306 = vld [vmem:[#allocation6] sm:$0xff]
  %v3307 = vpack.c.bf16 %v3306, %v3306
  %3308 = vmatprep.subr.bf16.mxu0 0
  %3309 = vmatpush1.bf16.msra.mxu0 %v2455
  %3310 = vmatprep.subr.bf16.mxu0 0
  %3311 = vmatpush1.bf16.msra.mxu0 %v2456
  %3312 = vmatprep.subr.bf16.mxu0 0
  %3313 = vmatpush1.bf16.msra.mxu0 %v2457
  %3314 = vmatprep.subr.bf16.mxu0 0
  %3315 = vmatpush1.bf16.msra.mxu0 %v2458
  %3316 = vmatprep.subr.bf16.mxu0 0
  %3317 = vmatpush1.bf16.msra.mxu0 %v2459
  %3318 = vmatprep.subr.bf16.mxu0 0
  %3319 = vmatpush1.bf16.msra.mxu0 %v2460
  %3320 = vmatprep.subr.bf16.mxu0 0
  %3321 = vmatpush1.bf16.msra.mxu0 %v2461
  %3322 = vmatprep.subr.bf16.mxu0 0
  %3323 = vmatpush1.bf16.msra.mxu0 %v2462
  %3324 = vmatprep.subr.bf16.mxu0 0
  %3325 = vmatpush1.bf16.msra.mxu0 0
  %3326 = vmatprep.subr.bf16.mxu0 0
  %3327 = vmatpush1.bf16.msra.mxu0 0
  %3328 = vmatprep.subr.bf16.mxu0 0
  %3329 = vmatpush1.bf16.msra.mxu0 0
  %3330 = vmatprep.subr.bf16.mxu0 0
  %3331 = vmatpush1.bf16.msra.mxu0 0
  %3332 = vmatprep.subr.bf16.mxu0 0
  %3333 = vmatpush1.bf16.msra.mxu0 0
  %3334 = vmatprep.subr.bf16.mxu0 0
  %3335 = vmatpush1.bf16.msra.mxu0 0
  %3336 = vmatprep.subr.bf16.mxu0 0
  %3337 = vmatpush1.bf16.msra.mxu0 0
  %3338 = vmatprep.subr.bf16.mxu0 0
  %3339 = vmatpush1.bf16.msra.mxu0 0
  %3340 = vmatprep.mubr.bf16.mxu0 0
  %3341 = vmatmul.mubr.bf16.gmra.mrb[0].mxu0 %v3307
  %v3342 = vpop.f32.mrb[0].mxu0
  %v3343 = vadd.f32 0.0, %v3342
  %v3344 = vpop.f32.mrb[0].mxu0
  %v3345 = vpop.f32.mrb[0].mxu0
  %v3346 = vpop.f32.mrb[0].mxu0
  %3347 = vdwg.mxu0
  %3348 = vmatprep.subr.bf16.mxu0 0
  %3349 = vmatpush1.bf16.msra.mxu0 %v2543
  %3350 = vmatprep.subr.bf16.mxu0 0
  %3351 = vmatpush1.bf16.msra.mxu0 %v2544
  %3352 = vmatprep.subr.bf16.mxu0 0
  %3353 = vmatpush1.bf16.msra.mxu0 %v2545
  %3354 = vmatprep.subr.bf16.mxu0 0
  %3355 = vmatpush1.bf16.msra.mxu0 %v2546
  %3356 = vmatprep.subr.bf16.mxu0 0
  %3357 = vmatpush1.bf16.msra.mxu0 %v2547
  %3358 = vmatprep.subr.bf16.mxu0 0
  %3359 = vmatpush1.bf16.msra.mxu0 %v2548
  %3360 = vmatprep.subr.bf16.mxu0 0
  %3361 = vmatpush1.bf16.msra.mxu0 %v2549
  %3362 = vmatprep.subr.bf16.mxu0 0
  %3363 = vmatpush1.bf16.msra.mxu0 %v2550
  %3364 = vmatprep.subr.bf16.mxu0 0
  %3365 = vmatpush1.bf16.msra.mxu0 0
  %3366 = vmatprep.subr.bf16.mxu0 0
  %3367 = vmatpush1.bf16.msra.mxu0 0
  %3368 = vmatprep.subr.bf16.mxu0 0
  %3369 = vmatpush1.bf16.msra.mxu0 0
  %3370 = vmatprep.subr.bf16.mxu0 0
  %3371 = vmatpush1.bf16.msra.mxu0 0
  %3372 = vmatprep.subr.bf16.mxu0 0
  %3373 = vmatpush1.bf16.msra.mxu0 0
  %3374 = vmatprep.subr.bf16.mxu0 0
  %3375 = vmatpush1.bf16.msra.mxu0 0
  %3376 = vmatprep.subr.bf16.mxu0 0
  %3377 = vmatpush1.bf16.msra.mxu0 0
  %3378 = vmatprep.subr.bf16.mxu0 0
  %3379 = vmatpush1.bf16.msra.mxu0 0
  %3380 = vmatprep.mubr.bf16.mxu0 0
  %3381 = vmatmul.mubr.bf16.gmra.mrb[0].mxu0 %v3307
  %v3382 = vpop.f32.mrb[0].mxu0
  %v3383 = vadd.f32 0.0, %v3382
  %v3384 = vpop.f32.mrb[0].mxu0
  %v3385 = vpop.f32.mrb[0].mxu0
  %v3386 = vpop.f32.mrb[0].mxu0
  %3387 = vdwg.mxu0
  %3388 = vmatprep.subr.bf16.mxu0 0
  %3389 = vmatpush1.bf16.msra.mxu0 %v2637
  %3390 = vmatprep.subr.bf16.mxu0 0
  %3391 = vmatpush1.bf16.msra.mxu0 %v2638
  %3392 = vmatprep.subr.bf16.mxu0 0
  %3393 = vmatpush1.bf16.msra.mxu0 %v2639
  %3394 = vmatprep.subr.bf16.mxu0 0
  %3395 = vmatpush1.bf16.msra.mxu0 %v2640
  %3396 = vmatprep.subr.bf16.mxu0 0
  %3397 = vmatpush1.bf16.msra.mxu0 %v2641
  %3398 = vmatprep.subr.bf16.mxu0 0
  %3399 = vmatpush1.bf16.msra.mxu0 %v2642
  %3400 = vmatprep.subr.bf16.mxu0 0
  %3401 = vmatpush1.bf16.msra.mxu0 %v2643
  %3402 = vmatprep.subr.bf16.mxu0 0
  %3403 = vmatpush1.bf16.msra.mxu0 %v2644
  %3404 = vmatprep.subr.bf16.mxu0 0
  %3405 = vmatpush1.bf16.msra.mxu0 0
  %3406 = vmatprep.subr.bf16.mxu0 0
  %3407 = vmatpush1.bf16.msra.mxu0 0
  %3408 = vmatprep.subr.bf16.mxu0 0
  %3409 = vmatpush1.bf16.msra.mxu0 0
  %3410 = vmatprep.subr.bf16.mxu0 0
  %3411 = vmatpush1.bf16.msra.mxu0 0
  %3412 = vmatprep.subr.bf16.mxu0 0
  %3413 = vmatpush1.bf16.msra.mxu0 0
  %3414 = vmatprep.subr.bf16.mxu0 0
  %3415 = vmatpush1.bf16.msra.mxu0 0
  %3416 = vmatprep.subr.bf16.mxu0 0
  %3417 = vmatpush1.bf16.msra.mxu0 0
  %3418 = vmatprep.subr.bf16.mxu0 0
  %3419 = vmatpush1.bf16.msra.mxu0 0
  %3420 = vmatprep.mubr.bf16.mxu0 0
  %3421 = vmatmul.mubr.bf16.gmra.mrb[0].mxu0 %v3307
  %v3422 = vpop.f32.mrb[0].mxu0
  %v3423 = vadd.f32 %v2603, %v3422
  %v3424 = vpop.f32.mrb[0].mxu0
  %v3425 = vpop.f32.mrb[0].mxu0
  %v3426 = vpop.f32.mrb[0].mxu0
  %3427 = vdwg.mxu0
  %v3428 = vld [vmem:[%s1587] sm:$0xff]
  %v3429 = vadd.f32 %v3428, %v3343
  %v3430 = vxor.u32 %v3429, 2147483648
  %v3431 = vmul.f32 %v3430, 1.442695
  %v3432 = vpow.pop %v3431
  %v3433 = vadd.f32 %v3432, 1.0
  %v3434 = vrcp.pop %v3433
  %v3435 = vmul.f32 1.0, %v3434
  %v3436 = vld [vmem:[%s1596] sm:$0xff]
  %v3437 = vadd.f32 %v3436, %v3383
  %v3438 = vxor.u32 %v3437, 2147483648
  %v3439 = vmul.f32 %v3438, 1.442695
  %v3440 = vpow.pop %v3439
  %v3441 = vadd.f32 %v3440, 1.0
  %v3442 = vrcp.pop %v3441
  %v3443 = vmul.f32 1.0, %v3442
  %v3444 = vld [vmem:[%s1605] sm:$0xff]
  %v3445 = vmul.f32 %v3435, %v3423
  %v3446 = vadd.f32 %v3444, %v3445
  %v3447 = vtanh.pop %v3446
  %v3448 = vsub.f32 1.0, %v3443
  %v3449 = vmul.f32 %v3448, %v3447
  %v3450 = vmul.f32 %v3443, %v3306
  %v3451 = vadd.f32 %v3449, %v3450
  %3452 = vst [vmem:[#allocation6] sm:$0xff] %v3451
  %v3453 = vld [vmem:[#allocation6] sm:$0xff]
  %v3454 = vpack.c.bf16 %v3453, %v3453
  %3455 = vmatprep.subr.bf16.mxu0 0
  %3456 = vmatpush1.bf16.msra.mxu0 %v2455
  %3457 = vmatprep.subr.bf16.mxu0 0
  %3458 = vmatpush1.bf16.msra.mxu0 %v2456
  %3459 = vmatprep.subr.bf16.mxu0 0
  %3460 = vmatpush1.bf16.msra.mxu0 %v2457
  %3461 = vmatprep.subr.bf16.mxu0 0
  %3462 = vmatpush1.bf16.msra.mxu0 %v2458
  %3463 = vmatprep.subr.bf16.mxu0 0
  %3464 = vmatpush1.bf16.msra.mxu0 %v2459
  %3465 = vmatprep.subr.bf16.mxu0 0
  %3466 = vmatpush1.bf16.msra.mxu0 %v2460
  %3467 = vmatprep.subr.bf16.mxu0 0
  %3468 = vmatpush1.bf16.msra.mxu0 %v2461
  %3469 = vmatprep.subr.bf16.mxu0 0
  %3470 = vmatpush1.bf16.msra.mxu0 %v2462
  %3471 = vmatprep.subr.bf16.mxu0 0
  %3472 = vmatpush1.bf16.msra.mxu0 0
  %3473 = vmatprep.subr.bf16.mxu0 0
  %3474 = vmatpush1.bf16.msra.mxu0 0
  %3475 = vmatprep.subr.bf16.mxu0 0
  %3476 = vmatpush1.bf16.msra.mxu0 0
  %3477 = vmatprep.subr.bf16.mxu0 0
  %3478 = vmatpush1.bf16.msra.mxu0 0
  %3479 = vmatprep.subr.bf16.mxu0 0
  %3480 = vmatpush1.bf16.msra.mxu0 0
  %3481 = vmatprep.subr.bf16.mxu0 0
  %3482 = vmatpush1.bf16.msra.mxu0 0
  %3483 = vmatprep.subr.bf16.mxu0 0
  %3484 = vmatpush1.bf16.msra.mxu0 0
  %3485 = vmatprep.subr.bf16.mxu0 0
  %3486 = vmatpush1.bf16.msra.mxu0 0
  %3487 = vmatprep.mubr.bf16.mxu0 0
  %3488 = vmatmul.mubr.bf16.gmra.mrb[0].mxu0 %v3454
  %v3489 = vpop.f32.mrb[0].mxu0
  %v3490 = vadd.f32 0.0, %v3489
  %v3491 = vpop.f32.mrb[0].mxu0
  %v3492 = vpop.f32.mrb[0].mxu0
  %v3493 = vpop.f32.mrb[0].mxu0
  %3494 = vdwg.mxu0
  %3495 = vmatprep.subr.bf16.mxu0 0
  %3496 = vmatpush1.bf16.msra.mxu0 %v2543
  %3497 = vmatprep.subr.bf16.mxu0 0
  %3498 = vmatpush1.bf16.msra.mxu0 %v2544
  %3499 = vmatprep.subr.bf16.mxu0 0
  %3500 = vmatpush1.bf16.msra.mxu0 %v2545
  %3501 = vmatprep.subr.bf16.mxu0 0
  %3502 = vmatpush1.bf16.msra.mxu0 %v2546
  %3503 = vmatprep.subr.bf16.mxu0 0
  %3504 = vmatpush1.bf16.msra.mxu0 %v2547
  %3505 = vmatprep.subr.bf16.mxu0 0
  %3506 = vmatpush1.bf16.msra.mxu0 %v2548
  %3507 = vmatprep.subr.bf16.mxu0 0
  %3508 = vmatpush1.bf16.msra.mxu0 %v2549
  %3509 = vmatprep.subr.bf16.mxu0 0
  %3510 = vmatpush1.bf16.msra.mxu0 %v2550
  %3511 = vmatprep.subr.bf16.mxu0 0
  %3512 = vmatpush1.bf16.msra.mxu0 0
  %3513 = vmatprep.subr.bf16.mxu0 0
  %3514 = vmatpush1.bf16.msra.mxu0 0
  %3515 = vmatprep.subr.bf16.mxu0 0
  %3516 = vmatpush1.bf16.msra.mxu0 0
  %3517 = vmatprep.subr.bf16.mxu0 0
  %3518 = vmatpush1.bf16.msra.mxu0 0
  %3519 = vmatprep.subr.bf16.mxu0 0
  %3520 = vmatpush1.bf16.msra.mxu0 0
  %3521 = vmatprep.subr.bf16.mxu0 0
  %3522 = vmatpush1.bf16.msra.mxu0 0
  %3523 = vmatprep.subr.bf16.mxu0 0
  %3524 = vmatpush1.bf16.msra.mxu0 0
  %3525 = vmatprep.subr.bf16.mxu0 0
  %3526 = vmatpush1.bf16.msra.mxu0 0
  %3527 = vmatprep.mubr.bf16.mxu0 0
  %3528 = vmatmul.mubr.bf16.gmra.mrb[0].mxu0 %v3454
  %v3529 = vpop.f32.mrb[0].mxu0
  %v3530 = vadd.f32 0.0, %v3529
  %v3531 = vpop.f32.mrb[0].mxu0
  %v3532 = vpop.f32.mrb[0].mxu0
  %v3533 = vpop.f32.mrb[0].mxu0
  %3534 = vdwg.mxu0
  %3535 = vmatprep.subr.bf16.mxu0 0
  %3536 = vmatpush1.bf16.msra.mxu0 %v2637
  %3537 = vmatprep.subr.bf16.mxu0 0
  %3538 = vmatpush1.bf16.msra.mxu0 %v2638
  %3539 = vmatprep.subr.bf16.mxu0 0
  %3540 = vmatpush1.bf16.msra.mxu0 %v2639
  %3541 = vmatprep.subr.bf16.mxu0 0
  %3542 = vmatpush1.bf16.msra.mxu0 %v2640
  %3543 = vmatprep.subr.bf16.mxu0 0
  %3544 = vmatpush1.bf16.msra.mxu0 %v2641
  %3545 = vmatprep.subr.bf16.mxu0 0
  %3546 = vmatpush1.bf16.msra.mxu0 %v2642
  %3547 = vmatprep.subr.bf16.mxu0 0
  %3548 = vmatpush1.bf16.msra.mxu0 %v2643
  %3549 = vmatprep.subr.bf16.mxu0 0
  %3550 = vmatpush1.bf16.msra.mxu0 %v2644
  %3551 = vmatprep.subr.bf16.mxu0 0
  %3552 = vmatpush1.bf16.msra.mxu0 0
  %3553 = vmatprep.subr.bf16.mxu0 0
  %3554 = vmatpush1.bf16.msra.mxu0 0
  %3555 = vmatprep.subr.bf16.mxu0 0
  %3556 = vmatpush1.bf16.msra.mxu0 0
  %3557 = vmatprep.subr.bf16.mxu0 0
  %3558 = vmatpush1.bf16.msra.mxu0 0
  %3559 = vmatprep.subr.bf16.mxu0 0
  %3560 = vmatpush1.bf16.msra.mxu0 0
  %3561 = vmatprep.subr.bf16.mxu0 0
  %3562 = vmatpush1.bf16.msra.mxu0 0
  %3563 = vmatprep.subr.bf16.mxu0 0
  %3564 = vmatpush1.bf16.msra.mxu0 0
  %3565 = vmatprep.subr.bf16.mxu0 0
  %3566 = vmatpush1.bf16.msra.mxu0 0
  %3567 = vmatprep.mubr.bf16.mxu0 0
  %3568 = vmatmul.mubr.bf16.gmra.mrb[0].mxu0 %v3454
  %v3569 = vpop.f32.mrb[0].mxu0
  %v3570 = vadd.f32 %v2603, %v3569
  %v3571 = vpop.f32.mrb[0].mxu0
  %v3572 = vpop.f32.mrb[0].mxu0
  %v3573 = vpop.f32.mrb[0].mxu0
  %3574 = vdwg.mxu0
  %v3575 = vld [vmem:[%s1739] sm:$0xff]
  %v3576 = vadd.f32 %v3575, %v3490
  %v3577 = vxor.u32 %v3576, 2147483648
  %v3578 = vmul.f32 %v3577, 1.442695
  %v3579 = vpow.pop %v3578
  %v3580 = vadd.f32 %v3579, 1.0
  %v3581 = vrcp.pop %v3580
  %v3582 = vmul.f32 1.0, %v3581
  %v3583 = vld [vmem:[%s1748] sm:$0xff]
  %v3584 = vadd.f32 %v3583, %v3530
  %v3585 = vxor.u32 %v3584, 2147483648
  %v3586 = vmul.f32 %v3585, 1.442695
  %v3587 = vpow.pop %v3586
  %v3588 = vadd.f32 %v3587, 1.0
  %v3589 = vrcp.pop %v3588
  %v3590 = vmul.f32 1.0, %v3589
  %v3591 = vld [vmem:[%s1757] sm:$0xff]
  %v3592 = vmul.f32 %v3582, %v3570
  %v3593 = vadd.f32 %v3591, %v3592
  %v3594 = vtanh.pop %v3593
  %v3595 = vsub.f32 1.0, %v3590
  %v3596 = vmul.f32 %v3595, %v3594
  %v3597 = vmul.f32 %v3590, %v3453
  %v3598 = vadd.f32 %v3596, %v3597
  %3599 = vst [vmem:[#allocation6] sm:$0xff] %v3598
  %v3600 = vld [vmem:[#allocation6] sm:$0xff]
  %v3601 = vpack.c.bf16 %v3600, %v3600
  %3602 = vmatprep.subr.bf16.mxu0 0
  %3603 = vmatpush1.bf16.msra.mxu0 %v2455
  %3604 = vmatprep.subr.bf16.mxu0 0
  %3605 = vmatpush1.bf16.msra.mxu0 %v2456
  %3606 = vmatprep.subr.bf16.mxu0 0
  %3607 = vmatpush1.bf16.msra.mxu0 %v2457
  %3608 = vmatprep.subr.bf16.mxu0 0
  %3609 = vmatpush1.bf16.msra.mxu0 %v2458
  %3610 = vmatprep.subr.bf16.mxu0 0
  %3611 = vmatpush1.bf16.msra.mxu0 %v2459
  %3612 = vmatprep.subr.bf16.mxu0 0
  %3613 = vmatpush1.bf16.msra.mxu0 %v2460
  %3614 = vmatprep.subr.bf16.mxu0 0
  %3615 = vmatpush1.bf16.msra.mxu0 %v2461
  %3616 = vmatprep.subr.bf16.mxu0 0
  %3617 = vmatpush1.bf16.msra.mxu0 %v2462
  %3618 = vmatprep.subr.bf16.mxu0 0
  %3619 = vmatpush1.bf16.msra.mxu0 0
  %3620 = vmatprep.subr.bf16.mxu0 0
  %3621 = vmatpush1.bf16.msra.mxu0 0
  %3622 = vmatprep.subr.bf16.mxu0 0
  %3623 = vmatpush1.bf16.msra.mxu0 0
  %3624 = vmatprep.subr.bf16.mxu0 0
  %3625 = vmatpush1.bf16.msra.mxu0 0
  %3626 = vmatprep.subr.bf16.mxu0 0
  %3627 = vmatpush1.bf16.msra.mxu0 0
  %3628 = vmatprep.subr.bf16.mxu0 0
  %3629 = vmatpush1.bf16.msra.mxu0 0
  %3630 = vmatprep.subr.bf16.mxu0 0
  %3631 = vmatpush1.bf16.msra.mxu0 0
  %3632 = vmatprep.subr.bf16.mxu0 0
  %3633 = vmatpush1.bf16.msra.mxu0 0
  %3634 = vmatprep.mubr.bf16.mxu0 0
  %3635 = vmatmul.mubr.bf16.gmra.mrb[0].mxu0 %v3601
  %v3636 = vpop.f32.mrb[0].mxu0
  %v3637 = vadd.f32 0.0, %v3636
  %v3638 = vpop.f32.mrb[0].mxu0
  %v3639 = vpop.f32.mrb[0].mxu0
  %v3640 = vpop.f32.mrb[0].mxu0
  %3641 = vdwg.mxu0
  %3642 = vmatprep.subr.bf16.mxu0 0
  %3643 = vmatpush1.bf16.msra.mxu0 %v2543
  %3644 = vmatprep.subr.bf16.mxu0 0
  %3645 = vmatpush1.bf16.msra.mxu0 %v2544
  %3646 = vmatprep.subr.bf16.mxu0 0
  %3647 = vmatpush1.bf16.msra.mxu0 %v2545
  %3648 = vmatprep.subr.bf16.mxu0 0
  %3649 = vmatpush1.bf16.msra.mxu0 %v2546
  %3650 = vmatprep.subr.bf16.mxu0 0
  %3651 = vmatpush1.bf16.msra.mxu0 %v2547
  %3652 = vmatprep.subr.bf16.mxu0 0
  %3653 = vmatpush1.bf16.msra.mxu0 %v2548
  %3654 = vmatprep.subr.bf16.mxu0 0
  %3655 = vmatpush1.bf16.msra.mxu0 %v2549
  %3656 = vmatprep.subr.bf16.mxu0 0
  %3657 = vmatpush1.bf16.msra.mxu0 %v2550
  %3658 = vmatprep.subr.bf16.mxu0 0
  %3659 = vmatpush1.bf16.msra.mxu0 0
  %3660 = vmatprep.subr.bf16.mxu0 0
  %3661 = vmatpush1.bf16.msra.mxu0 0
  %3662 = vmatprep.subr.bf16.mxu0 0
  %3663 = vmatpush1.bf16.msra.mxu0 0
  %3664 = vmatprep.subr.bf16.mxu0 0
  %3665 = vmatpush1.bf16.msra.mxu0 0
  %3666 = vmatprep.subr.bf16.mxu0 0
  %3667 = vmatpush1.bf16.msra.mxu0 0
  %3668 = vmatprep.subr.bf16.mxu0 0
  %3669 = vmatpush1.bf16.msra.mxu0 0
  %3670 = vmatprep.subr.bf16.mxu0 0
  %3671 = vmatpush1.bf16.msra.mxu0 0
  %3672 = vmatprep.subr.bf16.mxu0 0
  %3673 = vmatpush1.bf16.msra.mxu0 0
  %3674 = vmatprep.mubr.bf16.mxu0 0
  %3675 = vmatmul.mubr.bf16.gmra.mrb[0].mxu0 %v3601
  %v3676 = vpop.f32.mrb[0].mxu0
  %v3677 = vadd.f32 0.0, %v3676
  %v3678 = vpop.f32.mrb[0].mxu0
  %v3679 = vpop.f32.mrb[0].mxu0
  %v3680 = vpop.f32.mrb[0].mxu0
  %3681 = vdwg.mxu0
  %3682 = vmatprep.subr.bf16.mxu0 0
  %3683 = vmatpush1.bf16.msra.mxu0 %v2637
  %3684 = vmatprep.subr.bf16.mxu0 0
  %3685 = vmatpush1.bf16.msra.mxu0 %v2638
  %3686 = vmatprep.subr.bf16.mxu0 0
  %3687 = vmatpush1.bf16.msra.mxu0 %v2639
  %3688 = vmatprep.subr.bf16.mxu0 0
  %3689 = vmatpush1.bf16.msra.mxu0 %v2640
  %3690 = vmatprep.subr.bf16.mxu0 0
  %3691 = vmatpush1.bf16.msra.mxu0 %v2641
  %3692 = vmatprep.subr.bf16.mxu0 0
  %3693 = vmatpush1.bf16.msra.mxu0 %v2642
  %3694 = vmatprep.subr.bf16.mxu0 0
  %3695 = vmatpush1.bf16.msra.mxu0 %v2643
  %3696 = vmatprep.subr.bf16.mxu0 0
  %3697 = vmatpush1.bf16.msra.mxu0 %v2644
  %3698 = vmatprep.subr.bf16.mxu0 0
  %3699 = vmatpush1.bf16.msra.mxu0 0
  %3700 = vmatprep.subr.bf16.mxu0 0
  %3701 = vmatpush1.bf16.msra.mxu0 0
  %3702 = vmatprep.subr.bf16.mxu0 0
  %3703 = vmatpush1.bf16.msra.mxu0 0
  %3704 = vmatprep.subr.bf16.mxu0 0
  %3705 = vmatpush1.bf16.msra.mxu0 0
  %3706 = vmatprep.subr.bf16.mxu0 0
  %3707 = vmatpush1.bf16.msra.mxu0 0
  %3708 = vmatprep.subr.bf16.mxu0 0
  %3709 = vmatpush1.bf16.msra.mxu0 0
  %3710 = vmatprep.subr.bf16.mxu0 0
  %3711 = vmatpush1.bf16.msra.mxu0 0
  %3712 = vmatprep.subr.bf16.mxu0 0
  %3713 = vmatpush1.bf16.msra.mxu0 0
  %3714 = vmatprep.mubr.bf16.mxu0 0
  %3715 = vmatmul.mubr.bf16.gmra.mrb[0].mxu0 %v3601
  %v3716 = vpop.f32.mrb[0].mxu0
  %v3717 = vadd.f32 %v2603, %v3716
  %v3718 = vpop.f32.mrb[0].mxu0
  %v3719 = vpop.f32.mrb[0].mxu0
  %v3720 = vpop.f32.mrb[0].mxu0
  %3721 = vdwg.mxu0
  %v3722 = vld [vmem:[%s1891] sm:$0xff]
  %v3723 = vadd.f32 %v3722, %v3637
  %v3724 = vxor.u32 %v3723, 2147483648
  %v3725 = vmul.f32 %v3724, 1.442695
  %v3726 = vpow.pop %v3725
  %v3727 = vadd.f32 %v3726, 1.0
  %v3728 = vrcp.pop %v3727
  %v3729 = vmul.f32 1.0, %v3728
  %v3730 = vld [vmem:[%s1900] sm:$0xff]
  %v3731 = vadd.f32 %v3730, %v3677
  %v3732 = vxor.u32 %v3731, 2147483648
  %v3733 = vmul.f32 %v3732, 1.442695
  %v3734 = vpow.pop %v3733
  %v3735 = vadd.f32 %v3734, 1.0
  %v3736 = vrcp.pop %v3735
  %v3737 = vmul.f32 1.0, %v3736
  %v3738 = vld [vmem:[%s1909] sm:$0xff]
  %v3739 = vmul.f32 %v3729, %v3717
  %v3740 = vadd.f32 %v3738, %v3739
  %v3741 = vtanh.pop %v3740
  %v3742 = vsub.f32 1.0, %v3737
  %v3743 = vmul.f32 %v3742, %v3741
  %v3744 = vmul.f32 %v3737, %v3600
  %v3745 = vadd.f32 %v3743, %v3744
  %3746 = vst [vmem:[#allocation6] sm:$0xff] %v3745
  %v3747 = vld [vmem:[#allocation6] sm:$0xff]
  %v3748 = vpack.c.bf16 %v3747, %v3747
  %v3749 = vld [vmem:[%s9] sm:$0xf]
  %v3750 = vld [vmem:[%s9 + $0x4] sm:$0xf]
  %v3751 = vld [vmem:[%s9 + $0x8] sm:$0xf]
  %v3752 = vld [vmem:[%s9 + $0xc] sm:$0xf]
  %v3753 = vld [vmem:[%s9 + $0x10] sm:$0xf]
  %v3754 = vld [vmem:[%s9 + $0x14] sm:$0xf]
  %v3755 = vld [vmem:[%s9 + $0x18] sm:$0xf]
  %v3756 = vld [vmem:[%s9 + $0x1c] sm:$0xf]
  %v3757 = vld [vmem:[%s9 + $0x20] sm:$0xf]
  %v3758 = vld [vmem:[%s9 + $0x24] sm:$0xf]
  %v3759 = vld [vmem:[%s9 + $0x28] sm:$0xf]
  %v3760 = vld [vmem:[%s9 + $0x2c] sm:$0xf]
  %v3761 = vld [vmem:[%s9 + $0x30] sm:$0xf]
  %v3762 = vld [vmem:[%s9 + $0x34] sm:$0xf]
  %v3763 = vld [vmem:[%s9 + $0x38] sm:$0xf]
  %v3764 = vld [vmem:[%s9 + $0x3c] sm:$0xf]
  %v3765 = vld [vmem:[%s10] sm:$0x1]
  %v3767 = vlaneseq
  %v3768 = vshrl.u32 %v3767, 7
  %v3769 = vsub.s32 0, %v3768
  %v3770 = vrot.slane %v3765, %v3769
  %v3788 = vunpack.c.l.b16 %v3749
  %v3789 = vunpack.c.l.b16 %v3750
  %v3790 = vunpack.c.l.b16 %v3751
  %v3791 = vunpack.c.l.b16 %v3752
  %v3792 = vunpack.c.l.b16 %v3753
  %v3793 = vunpack.c.l.b16 %v3754
  %v3794 = vunpack.c.l.b16 %v3755
  %v3795 = vunpack.c.l.b16 %v3756
  %v3796 = vunpack.c.l.b16 %v3757
  %v3797 = vunpack.c.l.b16 %v3758
  %v3798 = vunpack.c.l.b16 %v3759
  %v3799 = vunpack.c.l.b16 %v3760
  %v3800 = vunpack.c.l.b16 %v3761
  %v3801 = vunpack.c.l.b16 %v3762
  %v3802 = vunpack.c.l.b16 %v3763
  %v3803 = vunpack.c.l.b16 %v3764
  %v3804 = vpack.c.b16 %v3789, %v3788
  %v3805 = vpack.c.b16 %v3791, %v3790
  %v3806 = vpack.c.b16 %v3793, %v3792
  %v3807 = vpack.c.b16 %v3795, %v3794
  %v3808 = vpack.c.b16 %v3797, %v3796
  %v3809 = vpack.c.b16 %v3799, %v3798
  %v3810 = vpack.c.b16 %v3801, %v3800
  %v3811 = vpack.c.b16 %v3803, %v3802
  %3820 = vmatprep.subr.bf16.mxu0 0
  %3821 = vmatpush1.bf16.msra.mxu0 %v3804
  %3822 = vmatprep.subr.bf16.mxu0 0
  %3823 = vmatpush1.bf16.msra.mxu0 %v3805
  %3824 = vmatprep.subr.bf16.mxu0 0
  %3825 = vmatpush1.bf16.msra.mxu0 %v3806
  %3826 = vmatprep.subr.bf16.mxu0 0
  %3827 = vmatpush1.bf16.msra.mxu0 %v3807
  %3828 = vmatprep.subr.bf16.mxu0 0
  %3829 = vmatpush1.bf16.msra.mxu0 %v3808
  %3830 = vmatprep.subr.bf16.mxu0 0
  %3831 = vmatpush1.bf16.msra.mxu0 %v3809
  %3832 = vmatprep.subr.bf16.mxu0 0
  %3833 = vmatpush1.bf16.msra.mxu0 %v3810
  %3834 = vmatprep.subr.bf16.mxu0 0
  %3835 = vmatpush1.bf16.msra.mxu0 %v3811
  %3836 = vmatprep.subr.bf16.mxu0 0
  %3837 = vmatpush1.bf16.msra.mxu0 0
  %3838 = vmatprep.subr.bf16.mxu0 0
  %3839 = vmatpush1.bf16.msra.mxu0 0
  %3840 = vmatprep.subr.bf16.mxu0 0
  %3841 = vmatpush1.bf16.msra.mxu0 0
  %3842 = vmatprep.subr.bf16.mxu0 0
  %3843 = vmatpush1.bf16.msra.mxu0 0
  %3844 = vmatprep.subr.bf16.mxu0 0
  %3845 = vmatpush1.bf16.msra.mxu0 0
  %3846 = vmatprep.subr.bf16.mxu0 0
  %3847 = vmatpush1.bf16.msra.mxu0 0
  %3848 = vmatprep.subr.bf16.mxu0 0
  %3849 = vmatpush1.bf16.msra.mxu0 0
  %3850 = vmatprep.subr.bf16.mxu0 0
  %3851 = vmatpush1.bf16.msra.mxu0 0
  %3852 = vmatprep.mubr.bf16.mxu0 0
  %3853 = vmatmul.mubr.bf16.gmra.mrb[0].mxu0 %v3748
  %v3854 = vpop.f32.mrb[0].mxu0
  %v3855 = vadd.f32 %v3770, %v3854
  %v3856 = vpop.f32.mrb[0].mxu0
  %v3857 = vpop.f32.mrb[0].mxu0
  %v3858 = vpop.f32.mrb[0].mxu0
  %3859 = vdwg.mxu0
  %3860 = vmax.xlane.f32.xlu0 %v3855
  %v3861 = vpop.xlane.xlu0 %3860
  %v3862 = vsub.f32 %v3855, %v3861
  %v3863 = vmul.f32 %v3862, 1.442695
  %v3864 = vpow.pop %v3863
  %3865 = vadd.xlane.f32.xlu0 %v3864
  %v3866 = vpop.xlane.xlu0 %3865
  %v3867 = vrcp.pop %v3866
  %v3868 = vmul.f32 %v3864, %v3867
  %3869 = vst [vmem:[%s11] sm:$0xff] %v3868
  // Predicated region
  $region46: #{gru_net_forward.1} parent=0 // pred_check
    _
  $region47: #{gru_net_forward.1} parent=0 // pred_check_branch
    %3871 = sbr.rel (0) target = $region49
  $region48: #{gru_net_forward.1} parent=0 // pred_region
    _
  $region49: #{gru_net_forward.1} parent=0 // pred_fallthru
    _
  // Predicated region
  $region50: #{gru_net_forward.1} parent=0 // pred_check
    _
  $region51: #{gru_net_forward.1} parent=0 // pred_check_branch
    %3873 = sbr.rel (0) target = $region53
  $region52: #{gru_net_forward.1} parent=0 // pred_region
    _
  $region53: #{gru_net_forward.1} parent=0 // pred_fallthru
    _

</llo_original>
